<compile_context>
chip_gen: v5e
topology: v5e:2x2
jax: 0.10.0
libtpu: 0.0.40
codegen_flags: <defaults>
</compile_context>

<pallas_src>
import functools

import jax
import jax.numpy as jnp
from jax.experimental import pallas as pl
from jax.experimental.pallas import tpu as pltpu

KH = KW = 7
PAD = 3
NTAPS = KH * KW


def _conv_fused_kernel(x_ref, w_ref, b_ref, o_ref, p_ref, *, C, Wp, Q, NB):
    """NB batch elements, channels-first, spatial flattened on the lane axis.

    x_ref : (NB, C, L)   zero-padded f32 input, flattened at row pitch Wp
                         (L >= (H + 2*PAD)*Wp + 2*PAD)
    w_ref : (2C, 49C)    fused [conv1; conv2] bf16 weight, cols = (kh, kw, ci)
    b_ref : (2C, 1)      fused f32 bias
    o_ref : (NB, C, Q)   Q = H*Wp (multiple of 128); cols with (q%Wp) >= W are junk
    p_ref : VMEM scratch (49C, NB*Q) bf16 im2col patch matrix
    """
    # ---- im2col into bf16 scratch (pitch-preserving contiguous lane windows) ----
    for b in range(NB):
        xt = x_ref[b].astype(jnp.bfloat16)            # one cast per image
        col0 = b * Q
        # Write taps two at a time: 16 bf16 rows = one packed sublane tile,
        # so every store is full / unmasked.
        for pair in range(NTAPS // 2):
            t0 = 2 * pair
            o0 = (t0 // KW) * Wp + (t0 % KW)
            o1 = ((t0 + 1) // KW) * Wp + ((t0 + 1) % KW)
            blk = jnp.concatenate([xt[:, o0:o0 + Q], xt[:, o1:o1 + Q]], axis=0)
            p_ref[t0 * C:(t0 + 2) * C, col0:col0 + Q] = blk
        tl = NTAPS - 1                                # tail tap (49 is odd)
        ol = (tl // KW) * Wp + (tl % KW)
        p_ref[tl * C:(tl + 1) * C, col0:col0 + Q] = xt[:, ol:ol + Q]

    # ---- both convolutions as ONE MXU matmul, f32 accumulation ----
    acc = jnp.dot(w_ref[...], p_ref[...],
                  preferred_element_type=jnp.float32) + b_ref[...]

    # ---- residual / ReLU epilogue in f32 (residual read exactly from f32 input) ----
    center = PAD * Wp + PAD
    for b in range(NB):
        x_c = x_ref[b][:, center:center + Q]          # x1 at pitch Wp (f32, exact)
        v1 = acc[:C, b * Q:(b + 1) * Q]               # conv1(x1)
        v2 = acc[C:, b * Q:(b + 1) * Q]               # conv2(x1)
        v4 = jnp.maximum(v1 + x_c, 0.0)               # relu(v1 + x1)
        v6 = jnp.maximum(v2 + v4, 0.0)                # relu(v2 + v4)
        o_ref[b] = jnp.maximum(v6 + x_c, 0.0)         # relu(v6 + x1)


def fuse_conv_params(w1, b1, w2, b2):
    """Hoisted out of the per-call path: fuse conv1/conv2 into one bf16 matmul weight.

    w1, w2 are OIHW (Cout, Cin, KH, KW), as torch.nn.Conv2d stores them.
    Columns are ordered (kh, kw, cin) to match the im2col row order.
    """
    C = w1.shape[0]
    w1m = jnp.transpose(w1, (0, 2, 3, 1)).reshape(C, KH * KW * C)
    w2m = jnp.transpose(w2, (0, 2, 3, 1)).reshape(C, KH * KW * C)
    wf = jnp.concatenate([w1m, w2m], axis=0).astype(jnp.bfloat16)   # (2C, 49C)
    bf = jnp.concatenate([b1, b2]).reshape(2 * C, 1).astype(jnp.float32)
    return wf, bf


def _batch_fold(n):
    """Fold the whole batch into one grid step on single-TC chips; keep a
    grid over the batch on v7x (2 TensorCores per chip)."""
    try:
        kind = jax.devices()[0].device_kind.lower()
    except Exception:
        kind = ""
    return 1 if "v7" in kind else n


@jax.jit
def model_forward(x1, x2, x3, x4, wf, bf):
    """x1: (N, C, H, W) float32 (NCHW like torch).  x2..x4 unused (as in module).

    wf/bf are the pre-fused conv parameters from fuse_conv_params()."""
    del x2, x3, x4  # unused by the reference forward pass
    N, C, H, W = x1.shape

    # Row pitch Wp >= W + 2*PAD, rounded up so Q = H*Wp is a multiple of 128
    # (lane-dense, unmasked stores, clean MXU column passes).
    Wp = W + 2 * PAD
    while (H * Wp) % 128 != 0:
        Wp += 1
    Q = H * Wp
    L = (H + 2 * PAD + 1) * Wp  # one extra zero row supplies >= 2*PAD trailing zeros

    # Single pad + single (free) reshape: channels-first end to end.
    xflat = jnp.pad(
        x1, ((0, 0), (0, 0), (PAD, PAD + 1), (PAD, Wp - W - PAD))
    ).reshape(N, C, L)

    NB = _batch_fold(N)          # images per grid step (trace-time constant)
    kernel = functools.partial(_conv_fused_kernel, C=C, Wp=Wp, Q=Q, NB=NB)

    out_flat = pl.pallas_call(
        kernel,
        out_shape=jax.ShapeDtypeStruct((N, C, Q), jnp.float32),
        grid=(N // NB,),
        in_specs=[
            pl.BlockSpec((NB, C, L), lambda g: (g, 0, 0)),
            pl.BlockSpec((2 * C, KH * KW * C), lambda g: (0, 0)),
            pl.BlockSpec((2 * C, 1), lambda g: (0, 0)),
        ],
        out_specs=pl.BlockSpec((NB, C, Q), lambda g: (g, 0, 0)),
        scratch_shapes=[pltpu.VMEM((KH * KW * C, NB * Q), jnp.bfloat16)],
        compiler_params=pltpu.CompilerParams(
            dimension_semantics=("parallel",)),
    )(xflat, wf, bf)

    # Drop the (Wp - W) pitch-padding columns and restore (N, C, H, W).
    return out_flat.reshape(N, C, H, Wp)[:, :, :, :W]


def _reference(x, w1, b1, w2, b2):
    """Plain-JAX reference (lax conv, NCHW/OIHW, full precision) for checking."""
    dn = ("NCHW", "OIHW", "NCHW")
    hp = jax.lax.Precision.HIGHEST
    c1 = jax.lax.conv_general_dilated(x, w1, (1, 1), "SAME",
                                      dimension_numbers=dn, precision=hp)
    c2 = jax.lax.conv_general_dilated(x, w2, (1, 1), "SAME",
                                      dimension_numbers=dn, precision=hp)
    c1 = c1 + b1[None, :, None, None]
    c2 = c2 + b2[None, :, None, None]
    v4 = jnp.maximum(c1 + x, 0.0)
    v6 = jnp.maximum(c2 + v4, 0.0)
    return jnp.maximum(v6 + x, 0.0)


if __name__ == "__main__":
    # Small shapes consistent with the module: batch=2, channels=8, spatial=16.
    N, C, H, W = 2, 8, 16, 16

    key = jax.random.PRNGKey(0)
    k_x, k_w1, k_b1, k_w2, k_b2 = jax.random.split(key, 5)

    x1 = jax.random.normal(k_x, (N, C, H, W), dtype=jnp.float32)
    x2 = jnp.zeros_like(x1)  # unused by forward
    x3 = jnp.zeros_like(x1)  # unused by forward
    x4 = jnp.zeros_like(x1)  # unused by forward

    # Deterministic conv params, PyTorch layout (OIHW) and PyTorch-style
    # uniform(-k, k), k = 1/sqrt(fan_in).
    fan_in = C * KH * KW
    bound = 1.0 / (fan_in ** 0.5)
    w1 = jax.random.uniform(k_w1, (C, C, KH, KW), jnp.float32, -bound, bound)
    b1 = jax.random.uniform(k_b1, (C,), jnp.float32, -bound, bound)
    w2 = jax.random.uniform(k_w2, (C, C, KH, KW), jnp.float32, -bound, bound)
    b2 = jax.random.uniform(k_b2, (C,), jnp.float32, -bound, bound)

    # Weight fusion is done ONCE here (hoisted out of the per-call path).
    wf, bf = fuse_conv_params(w1, b1, w2, b2)

    out = jax.block_until_ready(model_forward(x1, x2, x3, x4, wf, bf))
    ref = jax.block_until_ready(_reference(x1, w1, b1, w2, b2))

    assert out.shape == (N, C, H, W)
    # Tolerance reflects bf16 MXU operands with f32 accumulation over K = 49*C
    # (residual path is exact f32); observed error is ~1e-2 worst case.
    err = float(jnp.max(jnp.abs(out - ref)))
    assert err < 3e-2, f"mismatch vs reference: max abs err {err}"

    print("KERNEL_OK")
</pallas_src>

<mosaic_0001>
module attributes {stable_mosaic.version = 11 : i64} {
  func.func @_conv_fused_kernel(%arg0: i32, %arg1: memref<2x8x552xf32, #tpu.memory_space<vmem>>, %arg2: memref<16x392xbf16, #tpu.memory_space<vmem>>, %arg3: memref<16x1xf32, #tpu.memory_space<vmem>>, %arg4: memref<2x8x384xf32, #tpu.memory_space<vmem>>, %arg5: memref<392x768xbf16, #tpu.memory_space<vmem>>) attributes {dimension_semantics = [#tpu.dimension_semantics<parallel>], iteration_bounds = array<i64: 1>, scalar_prefetch = 0 : i64, scratch_operands = 1 : i64, tpu.core_type = #tpu.core_type<tc>, window_params = [{transform_indices = @transform_0, window_bounds = array<i64: 2, 8, 552>}, {pipeline_mode = #tpu.pipeline_mode<synchronous>, transform_indices = @transform_1, window_bounds = array<i64: 16, 392>}, {pipeline_mode = #tpu.pipeline_mode<synchronous>, transform_indices = @transform_2, window_bounds = array<i64: 16, 1>}, {transform_indices = @transform_3, window_bounds = array<i64: 2, 8, 384>}]} {
    %c0 = arith.constant 0 : index
    %c0_0 = arith.constant 0 : index
    %c0_1 = arith.constant 0 : index
    %0 = vector.load %arg1[%c0, %c0_0, %c0_1] : memref<2x8x552xf32, #tpu.memory_space<vmem>>, vector<1x8x552xf32>
    %1 = vector.shape_cast %0 : vector<1x8x552xf32> to vector<8x552xf32>
    %2 = arith.truncf %1 : vector<8x552xf32> to vector<8x552xbf16>
    %3 = vector.extract_strided_slice %2 {offsets = [0, 0], sizes = [8, 384], strides = [1, 1]} : vector<8x552xbf16> to vector<8x384xbf16>
    %4 = vector.extract_strided_slice %2 {offsets = [0, 1], sizes = [8, 384], strides = [1, 1]} : vector<8x552xbf16> to vector<8x384xbf16>
    %5 = tpu.concatenate %3, %4 in 0 : vector<8x384xbf16>, vector<8x384xbf16> -> vector<16x384xbf16>
    %c0_2 = arith.constant 0 : index
    %c0_3 = arith.constant 0 : index
    %6 = vector.load %arg5[%c0_2, %c0_3] : memref<392x768xbf16, #tpu.memory_space<vmem>>, vector<16x384xbf16>
    tpu.vector_store %arg5[%c0_2, %c0_3], %5 {strides = array<i32>} : memref<392x768xbf16, #tpu.memory_space<vmem>>, vector<16x384xbf16>,
    %7 = vector.extract_strided_slice %2 {offsets = [0, 2], sizes = [8, 384], strides = [1, 1]} : vector<8x552xbf16> to vector<8x384xbf16>
    %8 = vector.extract_strided_slice %2 {offsets = [0, 3], sizes = [8, 384], strides = [1, 1]} : vector<8x552xbf16> to vector<8x384xbf16>
    %9 = tpu.concatenate %7, %8 in 0 : vector<8x384xbf16>, vector<8x384xbf16> -> vector<16x384xbf16>
    %c16 = arith.constant 16 : index
    %c0_4 = arith.constant 0 : index
    %10 = vector.load %arg5[%c16, %c0_4] : memref<392x768xbf16, #tpu.memory_space<vmem>>, vector<16x384xbf16>
    tpu.vector_store %arg5[%c16, %c0_4], %9 {strides = array<i32>} : memref<392x768xbf16, #tpu.memory_space<vmem>>, vector<16x384xbf16>,
    %11 = vector.extract_strided_slice %2 {offsets = [0, 4], sizes = [8, 384], strides = [1, 1]} : vector<8x552xbf16> to vector<8x384xbf16>
    %12 = vector.extract_strided_slice %2 {offsets = [0, 5], sizes = [8, 384], strides = [1, 1]} : vector<8x552xbf16> to vector<8x384xbf16>
    %13 = tpu.concatenate %11, %12 in 0 : vector<8x384xbf16>, vector<8x384xbf16> -> vector<16x384xbf16>
    %c32 = arith.constant 32 : index
    %c0_5 = arith.constant 0 : index
    %14 = vector.load %arg5[%c32, %c0_5] : memref<392x768xbf16, #tpu.memory_space<vmem>>, vector<16x384xbf16>
    tpu.vector_store %arg5[%c32, %c0_5], %13 {strides = array<i32>} : memref<392x768xbf16, #tpu.memory_space<vmem>>, vector<16x384xbf16>,
    %15 = vector.extract_strided_slice %2 {offsets = [0, 6], sizes = [8, 384], strides = [1, 1]} : vector<8x552xbf16> to vector<8x384xbf16>
    %16 = vector.extract_strided_slice %2 {offsets = [0, 24], sizes = [8, 384], strides = [1, 1]} : vector<8x552xbf16> to vector<8x384xbf16>
    %17 = tpu.concatenate %15, %16 in 0 : vector<8x384xbf16>, vector<8x384xbf16> -> vector<16x384xbf16>
    %c48 = arith.constant 48 : index
    %c0_6 = arith.constant 0 : index
    %18 = vector.load %arg5[%c48, %c0_6] : memref<392x768xbf16, #tpu.memory_space<vmem>>, vector<16x384xbf16>
    tpu.vector_store %arg5[%c48, %c0_6], %17 {strides = array<i32>} : memref<392x768xbf16, #tpu.memory_space<vmem>>, vector<16x384xbf16>,
    %19 = vector.extract_strided_slice %2 {offsets = [0, 25], sizes = [8, 384], strides = [1, 1]} : vector<8x552xbf16> to vector<8x384xbf16>
    %20 = vector.extract_strided_slice %2 {offsets = [0, 26], sizes = [8, 384], strides = [1, 1]} : vector<8x552xbf16> to vector<8x384xbf16>
    %21 = tpu.concatenate %19, %20 in 0 : vector<8x384xbf16>, vector<8x384xbf16> -> vector<16x384xbf16>
    %c64 = arith.constant 64 : index
    %c0_7 = arith.constant 0 : index
    %22 = vector.load %arg5[%c64, %c0_7] : memref<392x768xbf16, #tpu.memory_space<vmem>>, vector<16x384xbf16>
    tpu.vector_store %arg5[%c64, %c0_7], %21 {strides = array<i32>} : memref<392x768xbf16, #tpu.memory_space<vmem>>, vector<16x384xbf16>,
    %23 = vector.extract_strided_slice %2 {offsets = [0, 27], sizes = [8, 384], strides = [1, 1]} : vector<8x552xbf16> to vector<8x384xbf16>
    %24 = vector.extract_strided_slice %2 {offsets = [0, 28], sizes = [8, 384], strides = [1, 1]} : vector<8x552xbf16> to vector<8x384xbf16>
    %25 = tpu.concatenate %23, %24 in 0 : vector<8x384xbf16>, vector<8x384xbf16> -> vector<16x384xbf16>
    %c80 = arith.constant 80 : index
    %c0_8 = arith.constant 0 : index
    %26 = vector.load %arg5[%c80, %c0_8] : memref<392x768xbf16, #tpu.memory_space<vmem>>, vector<16x384xbf16>
    tpu.vector_store %arg5[%c80, %c0_8], %25 {strides = array<i32>} : memref<392x768xbf16, #tpu.memory_space<vmem>>, vector<16x384xbf16>,
    %27 = vector.extract_strided_slice %2 {offsets = [0, 29], sizes = [8, 384], strides = [1, 1]} : vector<8x552xbf16> to vector<8x384xbf16>
    %28 = vector.extract_strided_slice %2 {offsets = [0, 30], sizes = [8, 384], strides = [1, 1]} : vector<8x552xbf16> to vector<8x384xbf16>
    %29 = tpu.concatenate %27, %28 in 0 : vector<8x384xbf16>, vector<8x384xbf16> -> vector<16x384xbf16>
    %c96 = arith.constant 96 : index
    %c0_9 = arith.constant 0 : index
    %30 = vector.load %arg5[%c96, %c0_9] : memref<392x768xbf16, #tpu.memory_space<vmem>>, vector<16x384xbf16>
    tpu.vector_store %arg5[%c96, %c0_9], %29 {strides = array<i32>} : memref<392x768xbf16, #tpu.memory_space<vmem>>, vector<16x384xbf16>,
    %31 = vector.extract_strided_slice %2 {offsets = [0, 48], sizes = [8, 384], strides = [1, 1]} : vector<8x552xbf16> to vector<8x384xbf16>
    %32 = vector.extract_strided_slice %2 {offsets = [0, 49], sizes = [8, 384], strides = [1, 1]} : vector<8x552xbf16> to vector<8x384xbf16>
    %33 = tpu.concatenate %31, %32 in 0 : vector<8x384xbf16>, vector<8x384xbf16> -> vector<16x384xbf16>
    %c112 = arith.constant 112 : index
    %c0_10 = arith.constant 0 : index
    %34 = vector.load %arg5[%c112, %c0_10] : memref<392x768xbf16, #tpu.memory_space<vmem>>, vector<16x384xbf16>
    tpu.vector_store %arg5[%c112, %c0_10], %33 {strides = array<i32>} : memref<392x768xbf16, #tpu.memory_space<vmem>>, vector<16x384xbf16>,
    %35 = vector.extract_strided_slice %2 {offsets = [0, 50], sizes = [8, 384], strides = [1, 1]} : vector<8x552xbf16> to vector<8x384xbf16>
    %36 = vector.extract_strided_slice %2 {offsets = [0, 51], sizes = [8, 384], strides = [1, 1]} : vector<8x552xbf16> to vector<8x384xbf16>
    %37 = tpu.concatenate %35, %36 in 0 : vector<8x384xbf16>, vector<8x384xbf16> -> vector<16x384xbf16>
    %c128 = arith.constant 128 : index
    %c0_11 = arith.constant 0 : index
    %38 = vector.load %arg5[%c128, %c0_11] : memref<392x768xbf16, #tpu.memory_space<vmem>>, vector<16x384xbf16>
    tpu.vector_store %arg5[%c128, %c0_11], %37 {strides = array<i32>} : memref<392x768xbf16, #tpu.memory_space<vmem>>, vector<16x384xbf16>,
    %39 = vector.extract_strided_slice %2 {offsets = [0, 52], sizes = [8, 384], strides = [1, 1]} : vector<8x552xbf16> to vector<8x384xbf16>
    %40 = vector.extract_strided_slice %2 {offsets = [0, 53], sizes = [8, 384], strides = [1, 1]} : vector<8x552xbf16> to vector<8x384xbf16>
    %41 = tpu.concatenate %39, %40 in 0 : vector<8x384xbf16>, vector<8x384xbf16> -> vector<16x384xbf16>
    %c144 = arith.constant 144 : index
    %c0_12 = arith.constant 0 : index
    %42 = vector.load %arg5[%c144, %c0_12] : memref<392x768xbf16, #tpu.memory_space<vmem>>, vector<16x384xbf16>
    tpu.vector_store %arg5[%c144, %c0_12], %41 {strides = array<i32>} : memref<392x768xbf16, #tpu.memory_space<vmem>>, vector<16x384xbf16>,
    %43 = vector.extract_strided_slice %2 {offsets = [0, 54], sizes = [8, 384], strides = [1, 1]} : vector<8x552xbf16> to vector<8x384xbf16>
    %44 = vector.extract_strided_slice %2 {offsets = [0, 72], sizes = [8, 384], strides = [1, 1]} : vector<8x552xbf16> to vector<8x384xbf16>
    %45 = tpu.concatenate %43, %44 in 0 : vector<8x384xbf16>, vector<8x384xbf16> -> vector<16x384xbf16>
    %c160 = arith.constant 160 : index
    %c0_13 = arith.constant 0 : index
    %46 = vector.load %arg5[%c160, %c0_13] : memref<392x768xbf16, #tpu.memory_space<vmem>>, vector<16x384xbf16>
    tpu.vector_store %arg5[%c160, %c0_13], %45 {strides = array<i32>} : memref<392x768xbf16, #tpu.memory_space<vmem>>, vector<16x384xbf16>,
    %47 = vector.extract_strided_slice %2 {offsets = [0, 73], sizes = [8, 384], strides = [1, 1]} : vector<8x552xbf16> to vector<8x384xbf16>
    %48 = vector.extract_strided_slice %2 {offsets = [0, 74], sizes = [8, 384], strides = [1, 1]} : vector<8x552xbf16> to vector<8x384xbf16>
    %49 = tpu.concatenate %47, %48 in 0 : vector<8x384xbf16>, vector<8x384xbf16> -> vector<16x384xbf16>
    %c176 = arith.constant 176 : index
    %c0_14 = arith.constant 0 : index
    %50 = vector.load %arg5[%c176, %c0_14] : memref<392x768xbf16, #tpu.memory_space<vmem>>, vector<16x384xbf16>
    tpu.vector_store %arg5[%c176, %c0_14], %49 {strides = array<i32>} : memref<392x768xbf16, #tpu.memory_space<vmem>>, vector<16x384xbf16>,
    %51 = vector.extract_strided_slice %2 {offsets = [0, 75], sizes = [8, 384], strides = [1, 1]} : vector<8x552xbf16> to vector<8x384xbf16>
    %52 = vector.extract_strided_slice %2 {offsets = [0, 76], sizes = [8, 384], strides = [1, 1]} : vector<8x552xbf16> to vector<8x384xbf16>
    %53 = tpu.concatenate %51, %52 in 0 : vector<8x384xbf16>, vector<8x384xbf16> -> vector<16x384xbf16>
    %c192 = arith.constant 192 : index
    %c0_15 = arith.constant 0 : index
    %54 = vector.load %arg5[%c192, %c0_15] : memref<392x768xbf16, #tpu.memory_space<vmem>>, vector<16x384xbf16>
    tpu.vector_store %arg5[%c192, %c0_15], %53 {strides = array<i32>} : memref<392x768xbf16, #tpu.memory_space<vmem>>, vector<16x384xbf16>,
    %55 = vector.extract_strided_slice %2 {offsets = [0, 77], sizes = [8, 384], strides = [1, 1]} : vector<8x552xbf16> to vector<8x384xbf16>
    %56 = vector.extract_strided_slice %2 {offsets = [0, 78], sizes = [8, 384], strides = [1, 1]} : vector<8x552xbf16> to vector<8x384xbf16>
    %57 = tpu.concatenate %55, %56 in 0 : vector<8x384xbf16>, vector<8x384xbf16> -> vector<16x384xbf16>
    %c208 = arith.constant 208 : index
    %c0_16 = arith.constant 0 : index
    %58 = vector.load %arg5[%c208, %c0_16] : memref<392x768xbf16, #tpu.memory_space<vmem>>, vector<16x384xbf16>
    tpu.vector_store %arg5[%c208, %c0_16], %57 {strides = array<i32>} : memref<392x768xbf16, #tpu.memory_space<vmem>>, vector<16x384xbf16>,
    %59 = vector.extract_strided_slice %2 {offsets = [0, 96], sizes = [8, 384], strides = [1, 1]} : vector<8x552xbf16> to vector<8x384xbf16>
    %60 = vector.extract_strided_slice %2 {offsets = [0, 97], sizes = [8, 384], strides = [1, 1]} : vector<8x552xbf16> to vector<8x384xbf16>
    %61 = tpu.concatenate %59, %60 in 0 : vector<8x384xbf16>, vector<8x384xbf16> -> vector<16x384xbf16>
    %c224 = arith.constant 224 : index
    %c0_17 = arith.constant 0 : index
    %62 = vector.load %arg5[%c224, %c0_17] : memref<392x768xbf16, #tpu.memory_space<vmem>>, vector<16x384xbf16>
    tpu.vector_store %arg5[%c224, %c0_17], %61 {strides = array<i32>} : memref<392x768xbf16, #tpu.memory_space<vmem>>, vector<16x384xbf16>,
    %63 = vector.extract_strided_slice %2 {offsets = [0, 98], sizes = [8, 384], strides = [1, 1]} : vector<8x552xbf16> to vector<8x384xbf16>
    %64 = vector.extract_strided_slice %2 {offsets = [0, 99], sizes = [8, 384], strides = [1, 1]} : vector<8x552xbf16> to vector<8x384xbf16>
    %65 = tpu.concatenate %63, %64 in 0 : vector<8x384xbf16>, vector<8x384xbf16> -> vector<16x384xbf16>
    %c240 = arith.constant 240 : index
    %c0_18 = arith.constant 0 : index
    %66 = vector.load %arg5[%c240, %c0_18] : memref<392x768xbf16, #tpu.memory_space<vmem>>, vector<16x384xbf16>
    tpu.vector_store %arg5[%c240, %c0_18], %65 {strides = array<i32>} : memref<392x768xbf16, #tpu.memory_space<vmem>>, vector<16x384xbf16>,
    %67 = vector.extract_strided_slice %2 {offsets = [0, 100], sizes = [8, 384], strides = [1, 1]} : vector<8x552xbf16> to vector<8x384xbf16>
    %68 = vector.extract_strided_slice %2 {offsets = [0, 101], sizes = [8, 384], strides = [1, 1]} : vector<8x552xbf16> to vector<8x384xbf16>
    %69 = tpu.concatenate %67, %68 in 0 : vector<8x384xbf16>, vector<8x384xbf16> -> vector<16x384xbf16>
    %c256 = arith.constant 256 : index
    %c0_19 = arith.constant 0 : index
    %70 = vector.load %arg5[%c256, %c0_19] : memref<392x768xbf16, #tpu.memory_space<vmem>>, vector<16x384xbf16>
    tpu.vector_store %arg5[%c256, %c0_19], %69 {strides = array<i32>} : memref<392x768xbf16, #tpu.memory_space<vmem>>, vector<16x384xbf16>,
    %71 = vector.extract_strided_slice %2 {offsets = [0, 102], sizes = [8, 384], strides = [1, 1]} : vector<8x552xbf16> to vector<8x384xbf16>
    %72 = vector.extract_strided_slice %2 {offsets = [0, 120], sizes = [8, 384], strides = [1, 1]} : vector<8x552xbf16> to vector<8x384xbf16>
    %73 = tpu.concatenate %71, %72 in 0 : vector<8x384xbf16>, vector<8x384xbf16> -> vector<16x384xbf16>
    %c272 = arith.constant 272 : index
    %c0_20 = arith.constant 0 : index
    %74 = vector.load %arg5[%c272, %c0_20] : memref<392x768xbf16, #tpu.memory_space<vmem>>, vector<16x384xbf16>
    tpu.vector_store %arg5[%c272, %c0_20], %73 {strides = array<i32>} : memref<392x768xbf16, #tpu.memory_space<vmem>>, vector<16x384xbf16>,
    %75 = vector.extract_strided_slice %2 {offsets = [0, 121], sizes = [8, 384], strides = [1, 1]} : vector<8x552xbf16> to vector<8x384xbf16>
    %76 = vector.extract_strided_slice %2 {offsets = [0, 122], sizes = [8, 384], strides = [1, 1]} : vector<8x552xbf16> to vector<8x384xbf16>
    %77 = tpu.concatenate %75, %76 in 0 : vector<8x384xbf16>, vector<8x384xbf16> -> vector<16x384xbf16>
    %c288 = arith.constant 288 : index
    %c0_21 = arith.constant 0 : index
    %78 = vector.load %arg5[%c288, %c0_21] : memref<392x768xbf16, #tpu.memory_space<vmem>>, vector<16x384xbf16>
    tpu.vector_store %arg5[%c288, %c0_21], %77 {strides = array<i32>} : memref<392x768xbf16, #tpu.memory_space<vmem>>, vector<16x384xbf16>,
    %79 = vector.extract_strided_slice %2 {offsets = [0, 123], sizes = [8, 384], strides = [1, 1]} : vector<8x552xbf16> to vector<8x384xbf16>
    %80 = vector.extract_strided_slice %2 {offsets = [0, 124], sizes = [8, 384], strides = [1, 1]} : vector<8x552xbf16> to vector<8x384xbf16>
    %81 = tpu.concatenate %79, %80 in 0 : vector<8x384xbf16>, vector<8x384xbf16> -> vector<16x384xbf16>
    %c304 = arith.constant 304 : index
    %c0_22 = arith.constant 0 : index
    %82 = vector.load %arg5[%c304, %c0_22] : memref<392x768xbf16, #tpu.memory_space<vmem>>, vector<16x384xbf16>
    tpu.vector_store %arg5[%c304, %c0_22], %81 {strides = array<i32>} : memref<392x768xbf16, #tpu.memory_space<vmem>>, vector<16x384xbf16>,
    %83 = vector.extract_strided_slice %2 {offsets = [0, 125], sizes = [8, 384], strides = [1, 1]} : vector<8x552xbf16> to vector<8x384xbf16>
    %84 = vector.extract_strided_slice %2 {offsets = [0, 126], sizes = [8, 384], strides = [1, 1]} : vector<8x552xbf16> to vector<8x384xbf16>
    %85 = tpu.concatenate %83, %84 in 0 : vector<8x384xbf16>, vector<8x384xbf16> -> vector<16x384xbf16>
    %c320 = arith.constant 320 : index
    %c0_23 = arith.constant 0 : index
    %86 = vector.load %arg5[%c320, %c0_23] : memref<392x768xbf16, #tpu.memory_space<vmem>>, vector<16x384xbf16>
    tpu.vector_store %arg5[%c320, %c0_23], %85 {strides = array<i32>} : memref<392x768xbf16, #tpu.memory_space<vmem>>, vector<16x384xbf16>,
    %87 = vector.extract_strided_slice %2 {offsets = [0, 144], sizes = [8, 384], strides = [1, 1]} : vector<8x552xbf16> to vector<8x384xbf16>
    %88 = vector.extract_strided_slice %2 {offsets = [0, 145], sizes = [8, 384], strides = [1, 1]} : vector<8x552xbf16> to vector<8x384xbf16>
    %89 = tpu.concatenate %87, %88 in 0 : vector<8x384xbf16>, vector<8x384xbf16> -> vector<16x384xbf16>
    %c336 = arith.constant 336 : index
    %c0_24 = arith.constant 0 : index
    %90 = vector.load %arg5[%c336, %c0_24] : memref<392x768xbf16, #tpu.memory_space<vmem>>, vector<16x384xbf16>
    tpu.vector_store %arg5[%c336, %c0_24], %89 {strides = array<i32>} : memref<392x768xbf16, #tpu.memory_space<vmem>>, vector<16x384xbf16>,
    %91 = vector.extract_strided_slice %2 {offsets = [0, 146], sizes = [8, 384], strides = [1, 1]} : vector<8x552xbf16> to vector<8x384xbf16>
    %92 = vector.extract_strided_slice %2 {offsets = [0, 147], sizes = [8, 384], strides = [1, 1]} : vector<8x552xbf16> to vector<8x384xbf16>
    %93 = tpu.concatenate %91, %92 in 0 : vector<8x384xbf16>, vector<8x384xbf16> -> vector<16x384xbf16>
    %c352 = arith.constant 352 : index
    %c0_25 = arith.constant 0 : index
    %94 = vector.load %arg5[%c352, %c0_25] : memref<392x768xbf16, #tpu.memory_space<vmem>>, vector<16x384xbf16>
    tpu.vector_store %arg5[%c352, %c0_25], %93 {strides = array<i32>} : memref<392x768xbf16, #tpu.memory_space<vmem>>, vector<16x384xbf16>,
    %95 = vector.extract_strided_slice %2 {offsets = [0, 148], sizes = [8, 384], strides = [1, 1]} : vector<8x552xbf16> to vector<8x384xbf16>
    %96 = vector.extract_strided_slice %2 {offsets = [0, 149], sizes = [8, 384], strides = [1, 1]} : vector<8x552xbf16> to vector<8x384xbf16>
    %97 = tpu.concatenate %95, %96 in 0 : vector<8x384xbf16>, vector<8x384xbf16> -> vector<16x384xbf16>
    %c368 = arith.constant 368 : index
    %c0_26 = arith.constant 0 : index
    %98 = vector.load %arg5[%c368, %c0_26] : memref<392x768xbf16, #tpu.memory_space<vmem>>, vector<16x384xbf16>
    tpu.vector_store %arg5[%c368, %c0_26], %97 {strides = array<i32>} : memref<392x768xbf16, #tpu.memory_space<vmem>>, vector<16x384xbf16>,
    %99 = vector.extract_strided_slice %2 {offsets = [0, 150], sizes = [8, 384], strides = [1, 1]} : vector<8x552xbf16> to vector<8x384xbf16>
    %c384 = arith.constant 384 : index
    %c0_27 = arith.constant 0 : index
    %100 = vector.load %arg5[%c384, %c0_27] : memref<392x768xbf16, #tpu.memory_space<vmem>>, vector<8x384xbf16>
    tpu.vector_store %arg5[%c384, %c0_27], %99 {strides = array<i32>} : memref<392x768xbf16, #tpu.memory_space<vmem>>, vector<8x384xbf16>,
    %c1 = arith.constant 1 : index
    %c0_28 = arith.constant 0 : index
    %c0_29 = arith.constant 0 : index
    %101 = vector.load %arg1[%c1, %c0_28, %c0_29] : memref<2x8x552xf32, #tpu.memory_space<vmem>>, vector<1x8x552xf32>
    %102 = vector.shape_cast %101 : vector<1x8x552xf32> to vector<8x552xf32>
    %103 = arith.truncf %102 : vector<8x552xf32> to vector<8x552xbf16>
    %104 = vector.extract_strided_slice %103 {offsets = [0, 0], sizes = [8, 384], strides = [1, 1]} : vector<8x552xbf16> to vector<8x384xbf16>
    %105 = vector.extract_strided_slice %103 {offsets = [0, 1], sizes = [8, 384], strides = [1, 1]} : vector<8x552xbf16> to vector<8x384xbf16>
    %106 = tpu.concatenate %104, %105 in 0 : vector<8x384xbf16>, vector<8x384xbf16> -> vector<16x384xbf16>
    %c0_30 = arith.constant 0 : index
    %c384_31 = arith.constant 384 : index
    %107 = vector.load %arg5[%c0_30, %c384_31] : memref<392x768xbf16, #tpu.memory_space<vmem>>, vector<16x384xbf16>
    tpu.vector_store %arg5[%c0_30, %c384_31], %106 {strides = array<i32>} : memref<392x768xbf16, #tpu.memory_space<vmem>>, vector<16x384xbf16>,
    %108 = vector.extract_strided_slice %103 {offsets = [0, 2], sizes = [8, 384], strides = [1, 1]} : vector<8x552xbf16> to vector<8x384xbf16>
    %109 = vector.extract_strided_slice %103 {offsets = [0, 3], sizes = [8, 384], strides = [1, 1]} : vector<8x552xbf16> to vector<8x384xbf16>
    %110 = tpu.concatenate %108, %109 in 0 : vector<8x384xbf16>, vector<8x384xbf16> -> vector<16x384xbf16>
    %c16_32 = arith.constant 16 : index
    %c384_33 = arith.constant 384 : index
    %111 = vector.load %arg5[%c16_32, %c384_33] : memref<392x768xbf16, #tpu.memory_space<vmem>>, vector<16x384xbf16>
    tpu.vector_store %arg5[%c16_32, %c384_33], %110 {strides = array<i32>} : memref<392x768xbf16, #tpu.memory_space<vmem>>, vector<16x384xbf16>,
    %112 = vector.extract_strided_slice %103 {offsets = [0, 4], sizes = [8, 384], strides = [1, 1]} : vector<8x552xbf16> to vector<8x384xbf16>
    %113 = vector.extract_strided_slice %103 {offsets = [0, 5], sizes = [8, 384], strides = [1, 1]} : vector<8x552xbf16> to vector<8x384xbf16>
    %114 = tpu.concatenate %112, %113 in 0 : vector<8x384xbf16>, vector<8x384xbf16> -> vector<16x384xbf16>
    %c32_34 = arith.constant 32 : index
    %c384_35 = arith.constant 384 : index
    %115 = vector.load %arg5[%c32_34, %c384_35] : memref<392x768xbf16, #tpu.memory_space<vmem>>, vector<16x384xbf16>
    tpu.vector_store %arg5[%c32_34, %c384_35], %114 {strides = array<i32>} : memref<392x768xbf16, #tpu.memory_space<vmem>>, vector<16x384xbf16>,
    %116 = vector.extract_strided_slice %103 {offsets = [0, 6], sizes = [8, 384], strides = [1, 1]} : vector<8x552xbf16> to vector<8x384xbf16>
    %117 = vector.extract_strided_slice %103 {offsets = [0, 24], sizes = [8, 384], strides = [1, 1]} : vector<8x552xbf16> to vector<8x384xbf16>
    %118 = tpu.concatenate %116, %117 in 0 : vector<8x384xbf16>, vector<8x384xbf16> -> vector<16x384xbf16>
    %c48_36 = arith.constant 48 : index
    %c384_37 = arith.constant 384 : index
    %119 = vector.load %arg5[%c48_36, %c384_37] : memref<392x768xbf16, #tpu.memory_space<vmem>>, vector<16x384xbf16>
    tpu.vector_store %arg5[%c48_36, %c384_37], %118 {strides = array<i32>} : memref<392x768xbf16, #tpu.memory_space<vmem>>, vector<16x384xbf16>,
    %120 = vector.extract_strided_slice %103 {offsets = [0, 25], sizes = [8, 384], strides = [1, 1]} : vector<8x552xbf16> to vector<8x384xbf16>
    %121 = vector.extract_strided_slice %103 {offsets = [0, 26], sizes = [8, 384], strides = [1, 1]} : vector<8x552xbf16> to vector<8x384xbf16>
    %122 = tpu.concatenate %120, %121 in 0 : vector<8x384xbf16>, vector<8x384xbf16> -> vector<16x384xbf16>
    %c64_38 = arith.constant 64 : index
    %c384_39 = arith.constant 384 : index
    %123 = vector.load %arg5[%c64_38, %c384_39] : memref<392x768xbf16, #tpu.memory_space<vmem>>, vector<16x384xbf16>
    tpu.vector_store %arg5[%c64_38, %c384_39], %122 {strides = array<i32>} : memref<392x768xbf16, #tpu.memory_space<vmem>>, vector<16x384xbf16>,
    %124 = vector.extract_strided_slice %103 {offsets = [0, 27], sizes = [8, 384], strides = [1, 1]} : vector<8x552xbf16> to vector<8x384xbf16>
    %125 = vector.extract_strided_slice %103 {offsets = [0, 28], sizes = [8, 384], strides = [1, 1]} : vector<8x552xbf16> to vector<8x384xbf16>
    %126 = tpu.concatenate %124, %125 in 0 : vector<8x384xbf16>, vector<8x384xbf16> -> vector<16x384xbf16>
    %c80_40 = arith.constant 80 : index
    %c384_41 = arith.constant 384 : index
    %127 = vector.load %arg5[%c80_40, %c384_41] : memref<392x768xbf16, #tpu.memory_space<vmem>>, vector<16x384xbf16>
    tpu.vector_store %arg5[%c80_40, %c384_41], %126 {strides = array<i32>} : memref<392x768xbf16, #tpu.memory_space<vmem>>, vector<16x384xbf16>,
    %128 = vector.extract_strided_slice %103 {offsets = [0, 29], sizes = [8, 384], strides = [1, 1]} : vector<8x552xbf16> to vector<8x384xbf16>
    %129 = vector.extract_strided_slice %103 {offsets = [0, 30], sizes = [8, 384], strides = [1, 1]} : vector<8x552xbf16> to vector<8x384xbf16>
    %130 = tpu.concatenate %128, %129 in 0 : vector<8x384xbf16>, vector<8x384xbf16> -> vector<16x384xbf16>
    %c96_42 = arith.constant 96 : index
    %c384_43 = arith.constant 384 : index
    %131 = vector.load %arg5[%c96_42, %c384_43] : memref<392x768xbf16, #tpu.memory_space<vmem>>, vector<16x384xbf16>
    tpu.vector_store %arg5[%c96_42, %c384_43], %130 {strides = array<i32>} : memref<392x768xbf16, #tpu.memory_space<vmem>>, vector<16x384xbf16>,
    %132 = vector.extract_strided_slice %103 {offsets = [0, 48], sizes = [8, 384], strides = [1, 1]} : vector<8x552xbf16> to vector<8x384xbf16>
    %133 = vector.extract_strided_slice %103 {offsets = [0, 49], sizes = [8, 384], strides = [1, 1]} : vector<8x552xbf16> to vector<8x384xbf16>
    %134 = tpu.concatenate %132, %133 in 0 : vector<8x384xbf16>, vector<8x384xbf16> -> vector<16x384xbf16>
    %c112_44 = arith.constant 112 : index
    %c384_45 = arith.constant 384 : index
    %135 = vector.load %arg5[%c112_44, %c384_45] : memref<392x768xbf16, #tpu.memory_space<vmem>>, vector<16x384xbf16>
    tpu.vector_store %arg5[%c112_44, %c384_45], %134 {strides = array<i32>} : memref<392x768xbf16, #tpu.memory_space<vmem>>, vector<16x384xbf16>,
    %136 = vector.extract_strided_slice %103 {offsets = [0, 50], sizes = [8, 384], strides = [1, 1]} : vector<8x552xbf16> to vector<8x384xbf16>
    %137 = vector.extract_strided_slice %103 {offsets = [0, 51], sizes = [8, 384], strides = [1, 1]} : vector<8x552xbf16> to vector<8x384xbf16>
    %138 = tpu.concatenate %136, %137 in 0 : vector<8x384xbf16>, vector<8x384xbf16> -> vector<16x384xbf16>
    %c128_46 = arith.constant 128 : index
    %c384_47 = arith.constant 384 : index
    %139 = vector.load %arg5[%c128_46, %c384_47] : memref<392x768xbf16, #tpu.memory_space<vmem>>, vector<16x384xbf16>
    tpu.vector_store %arg5[%c128_46, %c384_47], %138 {strides = array<i32>} : memref<392x768xbf16, #tpu.memory_space<vmem>>, vector<16x384xbf16>,
    %140 = vector.extract_strided_slice %103 {offsets = [0, 52], sizes = [8, 384], strides = [1, 1]} : vector<8x552xbf16> to vector<8x384xbf16>
    %141 = vector.extract_strided_slice %103 {offsets = [0, 53], sizes = [8, 384], strides = [1, 1]} : vector<8x552xbf16> to vector<8x384xbf16>
    %142 = tpu.concatenate %140, %141 in 0 : vector<8x384xbf16>, vector<8x384xbf16> -> vector<16x384xbf16>
    %c144_48 = arith.constant 144 : index
    %c384_49 = arith.constant 384 : index
    %143 = vector.load %arg5[%c144_48, %c384_49] : memref<392x768xbf16, #tpu.memory_space<vmem>>, vector<16x384xbf16>
    tpu.vector_store %arg5[%c144_48, %c384_49], %142 {strides = array<i32>} : memref<392x768xbf16, #tpu.memory_space<vmem>>, vector<16x384xbf16>,
    %144 = vector.extract_strided_slice %103 {offsets = [0, 54], sizes = [8, 384], strides = [1, 1]} : vector<8x552xbf16> to vector<8x384xbf16>
    %145 = vector.extract_strided_slice %103 {offsets = [0, 72], sizes = [8, 384], strides = [1, 1]} : vector<8x552xbf16> to vector<8x384xbf16>
    %146 = tpu.concatenate %144, %145 in 0 : vector<8x384xbf16>, vector<8x384xbf16> -> vector<16x384xbf16>
    %c160_50 = arith.constant 160 : index
    %c384_51 = arith.constant 384 : index
    %147 = vector.load %arg5[%c160_50, %c384_51] : memref<392x768xbf16, #tpu.memory_space<vmem>>, vector<16x384xbf16>
    tpu.vector_store %arg5[%c160_50, %c384_51], %146 {strides = array<i32>} : memref<392x768xbf16, #tpu.memory_space<vmem>>, vector<16x384xbf16>,
    %148 = vector.extract_strided_slice %103 {offsets = [0, 73], sizes = [8, 384], strides = [1, 1]} : vector<8x552xbf16> to vector<8x384xbf16>
    %149 = vector.extract_strided_slice %103 {offsets = [0, 74], sizes = [8, 384], strides = [1, 1]} : vector<8x552xbf16> to vector<8x384xbf16>
    %150 = tpu.concatenate %148, %149 in 0 : vector<8x384xbf16>, vector<8x384xbf16> -> vector<16x384xbf16>
    %c176_52 = arith.constant 176 : index
    %c384_53 = arith.constant 384 : index
    %151 = vector.load %arg5[%c176_52, %c384_53] : memref<392x768xbf16, #tpu.memory_space<vmem>>, vector<16x384xbf16>
    tpu.vector_store %arg5[%c176_52, %c384_53], %150 {strides = array<i32>} : memref<392x768xbf16, #tpu.memory_space<vmem>>, vector<16x384xbf16>,
    %152 = vector.extract_strided_slice %103 {offsets = [0, 75], sizes = [8, 384], strides = [1, 1]} : vector<8x552xbf16> to vector<8x384xbf16>
    %153 = vector.extract_strided_slice %103 {offsets = [0, 76], sizes = [8, 384], strides = [1, 1]} : vector<8x552xbf16> to vector<8x384xbf16>
    %154 = tpu.concatenate %152, %153 in 0 : vector<8x384xbf16>, vector<8x384xbf16> -> vector<16x384xbf16>
    %c192_54 = arith.constant 192 : index
    %c384_55 = arith.constant 384 : index
    %155 = vector.load %arg5[%c192_54, %c384_55] : memref<392x768xbf16, #tpu.memory_space<vmem>>, vector<16x384xbf16>
    tpu.vector_store %arg5[%c192_54, %c384_55], %154 {strides = array<i32>} : memref<392x768xbf16, #tpu.memory_space<vmem>>, vector<16x384xbf16>,
    %156 = vector.extract_strided_slice %103 {offsets = [0, 77], sizes = [8, 384], strides = [1, 1]} : vector<8x552xbf16> to vector<8x384xbf16>
    %157 = vector.extract_strided_slice %103 {offsets = [0, 78], sizes = [8, 384], strides = [1, 1]} : vector<8x552xbf16> to vector<8x384xbf16>
    %158 = tpu.concatenate %156, %157 in 0 : vector<8x384xbf16>, vector<8x384xbf16> -> vector<16x384xbf16>
    %c208_56 = arith.constant 208 : index
    %c384_57 = arith.constant 384 : index
    %159 = vector.load %arg5[%c208_56, %c384_57] : memref<392x768xbf16, #tpu.memory_space<vmem>>, vector<16x384xbf16>
    tpu.vector_store %arg5[%c208_56, %c384_57], %158 {strides = array<i32>} : memref<392x768xbf16, #tpu.memory_space<vmem>>, vector<16x384xbf16>,
    %160 = vector.extract_strided_slice %103 {offsets = [0, 96], sizes = [8, 384], strides = [1, 1]} : vector<8x552xbf16> to vector<8x384xbf16>
    %161 = vector.extract_strided_slice %103 {offsets = [0, 97], sizes = [8, 384], strides = [1, 1]} : vector<8x552xbf16> to vector<8x384xbf16>
    %162 = tpu.concatenate %160, %161 in 0 : vector<8x384xbf16>, vector<8x384xbf16> -> vector<16x384xbf16>
    %c224_58 = arith.constant 224 : index
    %c384_59 = arith.constant 384 : index
    %163 = vector.load %arg5[%c224_58, %c384_59] : memref<392x768xbf16, #tpu.memory_space<vmem>>, vector<16x384xbf16>
    tpu.vector_store %arg5[%c224_58, %c384_59], %162 {strides = array<i32>} : memref<392x768xbf16, #tpu.memory_space<vmem>>, vector<16x384xbf16>,
    %164 = vector.extract_strided_slice %103 {offsets = [0, 98], sizes = [8, 384], strides = [1, 1]} : vector<8x552xbf16> to vector<8x384xbf16>
    %165 = vector.extract_strided_slice %103 {offsets = [0, 99], sizes = [8, 384], strides = [1, 1]} : vector<8x552xbf16> to vector<8x384xbf16>
    %166 = tpu.concatenate %164, %165 in 0 : vector<8x384xbf16>, vector<8x384xbf16> -> vector<16x384xbf16>
    %c240_60 = arith.constant 240 : index
    %c384_61 = arith.constant 384 : index
    %167 = vector.load %arg5[%c240_60, %c384_61] : memref<392x768xbf16, #tpu.memory_space<vmem>>, vector<16x384xbf16>
    tpu.vector_store %arg5[%c240_60, %c384_61], %166 {strides = array<i32>} : memref<392x768xbf16, #tpu.memory_space<vmem>>, vector<16x384xbf16>,
    %168 = vector.extract_strided_slice %103 {offsets = [0, 100], sizes = [8, 384], strides = [1, 1]} : vector<8x552xbf16> to vector<8x384xbf16>
    %169 = vector.extract_strided_slice %103 {offsets = [0, 101], sizes = [8, 384], strides = [1, 1]} : vector<8x552xbf16> to vector<8x384xbf16>
    %170 = tpu.concatenate %168, %169 in 0 : vector<8x384xbf16>, vector<8x384xbf16> -> vector<16x384xbf16>
    %c256_62 = arith.constant 256 : index
    %c384_63 = arith.constant 384 : index
    %171 = vector.load %arg5[%c256_62, %c384_63] : memref<392x768xbf16, #tpu.memory_space<vmem>>, vector<16x384xbf16>
    tpu.vector_store %arg5[%c256_62, %c384_63], %170 {strides = array<i32>} : memref<392x768xbf16, #tpu.memory_space<vmem>>, vector<16x384xbf16>,
    %172 = vector.extract_strided_slice %103 {offsets = [0, 102], sizes = [8, 384], strides = [1, 1]} : vector<8x552xbf16> to vector<8x384xbf16>
    %173 = vector.extract_strided_slice %103 {offsets = [0, 120], sizes = [8, 384], strides = [1, 1]} : vector<8x552xbf16> to vector<8x384xbf16>
    %174 = tpu.concatenate %172, %173 in 0 : vector<8x384xbf16>, vector<8x384xbf16> -> vector<16x384xbf16>
    %c272_64 = arith.constant 272 : index
    %c384_65 = arith.constant 384 : index
    %175 = vector.load %arg5[%c272_64, %c384_65] : memref<392x768xbf16, #tpu.memory_space<vmem>>, vector<16x384xbf16>
    tpu.vector_store %arg5[%c272_64, %c384_65], %174 {strides = array<i32>} : memref<392x768xbf16, #tpu.memory_space<vmem>>, vector<16x384xbf16>,
    %176 = vector.extract_strided_slice %103 {offsets = [0, 121], sizes = [8, 384], strides = [1, 1]} : vector<8x552xbf16> to vector<8x384xbf16>
    %177 = vector.extract_strided_slice %103 {offsets = [0, 122], sizes = [8, 384], strides = [1, 1]} : vector<8x552xbf16> to vector<8x384xbf16>
    %178 = tpu.concatenate %176, %177 in 0 : vector<8x384xbf16>, vector<8x384xbf16> -> vector<16x384xbf16>
    %c288_66 = arith.constant 288 : index
    %c384_67 = arith.constant 384 : index
    %179 = vector.load %arg5[%c288_66, %c384_67] : memref<392x768xbf16, #tpu.memory_space<vmem>>, vector<16x384xbf16>
    tpu.vector_store %arg5[%c288_66, %c384_67], %178 {strides = array<i32>} : memref<392x768xbf16, #tpu.memory_space<vmem>>, vector<16x384xbf16>,
    %180 = vector.extract_strided_slice %103 {offsets = [0, 123], sizes = [8, 384], strides = [1, 1]} : vector<8x552xbf16> to vector<8x384xbf16>
    %181 = vector.extract_strided_slice %103 {offsets = [0, 124], sizes = [8, 384], strides = [1, 1]} : vector<8x552xbf16> to vector<8x384xbf16>
    %182 = tpu.concatenate %180, %181 in 0 : vector<8x384xbf16>, vector<8x384xbf16> -> vector<16x384xbf16>
    %c304_68 = arith.constant 304 : index
    %c384_69 = arith.constant 384 : index
    %183 = vector.load %arg5[%c304_68, %c384_69] : memref<392x768xbf16, #tpu.memory_space<vmem>>, vector<16x384xbf16>
    tpu.vector_store %arg5[%c304_68, %c384_69], %182 {strides = array<i32>} : memref<392x768xbf16, #tpu.memory_space<vmem>>, vector<16x384xbf16>,
    %184 = vector.extract_strided_slice %103 {offsets = [0, 125], sizes = [8, 384], strides = [1, 1]} : vector<8x552xbf16> to vector<8x384xbf16>
    %185 = vector.extract_strided_slice %103 {offsets = [0, 126], sizes = [8, 384], strides = [1, 1]} : vector<8x552xbf16> to vector<8x384xbf16>
    %186 = tpu.concatenate %184, %185 in 0 : vector<8x384xbf16>, vector<8x384xbf16> -> vector<16x384xbf16>
    %c320_70 = arith.constant 320 : index
    %c384_71 = arith.constant 384 : index
    %187 = vector.load %arg5[%c320_70, %c384_71] : memref<392x768xbf16, #tpu.memory_space<vmem>>, vector<16x384xbf16>
    tpu.vector_store %arg5[%c320_70, %c384_71], %186 {strides = array<i32>} : memref<392x768xbf16, #tpu.memory_space<vmem>>, vector<16x384xbf16>,
    %188 = vector.extract_strided_slice %103 {offsets = [0, 144], sizes = [8, 384], strides = [1, 1]} : vector<8x552xbf16> to vector<8x384xbf16>
    %189 = vector.extract_strided_slice %103 {offsets = [0, 145], sizes = [8, 384], strides = [1, 1]} : vector<8x552xbf16> to vector<8x384xbf16>
    %190 = tpu.concatenate %188, %189 in 0 : vector<8x384xbf16>, vector<8x384xbf16> -> vector<16x384xbf16>
    %c336_72 = arith.constant 336 : index
    %c384_73 = arith.constant 384 : index
    %191 = vector.load %arg5[%c336_72, %c384_73] : memref<392x768xbf16, #tpu.memory_space<vmem>>, vector<16x384xbf16>
    tpu.vector_store %arg5[%c336_72, %c384_73], %190 {strides = array<i32>} : memref<392x768xbf16, #tpu.memory_space<vmem>>, vector<16x384xbf16>,
    %192 = vector.extract_strided_slice %103 {offsets = [0, 146], sizes = [8, 384], strides = [1, 1]} : vector<8x552xbf16> to vector<8x384xbf16>
    %193 = vector.extract_strided_slice %103 {offsets = [0, 147], sizes = [8, 384], strides = [1, 1]} : vector<8x552xbf16> to vector<8x384xbf16>
    %194 = tpu.concatenate %192, %193 in 0 : vector<8x384xbf16>, vector<8x384xbf16> -> vector<16x384xbf16>
    %c352_74 = arith.constant 352 : index
    %c384_75 = arith.constant 384 : index
    %195 = vector.load %arg5[%c352_74, %c384_75] : memref<392x768xbf16, #tpu.memory_space<vmem>>, vector<16x384xbf16>
    tpu.vector_store %arg5[%c352_74, %c384_75], %194 {strides = array<i32>} : memref<392x768xbf16, #tpu.memory_space<vmem>>, vector<16x384xbf16>,
    %196 = vector.extract_strided_slice %103 {offsets = [0, 148], sizes = [8, 384], strides = [1, 1]} : vector<8x552xbf16> to vector<8x384xbf16>
    %197 = vector.extract_strided_slice %103 {offsets = [0, 149], sizes = [8, 384], strides = [1, 1]} : vector<8x552xbf16> to vector<8x384xbf16>
    %198 = tpu.concatenate %196, %197 in 0 : vector<8x384xbf16>, vector<8x384xbf16> -> vector<16x384xbf16>
    %c368_76 = arith.constant 368 : index
    %c384_77 = arith.constant 384 : index
    %199 = vector.load %arg5[%c368_76, %c384_77] : memref<392x768xbf16, #tpu.memory_space<vmem>>, vector<16x384xbf16>
    tpu.vector_store %arg5[%c368_76, %c384_77], %198 {strides = array<i32>} : memref<392x768xbf16, #tpu.memory_space<vmem>>, vector<16x384xbf16>,
    %200 = vector.extract_strided_slice %103 {offsets = [0, 150], sizes = [8, 384], strides = [1, 1]} : vector<8x552xbf16> to vector<8x384xbf16>
    %c384_78 = arith.constant 384 : index
    %c384_79 = arith.constant 384 : index
    %201 = vector.load %arg5[%c384_78, %c384_79] : memref<392x768xbf16, #tpu.memory_space<vmem>>, vector<8x384xbf16>
    tpu.vector_store %arg5[%c384_78, %c384_79], %200 {strides = array<i32>} : memref<392x768xbf16, #tpu.memory_space<vmem>>, vector<8x384xbf16>,
    %c0_80 = arith.constant 0 : index
    %c0_81 = arith.constant 0 : index
    %202 = vector.load %arg2[%c0_80, %c0_81] : memref<16x392xbf16, #tpu.memory_space<vmem>>, vector<16x392xbf16>
    %c0_82 = arith.constant 0 : index
    %c0_83 = arith.constant 0 : index
    %203 = vector.load %arg5[%c0_82, %c0_83] : memref<392x768xbf16, #tpu.memory_space<vmem>>, vector<392x768xbf16>
    %cst = arith.constant dense<0.000000e+00> : vector<16x768xf32>
    %204 = tpu.matmul %202, %203, %cst {dimension_numbers = #tpu.dot_dimension_numbers<[1], [0], [0], [1], [0, 0, 1, 1], [], []>} : vector<16x392xbf16>, vector<392x768xbf16>, vector<16x768xf32> -> vector<16x768xf32>
    %c0_84 = arith.constant 0 : index
    %c0_85 = arith.constant 0 : index
    %205 = vector.load %arg3[%c0_84, %c0_85] : memref<16x1xf32, #tpu.memory_space<vmem>>, vector<16x1xf32>
    %206 = vector.broadcast %205 : vector<16x1xf32> to vector<16x768xf32>
    %207 = arith.addf %204, %206 : vector<16x768xf32>
    %c0_86 = arith.constant 0 : index
    %c0_87 = arith.constant 0 : index
    %c0_88 = arith.constant 0 : index
    %208 = vector.load %arg1[%c0_86, %c0_87, %c0_88] : memref<2x8x552xf32, #tpu.memory_space<vmem>>, vector<1x8x552xf32>
    %209 = vector.shape_cast %208 : vector<1x8x552xf32> to vector<8x552xf32>
    %210 = vector.extract_strided_slice %209 {offsets = [0, 75], sizes = [8, 384], strides = [1, 1]} : vector<8x552xf32> to vector<8x384xf32>
    %211 = vector.extract_strided_slice %207 {offsets = [0, 0], sizes = [8, 384], strides = [1, 1]} : vector<16x768xf32> to vector<8x384xf32>
    %212 = vector.extract_strided_slice %207 {offsets = [8, 0], sizes = [8, 384], strides = [1, 1]} : vector<16x768xf32> to vector<8x384xf32>
    %213 = arith.addf %211, %210 : vector<8x384xf32>
    %cst_89 = arith.constant 0.000000e+00 : f32
    %214 = vector.broadcast %cst_89 : f32 to vector<8x384xf32>
    %215 = arith.maximumf %213, %214 : vector<8x384xf32>
    %216 = arith.addf %212, %215 : vector<8x384xf32>
    %cst_90 = arith.constant 0.000000e+00 : f32
    %217 = vector.broadcast %cst_90 : f32 to vector<8x384xf32>
    %218 = arith.maximumf %216, %217 : vector<8x384xf32>
    %219 = arith.addf %218, %210 : vector<8x384xf32>
    %cst_91 = arith.constant 0.000000e+00 : f32
    %220 = vector.broadcast %cst_91 : f32 to vector<8x384xf32>
    %221 = arith.maximumf %219, %220 : vector<8x384xf32>
    %c0_92 = arith.constant 0 : index
    %c0_93 = arith.constant 0 : index
    %c0_94 = arith.constant 0 : index
    %222 = vector.load %arg4[%c0_92, %c0_93, %c0_94] : memref<2x8x384xf32, #tpu.memory_space<vmem>>, vector<1x8x384xf32>
    %223 = vector.shape_cast %222 : vector<1x8x384xf32> to vector<8x384xf32>
    %224 = vector.shape_cast %221 : vector<8x384xf32> to vector<1x8x384xf32>
    tpu.vector_store %arg4[%c0_92, %c0_93, %c0_94], %224 {strides = array<i32>} : memref<2x8x384xf32, #tpu.memory_space<vmem>>, vector<1x8x384xf32>,
    %c1_95 = arith.constant 1 : index
    %c0_96 = arith.constant 0 : index
    %c0_97 = arith.constant 0 : index
    %225 = vector.load %arg1[%c1_95, %c0_96, %c0_97] : memref<2x8x552xf32, #tpu.memory_space<vmem>>, vector<1x8x552xf32>
    %226 = vector.shape_cast %225 : vector<1x8x552xf32> to vector<8x552xf32>
    %227 = vector.extract_strided_slice %226 {offsets = [0, 75], sizes = [8, 384], strides = [1, 1]} : vector<8x552xf32> to vector<8x384xf32>
    %228 = vector.extract_strided_slice %207 {offsets = [0, 384], sizes = [8, 384], strides = [1, 1]} : vector<16x768xf32> to vector<8x384xf32>
    %229 = vector.extract_strided_slice %207 {offsets = [8, 384], sizes = [8, 384], strides = [1, 1]} : vector<16x768xf32> to vector<8x384xf32>
    %230 = arith.addf %228, %227 : vector<8x384xf32>
    %cst_98 = arith.constant 0.000000e+00 : f32
    %231 = vector.broadcast %cst_98 : f32 to vector<8x384xf32>
    %232 = arith.maximumf %230, %231 : vector<8x384xf32>
    %233 = arith.addf %229, %232 : vector<8x384xf32>
    %cst_99 = arith.constant 0.000000e+00 : f32
    %234 = vector.broadcast %cst_99 : f32 to vector<8x384xf32>
    %235 = arith.maximumf %233, %234 : vector<8x384xf32>
    %236 = arith.addf %235, %227 : vector<8x384xf32>
    %cst_100 = arith.constant 0.000000e+00 : f32
    %237 = vector.broadcast %cst_100 : f32 to vector<8x384xf32>
    %238 = arith.maximumf %236, %237 : vector<8x384xf32>
    %c1_101 = arith.constant 1 : index
    %c0_102 = arith.constant 0 : index
    %c0_103 = arith.constant 0 : index
    %239 = vector.load %arg4[%c1_101, %c0_102, %c0_103] : memref<2x8x384xf32, #tpu.memory_space<vmem>>, vector<1x8x384xf32>
    %240 = vector.shape_cast %239 : vector<1x8x384xf32> to vector<8x384xf32>
    %241 = vector.shape_cast %238 : vector<8x384xf32> to vector<1x8x384xf32>
    tpu.vector_store %arg4[%c1_101, %c0_102, %c0_103], %241 {strides = array<i32>} : memref<2x8x384xf32, #tpu.memory_space<vmem>>, vector<1x8x384xf32>,
    return
  }
  func.func @transform_0(%arg0: i32) -> (i32, i32, i32) {
    %c0_i32 = arith.constant 0 : i32
    %c0_i32_0 = arith.constant 0 : i32
    %c0_i32_1 = arith.constant 0 : i32
    return %arg0, %c0_i32, %c0_i32_0 : i32, i32, i32
  }
  func.func @transform_1(%arg0: i32) -> (i32, i32) {
    %c0_i32 = arith.constant 0 : i32
    %c0_i32_0 = arith.constant 0 : i32
    %c0_i32_1 = arith.constant 0 : i32
    return %c0_i32, %c0_i32_0 : i32, i32
  }
  func.func @transform_2(%arg0: i32) -> (i32, i32) {
    %c0_i32 = arith.constant 0 : i32
    %c0_i32_0 = arith.constant 0 : i32
    %c0_i32_1 = arith.constant 0 : i32
    return %c0_i32, %c0_i32_0 : i32, i32
  }
  func.func @transform_3(%arg0: i32) -> (i32, i32, i32) {
    %c0_i32 = arith.constant 0 : i32
    %c0_i32_0 = arith.constant 0 : i32
    %c0_i32_1 = arith.constant 0 : i32
    return %arg0, %c0_i32, %c0_i32_0 : i32, i32, i32
  }
}

</mosaic_0001>

<llo_original>
// kernel: model_forward.1
$region0: #{model_forward.1}
  #allocation0 [shape = 'u32[]', space=smem, size = 0x4, offset = 0x4, fixed_abs, tag = 'smem constant byte address 0x4 - core index']
  #allocation1 [shape = 'u32[72,128]{1,0:T(1,128)}', space=vmem, size = 0x9000, scoped, tag = 'internal scratch']
  #allocation2 [shape = 'bf16[392,768]{1,0:T(8,128)(2,1)}', space=vmem, size = 0x93000, scoped, tag = 'scratch operand']
  %s0 = inlined_call_operand.vmem [shape: f32[2,8,552], index: 0, kind: input, shape index: {}]
  %s1 = inlined_call_operand.vmem [shape: bf16[16,392], index: 1, kind: input, shape index: {}]
  %s2 = inlined_call_operand.vmem [shape: f32[16,1], index: 2, kind: input, shape index: {}]
  %s3 = inlined_call_operand.vmem [shape: f32[2,8,384], index: 3, kind: output, shape index: {}]
  %s4 = sld [smem:[#allocation0]]
  $region22: #{model_forward.1} parent=0
    _
  %s6 = ssub.s32 1, %s4
  %s7 = scalar_select 0, %s6, %s4
  // Predicated region
  $region2: #{model_forward.1} parent=0 // pred_check
    _
  $region3: #{model_forward.1} parent=0 // pred_check_branch
    %9 = sbr.rel (0) target = $region5
  $region4: #{model_forward.1} parent=0 // pred_region
    _
  $region5: #{model_forward.1} parent=0 // pred_fallthru
    _
  // Predicated region
  $region6: #{model_forward.1} parent=0 // pred_check
    _
  $region7: #{model_forward.1} parent=0 // pred_check_branch
    %11 = sbr.rel (0) target = $region9
  $region8: #{model_forward.1} parent=0 // pred_region
    _
  $region9: #{model_forward.1} parent=0 // pred_fallthru
    _
  // Predicated region
  $region10: #{model_forward.1} parent=0 // pred_check
    _
  $region11: #{model_forward.1} parent=0 // pred_check_branch
    %13 = sbr.rel (0) target = $region13
  $region12: #{model_forward.1} parent=0 // pred_region
    _
  $region13: #{model_forward.1} parent=0 // pred_fallthru
    _
  %v15 = vld [vmem:[%s0] sm:$0xff]
  %v16 = vld [vmem:[%s0 + $0x8] sm:$0xff]
  %v17 = vld [vmem:[%s0 + $0x10] sm:$0xff]
  %v18 = vld [vmem:[%s0 + $0x18] sm:$0xff]
  %v19 = vld [vmem:[%s0 + $0x20] sm:$0xff]
  %v20 = vpack.c.bf16 %v16, %v15
  %v21 = vpack.c.bf16 %v18, %v17
  %v22 = vpack.c.bf16 %v19, %v19
  %v25 = vunpack.c.l.b16 %v20
  %v26 = vunpack.c.h.b16 %v20
  %v27 = vunpack.c.l.b16 %v21
  %v28 = vpack.c.b16 %v25, %v25
  %v29 = vpack.c.b16 %v26, %v26
  %v30 = vpack.c.b16 %v27, %v27
  %v31 = vunpack.c.h.b16 %v21
  %v32 = vpack.c.b16 %v31, %v31
  %33 = vrot.lane.b32.xlu0 %v28, 127
  %v34 = vpop.permute.xlu0 %33
  %35 = vrot.lane.b32.xlu0 %v29, 127
  %v36 = vpop.permute.xlu0 %35
  %37 = vrot.lane.b32.xlu0 %v30, 127
  %v38 = vpop.permute.xlu0 %37
  %39 = vrot.lane.b32.xlu0 %v32, 127
  %v40 = vpop.permute.xlu0 %39
  %vm41 = vcmask 1039360
  %v42 = vsel %vm41, %v34, %v36
  %v43 = vsel %vm41, %v36, %v38
  %v44 = vsel %vm41, %v38, %v40
  %vm45 = vcmask 1043456
  %v48 = vsel %vm45, %v28, %v42
  %v51 = vsel %vm45, %v29, %v43
  %v54 = vsel %vm45, %v30, %v44
  %v58 = vunpack.c.l.b16 %v48
  %v59 = vunpack.c.l.b16 %v51
  %v60 = vunpack.c.l.b16 %v54
  %v61 = vunpack.c.h.b16 %v48
  %v62 = vunpack.c.h.b16 %v51
  %v63 = vunpack.c.h.b16 %v54
  %v64 = vpack.c.b16 %v59, %v58
  %v65 = vpack.c.b16 %v60, %v60
  %v66 = vpack.c.b16 %v62, %v61
  %v67 = vpack.c.b16 %v63, %v63
  %72 = vst [vmem:[#allocation2] sm:$0xff] %v64
  %73 = vst [vmem:[#allocation2 + $0x8] sm:$0xf] %v65
  %74 = vst [vmem:[#allocation2 + $0x18] sm:$0xff] %v66
  %75 = vst [vmem:[#allocation2 + $0x20] sm:$0xf] %v67
  %v78 = vsel %vm45, %v32, %v40
  %v80 = vunpack.c.l.b16 %v78
  %v81 = vunpack.c.h.b16 %v78
  %v82 = vpack.c.b16 %v80, %v60
  %v83 = vpack.c.b16 %v81, %v63
  %84 = vrot.lane.b32.xlu0 %v64, 126
  %v85 = vpop.permute.xlu0 %84
  %86 = vrot.lane.b32.xlu0 %v82, 126
  %v87 = vpop.permute.xlu0 %86
  %88 = vrot.lane.b32.xlu0 %v66, 126
  %v89 = vpop.permute.xlu0 %88
  %90 = vrot.lane.b32.xlu0 %v83, 126
  %v91 = vpop.permute.xlu0 %90
  %v92 = vrot.slane %v85, 4
  %v93 = vrot.slane %v87, 4
  %v94 = vrot.slane %v89, 4
  %v95 = vrot.slane %v91, 4
  %vm96 = vcmask 1043456
  %v97 = vsel %vm96, %v92, %v93
  %vm98 = vcmask 1031168
  %v99 = vsel %vm98, %v85, %v97
  %v100 = vsel %vm98, %v87, %v93
  %v101 = vsel %vm96, %v94, %v95
  %v102 = vsel %vm98, %v89, %v101
  %v103 = vsel %vm98, %v91, %v95
  %108 = vst [vmem:[#allocation2 + $0x30] sm:$0xff] %v99
  %109 = vst [vmem:[#allocation2 + $0x38] sm:$0xf] %v100
  %110 = vst [vmem:[#allocation2 + $0x48] sm:$0xff] %v102
  %111 = vst [vmem:[#allocation2 + $0x50] sm:$0xf] %v103
  %112 = vrot.lane.b32.xlu0 %v64, 124
  %v113 = vpop.permute.xlu0 %112
  %114 = vrot.lane.b32.xlu0 %v82, 124
  %v115 = vpop.permute.xlu0 %114
  %116 = vrot.lane.b32.xlu0 %v66, 124
  %v117 = vpop.permute.xlu0 %116
  %118 = vrot.lane.b32.xlu0 %v83, 124
  %v119 = vpop.permute.xlu0 %118
  %v120 = vrot.slane %v113, 4
  %v121 = vrot.slane %v115, 4
  %v122 = vrot.slane %v117, 4
  %v123 = vrot.slane %v119, 4
  %v124 = vsel %vm96, %v120, %v121
  %vm125 = vcmask 1014784
  %v126 = vsel %vm125, %v113, %v124
  %v127 = vsel %vm125, %v115, %v121
  %v128 = vsel %vm96, %v122, %v123
  %v129 = vsel %vm125, %v117, %v128
  %v130 = vsel %vm125, %v119, %v123
  %135 = vst [vmem:[#allocation2 + $0x60] sm:$0xff] %v126
  %136 = vst [vmem:[#allocation2 + $0x68] sm:$0xf] %v127
  %137 = vst [vmem:[#allocation2 + $0x78] sm:$0xff] %v129
  %138 = vst [vmem:[#allocation2 + $0x80] sm:$0xf] %v130
  %139 = vrot.lane.b32.xlu0 %v28, 110
  %v140 = vpop.permute.xlu0 %139
  %141 = vrot.lane.b32.xlu0 %v29, 110
  %v142 = vpop.permute.xlu0 %141
  %143 = vrot.lane.b32.xlu0 %v30, 110
  %v144 = vpop.permute.xlu0 %143
  %145 = vrot.lane.b32.xlu0 %v32, 110
  %v146 = vpop.permute.xlu0 %145
  %vm147 = vcmask 900096
  %v148 = vsel %vm147, %v140, %v142
  %v149 = vsel %vm147, %v142, %v144
  %v150 = vsel %vm147, %v144, %v146
  %v152 = vsel %vm45, %v28, %v148
  %v154 = vsel %vm45, %v29, %v149
  %v156 = vsel %vm45, %v30, %v150
  %v158 = vsel %vm45, %v32, %v146
  %v163 = vunpack.c.l.b16 %v152
  %v164 = vunpack.c.l.b16 %v154
  %v165 = vunpack.c.l.b16 %v156
  %v166 = vunpack.c.l.b16 %v158
  %v167 = vunpack.c.h.b16 %v152
  %v168 = vunpack.c.h.b16 %v154
  %v169 = vunpack.c.h.b16 %v156
  %v170 = vunpack.c.h.b16 %v158
  %v171 = vpack.c.b16 %v164, %v163
  %v172 = vpack.c.b16 %v166, %v165
  %v173 = vpack.c.b16 %v168, %v167
  %v174 = vpack.c.b16 %v170, %v169
  %175 = vrot.lane.b32.xlu0 %v171, 122
  %v176 = vpop.permute.xlu0 %175
  %177 = vrot.lane.b32.xlu0 %v172, 122
  %v178 = vpop.permute.xlu0 %177
  %179 = vrot.lane.b32.xlu0 %v173, 122
  %v180 = vpop.permute.xlu0 %179
  %181 = vrot.lane.b32.xlu0 %v174, 122
  %v182 = vpop.permute.xlu0 %181
  %v183 = vrot.slane %v176, 4
  %v184 = vrot.slane %v178, 4
  %v185 = vrot.slane %v180, 4
  %v186 = vrot.slane %v182, 4
  %v187 = vsel %vm96, %v183, %v184
  %vm188 = vcmask 998400
  %v189 = vsel %vm188, %v176, %v187
  %v190 = vsel %vm188, %v178, %v184
  %v191 = vsel %vm96, %v185, %v186
  %v192 = vsel %vm188, %v180, %v191
  %v193 = vsel %vm188, %v182, %v186
  %198 = vst [vmem:[#allocation2 + $0x90] sm:$0xff] %v189
  %199 = vst [vmem:[#allocation2 + $0x98] sm:$0xf] %v190
  %200 = vst [vmem:[#allocation2 + $0xa8] sm:$0xff] %v192
  %201 = vst [vmem:[#allocation2 + $0xb0] sm:$0xf] %v193
  %202 = vrot.lane.b32.xlu0 %v64, 103
  %v203 = vpop.permute.xlu0 %202
  %204 = vrot.lane.b32.xlu0 %v82, 103
  %v205 = vpop.permute.xlu0 %204
  %206 = vrot.lane.b32.xlu0 %v66, 103
  %v207 = vpop.permute.xlu0 %206
  %208 = vrot.lane.b32.xlu0 %v83, 103
  %v209 = vpop.permute.xlu0 %208
  %v210 = vrot.slane %v203, 4
  %v211 = vrot.slane %v205, 4
  %v212 = vrot.slane %v207, 4
  %v213 = vrot.slane %v209, 4
  %v214 = vsel %vm96, %v210, %v211
  %vm215 = vcmask 842752
  %v216 = vsel %vm215, %v203, %v214
  %v217 = vsel %vm215, %v205, %v211
  %v218 = vsel %vm96, %v212, %v213
  %v219 = vsel %vm215, %v207, %v218
  %v220 = vsel %vm215, %v209, %v213
  %225 = vst [vmem:[#allocation2 + $0xc0] sm:$0xff] %v216
  %226 = vst [vmem:[#allocation2 + $0xc8] sm:$0xf] %v217
  %227 = vst [vmem:[#allocation2 + $0xd8] sm:$0xff] %v219
  %228 = vst [vmem:[#allocation2 + $0xe0] sm:$0xf] %v220
  %229 = vrot.lane.b32.xlu0 %v64, 101
  %v230 = vpop.permute.xlu0 %229
  %231 = vrot.lane.b32.xlu0 %v82, 101
  %v232 = vpop.permute.xlu0 %231
  %233 = vrot.lane.b32.xlu0 %v66, 101
  %v234 = vpop.permute.xlu0 %233
  %235 = vrot.lane.b32.xlu0 %v83, 101
  %v236 = vpop.permute.xlu0 %235
  %v237 = vrot.slane %v230, 4
  %v238 = vrot.slane %v232, 4
  %v239 = vrot.slane %v234, 4
  %v240 = vrot.slane %v236, 4
  %v241 = vsel %vm96, %v237, %v238
  %vm242 = vcmask 826368
  %v243 = vsel %vm242, %v230, %v241
  %v244 = vsel %vm242, %v232, %v238
  %v245 = vsel %vm96, %v239, %v240
  %v246 = vsel %vm242, %v234, %v245
  %v247 = vsel %vm242, %v236, %v240
  %252 = vst [vmem:[#allocation2 + $0xf0] sm:$0xff] %v243
  %253 = vst [vmem:[#allocation2 + $0xf8] sm:$0xf] %v244
  %254 = vst [vmem:[#allocation2 + $0x108] sm:$0xff] %v246
  %255 = vst [vmem:[#allocation2 + $0x110] sm:$0xf] %v247
  %256 = vrot.lane.b32.xlu0 %v64, 99
  %v257 = vpop.permute.xlu0 %256
  %258 = vrot.lane.b32.xlu0 %v82, 99
  %v259 = vpop.permute.xlu0 %258
  %260 = vrot.lane.b32.xlu0 %v66, 99
  %v261 = vpop.permute.xlu0 %260
  %262 = vrot.lane.b32.xlu0 %v83, 99
  %v263 = vpop.permute.xlu0 %262
  %v264 = vrot.slane %v257, 4
  %v265 = vrot.slane %v259, 4
  %v266 = vrot.slane %v261, 4
  %v267 = vrot.slane %v263, 4
  %v268 = vsel %vm96, %v264, %v265
  %vm269 = vcmask 809984
  %v270 = vsel %vm269, %v257, %v268
  %v271 = vsel %vm269, %v259, %v265
  %v272 = vsel %vm96, %v266, %v267
  %v273 = vsel %vm269, %v261, %v272
  %v274 = vsel %vm269, %v263, %v267
  %279 = vst [vmem:[#allocation2 + $0x120] sm:$0xff] %v270
  %280 = vst [vmem:[#allocation2 + $0x128] sm:$0xf] %v271
  %281 = vst [vmem:[#allocation2 + $0x138] sm:$0xff] %v273
  %282 = vst [vmem:[#allocation2 + $0x140] sm:$0xf] %v274
  %283 = vrot.lane.b32.xlu0 %v64, 80
  %v284 = vpop.permute.xlu0 %283
  %285 = vrot.lane.b32.xlu0 %v82, 80
  %v286 = vpop.permute.xlu0 %285
  %287 = vrot.lane.b32.xlu0 %v66, 80
  %v288 = vpop.permute.xlu0 %287
  %289 = vrot.lane.b32.xlu0 %v83, 80
  %v290 = vpop.permute.xlu0 %289
  %v291 = vrot.slane %v284, 4
  %v292 = vrot.slane %v286, 4
  %v293 = vrot.slane %v288, 4
  %v294 = vrot.slane %v290, 4
  %v295 = vsel %vm96, %v291, %v292
  %vm296 = vcmask 654336
  %v297 = vsel %vm296, %v284, %v295
  %v298 = vsel %vm296, %v286, %v292
  %v299 = vsel %vm96, %v293, %v294
  %v300 = vsel %vm296, %v288, %v299
  %v301 = vsel %vm296, %v290, %v294
  %306 = vst [vmem:[#allocation2 + $0x150] sm:$0xff] %v297
  %307 = vst [vmem:[#allocation2 + $0x158] sm:$0xf] %v298
  %308 = vst [vmem:[#allocation2 + $0x168] sm:$0xff] %v300
  %309 = vst [vmem:[#allocation2 + $0x170] sm:$0xf] %v301
  %310 = vrot.lane.b32.xlu0 %v64, 78
  %v311 = vpop.permute.xlu0 %310
  %312 = vrot.lane.b32.xlu0 %v82, 78
  %v313 = vpop.permute.xlu0 %312
  %314 = vrot.lane.b32.xlu0 %v66, 78
  %v315 = vpop.permute.xlu0 %314
  %316 = vrot.lane.b32.xlu0 %v83, 78
  %v317 = vpop.permute.xlu0 %316
  %v318 = vrot.slane %v311, 4
  %v319 = vrot.slane %v313, 4
  %v320 = vrot.slane %v315, 4
  %v321 = vrot.slane %v317, 4
  %v322 = vsel %vm96, %v318, %v319
  %vm323 = vcmask 637952
  %v324 = vsel %vm323, %v311, %v322
  %v325 = vsel %vm323, %v313, %v319
  %v326 = vsel %vm96, %v320, %v321
  %v327 = vsel %vm323, %v315, %v326
  %v328 = vsel %vm323, %v317, %v321
  %333 = vst [vmem:[#allocation2 + $0x180] sm:$0xff] %v324
  %334 = vst [vmem:[#allocation2 + $0x188] sm:$0xf] %v325
  %335 = vst [vmem:[#allocation2 + $0x198] sm:$0xff] %v327
  %336 = vst [vmem:[#allocation2 + $0x1a0] sm:$0xf] %v328
  %337 = vrot.lane.b32.xlu0 %v64, 76
  %v338 = vpop.permute.xlu0 %337
  %339 = vrot.lane.b32.xlu0 %v82, 76
  %v340 = vpop.permute.xlu0 %339
  %341 = vrot.lane.b32.xlu0 %v66, 76
  %v342 = vpop.permute.xlu0 %341
  %343 = vrot.lane.b32.xlu0 %v83, 76
  %v344 = vpop.permute.xlu0 %343
  %v345 = vrot.slane %v338, 4
  %v346 = vrot.slane %v340, 4
  %v347 = vrot.slane %v342, 4
  %v348 = vrot.slane %v344, 4
  %v349 = vsel %vm96, %v345, %v346
  %vm350 = vcmask 621568
  %v351 = vsel %vm350, %v338, %v349
  %v352 = vsel %vm350, %v340, %v346
  %v353 = vsel %vm96, %v347, %v348
  %v354 = vsel %vm350, %v342, %v353
  %v355 = vsel %vm350, %v344, %v348
  %360 = vst [vmem:[#allocation2 + $0x1b0] sm:$0xff] %v351
  %361 = vst [vmem:[#allocation2 + $0x1b8] sm:$0xf] %v352
  %362 = vst [vmem:[#allocation2 + $0x1c8] sm:$0xff] %v354
  %363 = vst [vmem:[#allocation2 + $0x1d0] sm:$0xf] %v355
  %364 = vrot.lane.b32.xlu0 %v171, 74
  %v365 = vpop.permute.xlu0 %364
  %366 = vrot.lane.b32.xlu0 %v172, 74
  %v367 = vpop.permute.xlu0 %366
  %368 = vrot.lane.b32.xlu0 %v173, 74
  %v369 = vpop.permute.xlu0 %368
  %370 = vrot.lane.b32.xlu0 %v174, 74
  %v371 = vpop.permute.xlu0 %370
  %v372 = vrot.slane %v365, 4
  %v373 = vrot.slane %v367, 4
  %v374 = vrot.slane %v369, 4
  %v375 = vrot.slane %v371, 4
  %v376 = vsel %vm96, %v372, %v373
  %vm377 = vcmask 605184
  %v378 = vsel %vm377, %v365, %v376
  %v379 = vsel %vm377, %v367, %v373
  %v380 = vsel %vm96, %v374, %v375
  %v381 = vsel %vm377, %v369, %v380
  %v382 = vsel %vm377, %v371, %v375
  %387 = vst [vmem:[#allocation2 + $0x1e0] sm:$0xff] %v378
  %388 = vst [vmem:[#allocation2 + $0x1e8] sm:$0xf] %v379
  %389 = vst [vmem:[#allocation2 + $0x1f8] sm:$0xff] %v381
  %390 = vst [vmem:[#allocation2 + $0x200] sm:$0xf] %v382
  %391 = vrot.lane.b32.xlu0 %v64, 55
  %v392 = vpop.permute.xlu0 %391
  %393 = vrot.lane.b32.xlu0 %v82, 55
  %v394 = vpop.permute.xlu0 %393
  %395 = vrot.lane.b32.xlu0 %v66, 55
  %v396 = vpop.permute.xlu0 %395
  %397 = vrot.lane.b32.xlu0 %v83, 55
  %v398 = vpop.permute.xlu0 %397
  %v399 = vrot.slane %v392, 4
  %v400 = vrot.slane %v394, 4
  %v401 = vrot.slane %v396, 4
  %v402 = vrot.slane %v398, 4
  %v403 = vsel %vm96, %v399, %v400
  %vm404 = vcmask 449536
  %v405 = vsel %vm404, %v392, %v403
  %v406 = vsel %vm404, %v394, %v400
  %v407 = vsel %vm96, %v401, %v402
  %v408 = vsel %vm404, %v396, %v407
  %v409 = vsel %vm404, %v398, %v402
  %414 = vst [vmem:[#allocation2 + $0x210] sm:$0xff] %v405
  %415 = vst [vmem:[#allocation2 + $0x218] sm:$0xf] %v406
  %416 = vst [vmem:[#allocation2 + $0x228] sm:$0xff] %v408
  %417 = vst [vmem:[#allocation2 + $0x230] sm:$0xf] %v409
  %418 = vrot.lane.b32.xlu0 %v64, 53
  %v419 = vpop.permute.xlu0 %418
  %420 = vrot.lane.b32.xlu0 %v82, 53
  %v421 = vpop.permute.xlu0 %420
  %422 = vrot.lane.b32.xlu0 %v66, 53
  %v423 = vpop.permute.xlu0 %422
  %424 = vrot.lane.b32.xlu0 %v83, 53
  %v425 = vpop.permute.xlu0 %424
  %v426 = vrot.slane %v419, 4
  %v427 = vrot.slane %v421, 4
  %v428 = vrot.slane %v423, 4
  %v429 = vrot.slane %v425, 4
  %v430 = vsel %vm96, %v426, %v427
  %vm431 = vcmask 433152
  %v432 = vsel %vm431, %v419, %v430
  %v433 = vsel %vm431, %v421, %v427
  %v434 = vsel %vm96, %v428, %v429
  %v435 = vsel %vm431, %v423, %v434
  %v436 = vsel %vm431, %v425, %v429
  %441 = vst [vmem:[#allocation2 + $0x240] sm:$0xff] %v432
  %442 = vst [vmem:[#allocation2 + $0x248] sm:$0xf] %v433
  %443 = vst [vmem:[#allocation2 + $0x258] sm:$0xff] %v435
  %444 = vst [vmem:[#allocation2 + $0x260] sm:$0xf] %v436
  %445 = vrot.lane.b32.xlu0 %v64, 51
  %v446 = vpop.permute.xlu0 %445
  %447 = vrot.lane.b32.xlu0 %v82, 51
  %v448 = vpop.permute.xlu0 %447
  %449 = vrot.lane.b32.xlu0 %v66, 51
  %v450 = vpop.permute.xlu0 %449
  %451 = vrot.lane.b32.xlu0 %v83, 51
  %v452 = vpop.permute.xlu0 %451
  %v453 = vrot.slane %v446, 4
  %v454 = vrot.slane %v448, 4
  %v455 = vrot.slane %v450, 4
  %v456 = vrot.slane %v452, 4
  %v457 = vsel %vm96, %v453, %v454
  %vm458 = vcmask 416768
  %v459 = vsel %vm458, %v446, %v457
  %v460 = vsel %vm458, %v448, %v454
  %v461 = vsel %vm96, %v455, %v456
  %v462 = vsel %vm458, %v450, %v461
  %v463 = vsel %vm458, %v452, %v456
  %468 = vst [vmem:[#allocation2 + $0x270] sm:$0xff] %v459
  %469 = vst [vmem:[#allocation2 + $0x278] sm:$0xf] %v460
  %470 = vst [vmem:[#allocation2 + $0x288] sm:$0xff] %v462
  %471 = vst [vmem:[#allocation2 + $0x290] sm:$0xf] %v463
  %472 = vrot.lane.b32.xlu0 %v64, 32
  %v473 = vpop.permute.xlu0 %472
  %474 = vrot.lane.b32.xlu0 %v82, 32
  %v475 = vpop.permute.xlu0 %474
  %476 = vrot.lane.b32.xlu0 %v66, 32
  %v477 = vpop.permute.xlu0 %476
  %478 = vrot.lane.b32.xlu0 %v83, 32
  %v479 = vpop.permute.xlu0 %478
  %v480 = vrot.slane %v473, 4
  %v481 = vrot.slane %v475, 4
  %v482 = vrot.slane %v477, 4
  %v483 = vrot.slane %v479, 4
  %v484 = vsel %vm96, %v480, %v481
  %vm485 = vcmask 261120
  %v486 = vsel %vm485, %v473, %v484
  %v487 = vsel %vm485, %v475, %v481
  %v488 = vsel %vm96, %v482, %v483
  %v489 = vsel %vm485, %v477, %v488
  %v490 = vsel %vm485, %v479, %v483
  %495 = vst [vmem:[#allocation2 + $0x2a0] sm:$0xff] %v486
  %496 = vst [vmem:[#allocation2 + $0x2a8] sm:$0xf] %v487
  %497 = vst [vmem:[#allocation2 + $0x2b8] sm:$0xff] %v489
  %498 = vst [vmem:[#allocation2 + $0x2c0] sm:$0xf] %v490
  %499 = vrot.lane.b32.xlu0 %v64, 30
  %v500 = vpop.permute.xlu0 %499
  %501 = vrot.lane.b32.xlu0 %v82, 30
  %v502 = vpop.permute.xlu0 %501
  %503 = vrot.lane.b32.xlu0 %v66, 30
  %v504 = vpop.permute.xlu0 %503
  %505 = vrot.lane.b32.xlu0 %v83, 30
  %v506 = vpop.permute.xlu0 %505
  %v507 = vrot.slane %v500, 4
  %v508 = vrot.slane %v502, 4
  %v509 = vrot.slane %v504, 4
  %v510 = vrot.slane %v506, 4
  %v511 = vsel %vm96, %v507, %v508
  %vm512 = vcmask 244736
  %v513 = vsel %vm512, %v500, %v511
  %v514 = vsel %vm512, %v502, %v508
  %v515 = vsel %vm96, %v509, %v510
  %v516 = vsel %vm512, %v504, %v515
  %v517 = vsel %vm512, %v506, %v510
  %522 = vst [vmem:[#allocation2 + $0x2d0] sm:$0xff] %v513
  %523 = vst [vmem:[#allocation2 + $0x2d8] sm:$0xf] %v514
  %524 = vst [vmem:[#allocation2 + $0x2e8] sm:$0xff] %v516
  %525 = vst [vmem:[#allocation2 + $0x2f0] sm:$0xf] %v517
  %526 = vrot.lane.b32.xlu0 %v64, 28
  %v527 = vpop.permute.xlu0 %526
  %528 = vrot.lane.b32.xlu0 %v82, 28
  %v529 = vpop.permute.xlu0 %528
  %530 = vrot.lane.b32.xlu0 %v66, 28
  %v531 = vpop.permute.xlu0 %530
  %532 = vrot.lane.b32.xlu0 %v83, 28
  %v533 = vpop.permute.xlu0 %532
  %v534 = vrot.slane %v527, 4
  %v535 = vrot.slane %v529, 4
  %v536 = vrot.slane %v531, 4
  %v537 = vrot.slane %v533, 4
  %v538 = vsel %vm96, %v534, %v535
  %vm539 = vcmask 228352
  %v540 = vsel %vm539, %v527, %v538
  %v541 = vsel %vm539, %v529, %v535
  %v542 = vsel %vm96, %v536, %v537
  %v543 = vsel %vm539, %v531, %v542
  %v544 = vsel %vm539, %v533, %v537
  %549 = vst [vmem:[#allocation2 + $0x300] sm:$0xff] %v540
  %550 = vst [vmem:[#allocation2 + $0x308] sm:$0xf] %v541
  %551 = vst [vmem:[#allocation2 + $0x318] sm:$0xff] %v543
  %552 = vst [vmem:[#allocation2 + $0x320] sm:$0xf] %v544
  %553 = vrot.lane.b32.xlu0 %v171, 26
  %v554 = vpop.permute.xlu0 %553
  %555 = vrot.lane.b32.xlu0 %v172, 26
  %v556 = vpop.permute.xlu0 %555
  %557 = vrot.lane.b32.xlu0 %v173, 26
  %v558 = vpop.permute.xlu0 %557
  %559 = vrot.lane.b32.xlu0 %v174, 26
  %v560 = vpop.permute.xlu0 %559
  %v561 = vrot.slane %v554, 4
  %v562 = vrot.slane %v556, 4
  %v563 = vrot.slane %v558, 4
  %v564 = vrot.slane %v560, 4
  %v565 = vsel %vm96, %v561, %v562
  %vm566 = vcmask 211968
  %v567 = vsel %vm566, %v554, %v565
  %v568 = vsel %vm566, %v556, %v562
  %v569 = vsel %vm96, %v563, %v564
  %v570 = vsel %vm566, %v558, %v569
  %v571 = vsel %vm566, %v560, %v564
  %576 = vst [vmem:[#allocation2 + $0x330] sm:$0xff] %v567
  %577 = vst [vmem:[#allocation2 + $0x338] sm:$0xf] %v568
  %578 = vst [vmem:[#allocation2 + $0x348] sm:$0xff] %v570
  %579 = vst [vmem:[#allocation2 + $0x350] sm:$0xf] %v571
  %580 = vrot.lane.b32.xlu0 %v64, 7
  %v581 = vpop.permute.xlu0 %580
  %582 = vrot.lane.b32.xlu0 %v82, 7
  %v583 = vpop.permute.xlu0 %582
  %584 = vrot.lane.b32.xlu0 %v66, 7
  %v585 = vpop.permute.xlu0 %584
  %586 = vrot.lane.b32.xlu0 %v83, 7
  %v587 = vpop.permute.xlu0 %586
  %v588 = vrot.slane %v581, 4
  %v589 = vrot.slane %v583, 4
  %v590 = vrot.slane %v585, 4
  %v591 = vrot.slane %v587, 4
  %v592 = vsel %vm96, %v588, %v589
  %vm593 = vcmask 56320
  %v594 = vsel %vm593, %v581, %v592
  %v595 = vsel %vm593, %v583, %v589
  %v596 = vsel %vm96, %v590, %v591
  %v597 = vsel %vm593, %v585, %v596
  %v598 = vsel %vm593, %v587, %v591
  %603 = vst [vmem:[#allocation2 + $0x360] sm:$0xff] %v594
  %604 = vst [vmem:[#allocation2 + $0x368] sm:$0xf] %v595
  %605 = vst [vmem:[#allocation2 + $0x378] sm:$0xff] %v597
  %606 = vst [vmem:[#allocation2 + $0x380] sm:$0xf] %v598
  %607 = vrot.lane.b32.xlu0 %v64, 5
  %v608 = vpop.permute.xlu0 %607
  %609 = vrot.lane.b32.xlu0 %v82, 5
  %v610 = vpop.permute.xlu0 %609
  %611 = vrot.lane.b32.xlu0 %v66, 5
  %v612 = vpop.permute.xlu0 %611
  %613 = vrot.lane.b32.xlu0 %v83, 5
  %v614 = vpop.permute.xlu0 %613
  %v615 = vrot.slane %v608, 4
  %v616 = vrot.slane %v610, 4
  %v617 = vrot.slane %v612, 4
  %v618 = vrot.slane %v614, 4
  %v619 = vsel %vm96, %v615, %v616
  %vm620 = vcmask 39936
  %v621 = vsel %vm620, %v608, %v619
  %v622 = vsel %vm620, %v610, %v616
  %v623 = vsel %vm96, %v617, %v618
  %v624 = vsel %vm620, %v612, %v623
  %v625 = vsel %vm620, %v614, %v618
  %630 = vst [vmem:[#allocation2 + $0x390] sm:$0xff] %v621
  %631 = vst [vmem:[#allocation2 + $0x398] sm:$0xf] %v622
  %632 = vst [vmem:[#allocation2 + $0x3a8] sm:$0xff] %v624
  %633 = vst [vmem:[#allocation2 + $0x3b0] sm:$0xf] %v625
  %634 = vrot.lane.b32.xlu0 %v64, 3
  %v635 = vpop.permute.xlu0 %634
  %636 = vrot.lane.b32.xlu0 %v82, 3
  %v637 = vpop.permute.xlu0 %636
  %638 = vrot.lane.b32.xlu0 %v66, 3
  %v639 = vpop.permute.xlu0 %638
  %640 = vrot.lane.b32.xlu0 %v83, 3
  %v641 = vpop.permute.xlu0 %640
  %v642 = vrot.slane %v635, 4
  %v643 = vrot.slane %v637, 4
  %v644 = vrot.slane %v639, 4
  %v645 = vrot.slane %v641, 4
  %v646 = vsel %vm96, %v642, %v643
  %vm647 = vcmask 23552
  %v648 = vsel %vm647, %v635, %v646
  %v649 = vsel %vm647, %v637, %v643
  %v650 = vsel %vm96, %v644, %v645
  %v651 = vsel %vm647, %v639, %v650
  %v652 = vsel %vm647, %v641, %v645
  %657 = vst [vmem:[#allocation2 + $0x3c0] sm:$0xff] %v648
  %658 = vst [vmem:[#allocation2 + $0x3c8] sm:$0xf] %v649
  %659 = vst [vmem:[#allocation2 + $0x3d8] sm:$0xff] %v651
  %660 = vst [vmem:[#allocation2 + $0x3e0] sm:$0xf] %v652
  %v662 = vunpack.c.l.b16 %v22
  %v663 = vpack.c.b16 %v662, %v662
  %664 = vrot.lane.b32.xlu0 %v29, 112
  %v665 = vpop.permute.xlu0 %664
  %666 = vrot.lane.b32.xlu0 %v30, 112
  %v667 = vpop.permute.xlu0 %666
  %668 = vrot.lane.b32.xlu0 %v32, 112
  %v669 = vpop.permute.xlu0 %668
  %670 = vrot.lane.b32.xlu0 %v663, 112
  %v671 = vpop.permute.xlu0 %670
  %vm672 = vcmask 916480
  %v673 = vsel %vm672, %v665, %v667
  %v674 = vsel %vm672, %v667, %v669
  %v675 = vsel %vm672, %v669, %v671
  %676 = vrot.lane.b32.xlu0 %v29, 111
  %v677 = vpop.permute.xlu0 %676
  %678 = vrot.lane.b32.xlu0 %v30, 111
  %v679 = vpop.permute.xlu0 %678
  %680 = vrot.lane.b32.xlu0 %v32, 111
  %v681 = vpop.permute.xlu0 %680
  %682 = vrot.lane.b32.xlu0 %v663, 111
  %v683 = vpop.permute.xlu0 %682
  %vm684 = vcmask 908288
  %v685 = vsel %vm684, %v677, %v679
  %v686 = vsel %vm684, %v679, %v681
  %v687 = vsel %vm684, %v681, %v683
  %v690 = vsel %vm45, %v673, %v685
  %v693 = vsel %vm45, %v674, %v686
  %v696 = vsel %vm45, %v675, %v687
  %v700 = vunpack.c.l.b16 %v690
  %v701 = vunpack.c.l.b16 %v693
  %v702 = vunpack.c.l.b16 %v696
  %v703 = vunpack.c.h.b16 %v690
  %v704 = vunpack.c.h.b16 %v693
  %v705 = vunpack.c.h.b16 %v696
  %v706 = vpack.c.b16 %v701, %v700
  %v707 = vpack.c.b16 %v702, %v702
  %v708 = vpack.c.b16 %v704, %v703
  %v709 = vpack.c.b16 %v705, %v705
  %714 = vst [vmem:[#allocation2 + $0x3f0] sm:$0xff] %v706
  %715 = vst [vmem:[#allocation2 + $0x3f8] sm:$0xf] %v707
  %716 = vst [vmem:[#allocation2 + $0x408] sm:$0xff] %v708
  %717 = vst [vmem:[#allocation2 + $0x410] sm:$0xf] %v709
  %718 = vrot.lane.b32.xlu0 %v663, 110
  %v719 = vpop.permute.xlu0 %718
  %v720 = vsel %vm147, %v146, %v719
  %721 = vrot.lane.b32.xlu0 %v29, 109
  %v722 = vpop.permute.xlu0 %721
  %723 = vrot.lane.b32.xlu0 %v30, 109
  %v724 = vpop.permute.xlu0 %723
  %725 = vrot.lane.b32.xlu0 %v32, 109
  %v726 = vpop.permute.xlu0 %725
  %727 = vrot.lane.b32.xlu0 %v663, 109
  %v728 = vpop.permute.xlu0 %727
  %vm729 = vcmask 891904
  %v730 = vsel %vm729, %v722, %v724
  %v731 = vsel %vm729, %v724, %v726
  %v732 = vsel %vm729, %v726, %v728
  %v734 = vsel %vm45, %v149, %v730
  %v736 = vsel %vm45, %v150, %v731
  %v739 = vsel %vm45, %v720, %v732
  %v743 = vunpack.c.l.b16 %v734
  %v744 = vunpack.c.l.b16 %v736
  %v745 = vunpack.c.l.b16 %v739
  %v746 = vunpack.c.h.b16 %v734
  %v747 = vunpack.c.h.b16 %v736
  %v748 = vunpack.c.h.b16 %v739
  %v749 = vpack.c.b16 %v744, %v743
  %v750 = vpack.c.b16 %v745, %v745
  %v751 = vpack.c.b16 %v747, %v746
  %v752 = vpack.c.b16 %v748, %v748
  %757 = vst [vmem:[#allocation2 + $0x420] sm:$0xff] %v749
  %758 = vst [vmem:[#allocation2 + $0x428] sm:$0xf] %v750
  %759 = vst [vmem:[#allocation2 + $0x438] sm:$0xff] %v751
  %760 = vst [vmem:[#allocation2 + $0x440] sm:$0xf] %v752
  %761 = vrot.lane.b32.xlu0 %v29, 108
  %v762 = vpop.permute.xlu0 %761
  %763 = vrot.lane.b32.xlu0 %v30, 108
  %v764 = vpop.permute.xlu0 %763
  %765 = vrot.lane.b32.xlu0 %v32, 108
  %v766 = vpop.permute.xlu0 %765
  %767 = vrot.lane.b32.xlu0 %v663, 108
  %v768 = vpop.permute.xlu0 %767
  %vm769 = vcmask 883712
  %v770 = vsel %vm769, %v762, %v764
  %v771 = vsel %vm769, %v764, %v766
  %v772 = vsel %vm769, %v766, %v768
  %773 = vrot.lane.b32.xlu0 %v29, 107
  %v774 = vpop.permute.xlu0 %773
  %775 = vrot.lane.b32.xlu0 %v30, 107
  %v776 = vpop.permute.xlu0 %775
  %777 = vrot.lane.b32.xlu0 %v32, 107
  %v778 = vpop.permute.xlu0 %777
  %779 = vrot.lane.b32.xlu0 %v663, 107
  %v780 = vpop.permute.xlu0 %779
  %vm781 = vcmask 875520
  %v782 = vsel %vm781, %v774, %v776
  %v783 = vsel %vm781, %v776, %v778
  %v784 = vsel %vm781, %v778, %v780
  %v787 = vsel %vm45, %v770, %v782
  %v790 = vsel %vm45, %v771, %v783
  %v793 = vsel %vm45, %v772, %v784
  %v797 = vunpack.c.l.b16 %v787
  %v798 = vunpack.c.l.b16 %v790
  %v799 = vunpack.c.l.b16 %v793
  %v800 = vunpack.c.h.b16 %v787
  %v801 = vunpack.c.h.b16 %v790
  %v802 = vunpack.c.h.b16 %v793
  %v803 = vpack.c.b16 %v798, %v797
  %v804 = vpack.c.b16 %v799, %v799
  %v805 = vpack.c.b16 %v801, %v800
  %v806 = vpack.c.b16 %v802, %v802
  %811 = vst [vmem:[#allocation2 + $0x450] sm:$0xff] %v803
  %812 = vst [vmem:[#allocation2 + $0x458] sm:$0xf] %v804
  %813 = vst [vmem:[#allocation2 + $0x468] sm:$0xff] %v805
  %814 = vst [vmem:[#allocation2 + $0x470] sm:$0xf] %v806
  %815 = vrot.lane.b32.xlu0 %v20, 106
  %v816 = vpop.permute.xlu0 %815
  %817 = vrot.lane.b32.xlu0 %v21, 106
  %v818 = vpop.permute.xlu0 %817
  %819 = vrot.lane.b32.xlu0 %v22, 106
  %v820 = vpop.permute.xlu0 %819
  %v821 = vrot.slane %v816, 4
  %v822 = vrot.slane %v818, 4
  %v823 = vsel %vm96, %v821, %v822
  %vm824 = vcmask 867328
  %v825 = vsel %vm824, %v823, %v818
  %v826 = vsel %vm824, %v822, %v820
  %829 = vst [vmem:[#allocation2 + $0x480] sm:$0xff] %v825
  %830 = vst [vmem:[#allocation2 + $0x488] sm:$0xf] %v826
  %s831 = scalar_lea.vmem %s0, 40
  %v832 = vld [vmem:[%s831] sm:$0xff]
  %v833 = vld [vmem:[%s831 + $0x8] sm:$0xff]
  %v834 = vld [vmem:[%s831 + $0x10] sm:$0xff]
  %v835 = vld [vmem:[%s831 + $0x18] sm:$0xff]
  %v836 = vld [vmem:[%s831 + $0x20] sm:$0xff]
  %v837 = vpack.c.bf16 %v833, %v832
  %v838 = vpack.c.bf16 %v835, %v834
  %v839 = vpack.c.bf16 %v836, %v836
  %v842 = vunpack.c.l.b16 %v837
  %v843 = vunpack.c.h.b16 %v837
  %v844 = vunpack.c.l.b16 %v838
  %v845 = vpack.c.b16 %v842, %v842
  %v846 = vpack.c.b16 %v843, %v843
  %v847 = vpack.c.b16 %v844, %v844
  %v848 = vunpack.c.h.b16 %v838
  %v849 = vpack.c.b16 %v848, %v848
  %850 = vrot.lane.b32.xlu0 %v845, 127
  %v851 = vpop.permute.xlu0 %850
  %852 = vrot.lane.b32.xlu0 %v846, 127
  %v853 = vpop.permute.xlu0 %852
  %854 = vrot.lane.b32.xlu0 %v847, 127
  %v855 = vpop.permute.xlu0 %854
  %856 = vrot.lane.b32.xlu0 %v849, 127
  %v857 = vpop.permute.xlu0 %856
  %v858 = vsel %vm41, %v851, %v853
  %v859 = vsel %vm41, %v853, %v855
  %v860 = vsel %vm41, %v855, %v857
  %v863 = vsel %vm45, %v845, %v858
  %v866 = vsel %vm45, %v846, %v859
  %v869 = vsel %vm45, %v847, %v860
  %v873 = vunpack.c.l.b16 %v863
  %v874 = vunpack.c.l.b16 %v866
  %v875 = vunpack.c.l.b16 %v869
  %v876 = vunpack.c.h.b16 %v863
  %v877 = vunpack.c.h.b16 %v866
  %v878 = vunpack.c.h.b16 %v869
  %v879 = vpack.c.b16 %v874, %v873
  %v880 = vpack.c.b16 %v875, %v875
  %v881 = vpack.c.b16 %v877, %v876
  %v882 = vpack.c.b16 %v878, %v878
  %887 = vst [vmem:[#allocation2 + $0xc] sm:$0xff] %v879
  %888 = vst [vmem:[#allocation2 + $0x14] sm:$0xf] %v880
  %889 = vst [vmem:[#allocation2 + $0x24] sm:$0xff] %v881
  %890 = vst [vmem:[#allocation2 + $0x2c] sm:$0xf] %v882
  %v893 = vsel %vm45, %v849, %v857
  %v895 = vunpack.c.l.b16 %v893
  %v896 = vunpack.c.h.b16 %v893
  %v897 = vpack.c.b16 %v895, %v875
  %v898 = vpack.c.b16 %v896, %v878
  %899 = vrot.lane.b32.xlu0 %v879, 126
  %v900 = vpop.permute.xlu0 %899
  %901 = vrot.lane.b32.xlu0 %v897, 126
  %v902 = vpop.permute.xlu0 %901
  %903 = vrot.lane.b32.xlu0 %v881, 126
  %v904 = vpop.permute.xlu0 %903
  %905 = vrot.lane.b32.xlu0 %v898, 126
  %v906 = vpop.permute.xlu0 %905
  %v907 = vrot.slane %v900, 4
  %v908 = vrot.slane %v902, 4
  %v909 = vrot.slane %v904, 4
  %v910 = vrot.slane %v906, 4
  %v911 = vsel %vm96, %v907, %v908
  %v912 = vsel %vm98, %v900, %v911
  %v913 = vsel %vm98, %v902, %v908
  %v914 = vsel %vm96, %v909, %v910
  %v915 = vsel %vm98, %v904, %v914
  %v916 = vsel %vm98, %v906, %v910
  %921 = vst [vmem:[#allocation2 + $0x3c] sm:$0xff] %v912
  %922 = vst [vmem:[#allocation2 + $0x44] sm:$0xf] %v913
  %923 = vst [vmem:[#allocation2 + $0x54] sm:$0xff] %v915
  %924 = vst [vmem:[#allocation2 + $0x5c] sm:$0xf] %v916
  %925 = vrot.lane.b32.xlu0 %v879, 124
  %v926 = vpop.permute.xlu0 %925
  %927 = vrot.lane.b32.xlu0 %v897, 124
  %v928 = vpop.permute.xlu0 %927
  %929 = vrot.lane.b32.xlu0 %v881, 124
  %v930 = vpop.permute.xlu0 %929
  %931 = vrot.lane.b32.xlu0 %v898, 124
  %v932 = vpop.permute.xlu0 %931
  %v933 = vrot.slane %v926, 4
  %v934 = vrot.slane %v928, 4
  %v935 = vrot.slane %v930, 4
  %v936 = vrot.slane %v932, 4
  %v937 = vsel %vm96, %v933, %v934
  %v938 = vsel %vm125, %v926, %v937
  %v939 = vsel %vm125, %v928, %v934
  %v940 = vsel %vm96, %v935, %v936
  %v941 = vsel %vm125, %v930, %v940
  %v942 = vsel %vm125, %v932, %v936
  %947 = vst [vmem:[#allocation2 + $0x6c] sm:$0xff] %v938
  %948 = vst [vmem:[#allocation2 + $0x74] sm:$0xf] %v939
  %949 = vst [vmem:[#allocation2 + $0x84] sm:$0xff] %v941
  %950 = vst [vmem:[#allocation2 + $0x8c] sm:$0xf] %v942
  %951 = vrot.lane.b32.xlu0 %v845, 110
  %v952 = vpop.permute.xlu0 %951
  %953 = vrot.lane.b32.xlu0 %v846, 110
  %v954 = vpop.permute.xlu0 %953
  %955 = vrot.lane.b32.xlu0 %v847, 110
  %v956 = vpop.permute.xlu0 %955
  %957 = vrot.lane.b32.xlu0 %v849, 110
  %v958 = vpop.permute.xlu0 %957
  %v959 = vsel %vm147, %v952, %v954
  %v960 = vsel %vm147, %v954, %v956
  %v961 = vsel %vm147, %v956, %v958
  %v963 = vsel %vm45, %v845, %v959
  %v965 = vsel %vm45, %v846, %v960
  %v967 = vsel %vm45, %v847, %v961
  %v969 = vsel %vm45, %v849, %v958
  %v974 = vunpack.c.l.b16 %v963
  %v975 = vunpack.c.l.b16 %v965
  %v976 = vunpack.c.l.b16 %v967
  %v977 = vunpack.c.l.b16 %v969
  %v978 = vunpack.c.h.b16 %v963
  %v979 = vunpack.c.h.b16 %v965
  %v980 = vunpack.c.h.b16 %v967
  %v981 = vunpack.c.h.b16 %v969
  %v982 = vpack.c.b16 %v975, %v974
  %v983 = vpack.c.b16 %v977, %v976
  %v984 = vpack.c.b16 %v979, %v978
  %v985 = vpack.c.b16 %v981, %v980
  %986 = vrot.lane.b32.xlu0 %v982, 122
  %v987 = vpop.permute.xlu0 %986
  %988 = vrot.lane.b32.xlu0 %v983, 122
  %v989 = vpop.permute.xlu0 %988
  %990 = vrot.lane.b32.xlu0 %v984, 122
  %v991 = vpop.permute.xlu0 %990
  %992 = vrot.lane.b32.xlu0 %v985, 122
  %v993 = vpop.permute.xlu0 %992
  %v994 = vrot.slane %v987, 4
  %v995 = vrot.slane %v989, 4
  %v996 = vrot.slane %v991, 4
  %v997 = vrot.slane %v993, 4
  %v998 = vsel %vm96, %v994, %v995
  %v999 = vsel %vm188, %v987, %v998
  %v1000 = vsel %vm188, %v989, %v995
  %v1001 = vsel %vm96, %v996, %v997
  %v1002 = vsel %vm188, %v991, %v1001
  %v1003 = vsel %vm188, %v993, %v997
  %1008 = vst [vmem:[#allocation2 + $0x9c] sm:$0xff] %v999
  %1009 = vst [vmem:[#allocation2 + $0xa4] sm:$0xf] %v1000
  %1010 = vst [vmem:[#allocation2 + $0xb4] sm:$0xff] %v1002
  %1011 = vst [vmem:[#allocation2 + $0xbc] sm:$0xf] %v1003
  %1012 = vrot.lane.b32.xlu0 %v879, 103
  %v1013 = vpop.permute.xlu0 %1012
  %1014 = vrot.lane.b32.xlu0 %v897, 103
  %v1015 = vpop.permute.xlu0 %1014
  %1016 = vrot.lane.b32.xlu0 %v881, 103
  %v1017 = vpop.permute.xlu0 %1016
  %1018 = vrot.lane.b32.xlu0 %v898, 103
  %v1019 = vpop.permute.xlu0 %1018
  %v1020 = vrot.slane %v1013, 4
  %v1021 = vrot.slane %v1015, 4
  %v1022 = vrot.slane %v1017, 4
  %v1023 = vrot.slane %v1019, 4
  %v1024 = vsel %vm96, %v1020, %v1021
  %v1025 = vsel %vm215, %v1013, %v1024
  %v1026 = vsel %vm215, %v1015, %v1021
  %v1027 = vsel %vm96, %v1022, %v1023
  %v1028 = vsel %vm215, %v1017, %v1027
  %v1029 = vsel %vm215, %v1019, %v1023
  %1034 = vst [vmem:[#allocation2 + $0xcc] sm:$0xff] %v1025
  %1035 = vst [vmem:[#allocation2 + $0xd4] sm:$0xf] %v1026
  %1036 = vst [vmem:[#allocation2 + $0xe4] sm:$0xff] %v1028
  %1037 = vst [vmem:[#allocation2 + $0xec] sm:$0xf] %v1029
  %1038 = vrot.lane.b32.xlu0 %v879, 101
  %v1039 = vpop.permute.xlu0 %1038
  %1040 = vrot.lane.b32.xlu0 %v897, 101
  %v1041 = vpop.permute.xlu0 %1040
  %1042 = vrot.lane.b32.xlu0 %v881, 101
  %v1043 = vpop.permute.xlu0 %1042
  %1044 = vrot.lane.b32.xlu0 %v898, 101
  %v1045 = vpop.permute.xlu0 %1044
  %v1046 = vrot.slane %v1039, 4
  %v1047 = vrot.slane %v1041, 4
  %v1048 = vrot.slane %v1043, 4
  %v1049 = vrot.slane %v1045, 4
  %v1050 = vsel %vm96, %v1046, %v1047
  %v1051 = vsel %vm242, %v1039, %v1050
  %v1052 = vsel %vm242, %v1041, %v1047
  %v1053 = vsel %vm96, %v1048, %v1049
  %v1054 = vsel %vm242, %v1043, %v1053
  %v1055 = vsel %vm242, %v1045, %v1049
  %1060 = vst [vmem:[#allocation2 + $0xfc] sm:$0xff] %v1051
  %1061 = vst [vmem:[#allocation2 + $0x104] sm:$0xf] %v1052
  %1062 = vst [vmem:[#allocation2 + $0x114] sm:$0xff] %v1054
  %1063 = vst [vmem:[#allocation2 + $0x11c] sm:$0xf] %v1055
  %1064 = vrot.lane.b32.xlu0 %v879, 99
  %v1065 = vpop.permute.xlu0 %1064
  %1066 = vrot.lane.b32.xlu0 %v897, 99
  %v1067 = vpop.permute.xlu0 %1066
  %1068 = vrot.lane.b32.xlu0 %v881, 99
  %v1069 = vpop.permute.xlu0 %1068
  %1070 = vrot.lane.b32.xlu0 %v898, 99
  %v1071 = vpop.permute.xlu0 %1070
  %v1072 = vrot.slane %v1065, 4
  %v1073 = vrot.slane %v1067, 4
  %v1074 = vrot.slane %v1069, 4
  %v1075 = vrot.slane %v1071, 4
  %v1076 = vsel %vm96, %v1072, %v1073
  %v1077 = vsel %vm269, %v1065, %v1076
  %v1078 = vsel %vm269, %v1067, %v1073
  %v1079 = vsel %vm96, %v1074, %v1075
  %v1080 = vsel %vm269, %v1069, %v1079
  %v1081 = vsel %vm269, %v1071, %v1075
  %1086 = vst [vmem:[#allocation2 + $0x12c] sm:$0xff] %v1077
  %1087 = vst [vmem:[#allocation2 + $0x134] sm:$0xf] %v1078
  %1088 = vst [vmem:[#allocation2 + $0x144] sm:$0xff] %v1080
  %1089 = vst [vmem:[#allocation2 + $0x14c] sm:$0xf] %v1081
  %1090 = vrot.lane.b32.xlu0 %v879, 80
  %v1091 = vpop.permute.xlu0 %1090
  %1092 = vrot.lane.b32.xlu0 %v897, 80
  %v1093 = vpop.permute.xlu0 %1092
  %1094 = vrot.lane.b32.xlu0 %v881, 80
  %v1095 = vpop.permute.xlu0 %1094
  %1096 = vrot.lane.b32.xlu0 %v898, 80
  %v1097 = vpop.permute.xlu0 %1096
  %v1098 = vrot.slane %v1091, 4
  %v1099 = vrot.slane %v1093, 4
  %v1100 = vrot.slane %v1095, 4
  %v1101 = vrot.slane %v1097, 4
  %v1102 = vsel %vm96, %v1098, %v1099
  %v1103 = vsel %vm296, %v1091, %v1102
  %v1104 = vsel %vm296, %v1093, %v1099
  %v1105 = vsel %vm96, %v1100, %v1101
  %v1106 = vsel %vm296, %v1095, %v1105
  %v1107 = vsel %vm296, %v1097, %v1101
  %1112 = vst [vmem:[#allocation2 + $0x15c] sm:$0xff] %v1103
  %1113 = vst [vmem:[#allocation2 + $0x164] sm:$0xf] %v1104
  %1114 = vst [vmem:[#allocation2 + $0x174] sm:$0xff] %v1106
  %1115 = vst [vmem:[#allocation2 + $0x17c] sm:$0xf] %v1107
  %1116 = vrot.lane.b32.xlu0 %v879, 78
  %v1117 = vpop.permute.xlu0 %1116
  %1118 = vrot.lane.b32.xlu0 %v897, 78
  %v1119 = vpop.permute.xlu0 %1118
  %1120 = vrot.lane.b32.xlu0 %v881, 78
  %v1121 = vpop.permute.xlu0 %1120
  %1122 = vrot.lane.b32.xlu0 %v898, 78
  %v1123 = vpop.permute.xlu0 %1122
  %v1124 = vrot.slane %v1117, 4
  %v1125 = vrot.slane %v1119, 4
  %v1126 = vrot.slane %v1121, 4
  %v1127 = vrot.slane %v1123, 4
  %v1128 = vsel %vm96, %v1124, %v1125
  %v1129 = vsel %vm323, %v1117, %v1128
  %v1130 = vsel %vm323, %v1119, %v1125
  %v1131 = vsel %vm96, %v1126, %v1127
  %v1132 = vsel %vm323, %v1121, %v1131
  %v1133 = vsel %vm323, %v1123, %v1127
  %1138 = vst [vmem:[#allocation2 + $0x18c] sm:$0xff] %v1129
  %1139 = vst [vmem:[#allocation2 + $0x194] sm:$0xf] %v1130
  %1140 = vst [vmem:[#allocation2 + $0x1a4] sm:$0xff] %v1132
  %1141 = vst [vmem:[#allocation2 + $0x1ac] sm:$0xf] %v1133
  %1142 = vrot.lane.b32.xlu0 %v879, 76
  %v1143 = vpop.permute.xlu0 %1142
  %1144 = vrot.lane.b32.xlu0 %v897, 76
  %v1145 = vpop.permute.xlu0 %1144
  %1146 = vrot.lane.b32.xlu0 %v881, 76
  %v1147 = vpop.permute.xlu0 %1146
  %1148 = vrot.lane.b32.xlu0 %v898, 76
  %v1149 = vpop.permute.xlu0 %1148
  %v1150 = vrot.slane %v1143, 4
  %v1151 = vrot.slane %v1145, 4
  %v1152 = vrot.slane %v1147, 4
  %v1153 = vrot.slane %v1149, 4
  %v1154 = vsel %vm96, %v1150, %v1151
  %v1155 = vsel %vm350, %v1143, %v1154
  %v1156 = vsel %vm350, %v1145, %v1151
  %v1157 = vsel %vm96, %v1152, %v1153
  %v1158 = vsel %vm350, %v1147, %v1157
  %v1159 = vsel %vm350, %v1149, %v1153
  %1164 = vst [vmem:[#allocation2 + $0x1bc] sm:$0xff] %v1155
  %1165 = vst [vmem:[#allocation2 + $0x1c4] sm:$0xf] %v1156
  %1166 = vst [vmem:[#allocation2 + $0x1d4] sm:$0xff] %v1158
  %1167 = vst [vmem:[#allocation2 + $0x1dc] sm:$0xf] %v1159
  %1168 = vrot.lane.b32.xlu0 %v982, 74
  %v1169 = vpop.permute.xlu0 %1168
  %1170 = vrot.lane.b32.xlu0 %v983, 74
  %v1171 = vpop.permute.xlu0 %1170
  %1172 = vrot.lane.b32.xlu0 %v984, 74
  %v1173 = vpop.permute.xlu0 %1172
  %1174 = vrot.lane.b32.xlu0 %v985, 74
  %v1175 = vpop.permute.xlu0 %1174
  %v1176 = vrot.slane %v1169, 4
  %v1177 = vrot.slane %v1171, 4
  %v1178 = vrot.slane %v1173, 4
  %v1179 = vrot.slane %v1175, 4
  %v1180 = vsel %vm96, %v1176, %v1177
  %v1181 = vsel %vm377, %v1169, %v1180
  %v1182 = vsel %vm377, %v1171, %v1177
  %v1183 = vsel %vm96, %v1178, %v1179
  %v1184 = vsel %vm377, %v1173, %v1183
  %v1185 = vsel %vm377, %v1175, %v1179
  %1190 = vst [vmem:[#allocation2 + $0x1ec] sm:$0xff] %v1181
  %1191 = vst [vmem:[#allocation2 + $0x1f4] sm:$0xf] %v1182
  %1192 = vst [vmem:[#allocation2 + $0x204] sm:$0xff] %v1184
  %1193 = vst [vmem:[#allocation2 + $0x20c] sm:$0xf] %v1185
  %1194 = vrot.lane.b32.xlu0 %v879, 55
  %v1195 = vpop.permute.xlu0 %1194
  %1196 = vrot.lane.b32.xlu0 %v897, 55
  %v1197 = vpop.permute.xlu0 %1196
  %1198 = vrot.lane.b32.xlu0 %v881, 55
  %v1199 = vpop.permute.xlu0 %1198
  %1200 = vrot.lane.b32.xlu0 %v898, 55
  %v1201 = vpop.permute.xlu0 %1200
  %v1202 = vrot.slane %v1195, 4
  %v1203 = vrot.slane %v1197, 4
  %v1204 = vrot.slane %v1199, 4
  %v1205 = vrot.slane %v1201, 4
  %v1206 = vsel %vm96, %v1202, %v1203
  %v1207 = vsel %vm404, %v1195, %v1206
  %v1208 = vsel %vm404, %v1197, %v1203
  %v1209 = vsel %vm96, %v1204, %v1205
  %v1210 = vsel %vm404, %v1199, %v1209
  %v1211 = vsel %vm404, %v1201, %v1205
  %1216 = vst [vmem:[#allocation2 + $0x21c] sm:$0xff] %v1207
  %1217 = vst [vmem:[#allocation2 + $0x224] sm:$0xf] %v1208
  %1218 = vst [vmem:[#allocation2 + $0x234] sm:$0xff] %v1210
  %1219 = vst [vmem:[#allocation2 + $0x23c] sm:$0xf] %v1211
  %1220 = vrot.lane.b32.xlu0 %v879, 53
  %v1221 = vpop.permute.xlu0 %1220
  %1222 = vrot.lane.b32.xlu0 %v897, 53
  %v1223 = vpop.permute.xlu0 %1222
  %1224 = vrot.lane.b32.xlu0 %v881, 53
  %v1225 = vpop.permute.xlu0 %1224
  %1226 = vrot.lane.b32.xlu0 %v898, 53
  %v1227 = vpop.permute.xlu0 %1226
  %v1228 = vrot.slane %v1221, 4
  %v1229 = vrot.slane %v1223, 4
  %v1230 = vrot.slane %v1225, 4
  %v1231 = vrot.slane %v1227, 4
  %v1232 = vsel %vm96, %v1228, %v1229
  %v1233 = vsel %vm431, %v1221, %v1232
  %v1234 = vsel %vm431, %v1223, %v1229
  %v1235 = vsel %vm96, %v1230, %v1231
  %v1236 = vsel %vm431, %v1225, %v1235
  %v1237 = vsel %vm431, %v1227, %v1231
  %1242 = vst [vmem:[#allocation2 + $0x24c] sm:$0xff] %v1233
  %1243 = vst [vmem:[#allocation2 + $0x254] sm:$0xf] %v1234
  %1244 = vst [vmem:[#allocation2 + $0x264] sm:$0xff] %v1236
  %1245 = vst [vmem:[#allocation2 + $0x26c] sm:$0xf] %v1237
  %1246 = vrot.lane.b32.xlu0 %v879, 51
  %v1247 = vpop.permute.xlu0 %1246
  %1248 = vrot.lane.b32.xlu0 %v897, 51
  %v1249 = vpop.permute.xlu0 %1248
  %1250 = vrot.lane.b32.xlu0 %v881, 51
  %v1251 = vpop.permute.xlu0 %1250
  %1252 = vrot.lane.b32.xlu0 %v898, 51
  %v1253 = vpop.permute.xlu0 %1252
  %v1254 = vrot.slane %v1247, 4
  %v1255 = vrot.slane %v1249, 4
  %v1256 = vrot.slane %v1251, 4
  %v1257 = vrot.slane %v1253, 4
  %v1258 = vsel %vm96, %v1254, %v1255
  %v1259 = vsel %vm458, %v1247, %v1258
  %v1260 = vsel %vm458, %v1249, %v1255
  %v1261 = vsel %vm96, %v1256, %v1257
  %v1262 = vsel %vm458, %v1251, %v1261
  %v1263 = vsel %vm458, %v1253, %v1257
  %1268 = vst [vmem:[#allocation2 + $0x27c] sm:$0xff] %v1259
  %1269 = vst [vmem:[#allocation2 + $0x284] sm:$0xf] %v1260
  %1270 = vst [vmem:[#allocation2 + $0x294] sm:$0xff] %v1262
  %1271 = vst [vmem:[#allocation2 + $0x29c] sm:$0xf] %v1263
  %1272 = vrot.lane.b32.xlu0 %v879, 32
  %v1273 = vpop.permute.xlu0 %1272
  %1274 = vrot.lane.b32.xlu0 %v897, 32
  %v1275 = vpop.permute.xlu0 %1274
  %1276 = vrot.lane.b32.xlu0 %v881, 32
  %v1277 = vpop.permute.xlu0 %1276
  %1278 = vrot.lane.b32.xlu0 %v898, 32
  %v1279 = vpop.permute.xlu0 %1278
  %v1280 = vrot.slane %v1273, 4
  %v1281 = vrot.slane %v1275, 4
  %v1282 = vrot.slane %v1277, 4
  %v1283 = vrot.slane %v1279, 4
  %v1284 = vsel %vm96, %v1280, %v1281
  %v1285 = vsel %vm485, %v1273, %v1284
  %v1286 = vsel %vm485, %v1275, %v1281
  %v1287 = vsel %vm96, %v1282, %v1283
  %v1288 = vsel %vm485, %v1277, %v1287
  %v1289 = vsel %vm485, %v1279, %v1283
  %1294 = vst [vmem:[#allocation2 + $0x2ac] sm:$0xff] %v1285
  %1295 = vst [vmem:[#allocation2 + $0x2b4] sm:$0xf] %v1286
  %1296 = vst [vmem:[#allocation2 + $0x2c4] sm:$0xff] %v1288
  %1297 = vst [vmem:[#allocation2 + $0x2cc] sm:$0xf] %v1289
  %1298 = vrot.lane.b32.xlu0 %v879, 30
  %v1299 = vpop.permute.xlu0 %1298
  %1300 = vrot.lane.b32.xlu0 %v897, 30
  %v1301 = vpop.permute.xlu0 %1300
  %1302 = vrot.lane.b32.xlu0 %v881, 30
  %v1303 = vpop.permute.xlu0 %1302
  %1304 = vrot.lane.b32.xlu0 %v898, 30
  %v1305 = vpop.permute.xlu0 %1304
  %v1306 = vrot.slane %v1299, 4
  %v1307 = vrot.slane %v1301, 4
  %v1308 = vrot.slane %v1303, 4
  %v1309 = vrot.slane %v1305, 4
  %v1310 = vsel %vm96, %v1306, %v1307
  %v1311 = vsel %vm512, %v1299, %v1310
  %v1312 = vsel %vm512, %v1301, %v1307
  %v1313 = vsel %vm96, %v1308, %v1309
  %v1314 = vsel %vm512, %v1303, %v1313
  %v1315 = vsel %vm512, %v1305, %v1309
  %1320 = vst [vmem:[#allocation2 + $0x2dc] sm:$0xff] %v1311
  %1321 = vst [vmem:[#allocation2 + $0x2e4] sm:$0xf] %v1312
  %1322 = vst [vmem:[#allocation2 + $0x2f4] sm:$0xff] %v1314
  %1323 = vst [vmem:[#allocation2 + $0x2fc] sm:$0xf] %v1315
  %1324 = vrot.lane.b32.xlu0 %v879, 28
  %v1325 = vpop.permute.xlu0 %1324
  %1326 = vrot.lane.b32.xlu0 %v897, 28
  %v1327 = vpop.permute.xlu0 %1326
  %1328 = vrot.lane.b32.xlu0 %v881, 28
  %v1329 = vpop.permute.xlu0 %1328
  %1330 = vrot.lane.b32.xlu0 %v898, 28
  %v1331 = vpop.permute.xlu0 %1330
  %v1332 = vrot.slane %v1325, 4
  %v1333 = vrot.slane %v1327, 4
  %v1334 = vrot.slane %v1329, 4
  %v1335 = vrot.slane %v1331, 4
  %v1336 = vsel %vm96, %v1332, %v1333
  %v1337 = vsel %vm539, %v1325, %v1336
  %v1338 = vsel %vm539, %v1327, %v1333
  %v1339 = vsel %vm96, %v1334, %v1335
  %v1340 = vsel %vm539, %v1329, %v1339
  %v1341 = vsel %vm539, %v1331, %v1335
  %1346 = vst [vmem:[#allocation2 + $0x30c] sm:$0xff] %v1337
  %1347 = vst [vmem:[#allocation2 + $0x314] sm:$0xf] %v1338
  %1348 = vst [vmem:[#allocation2 + $0x324] sm:$0xff] %v1340
  %1349 = vst [vmem:[#allocation2 + $0x32c] sm:$0xf] %v1341
  %1350 = vrot.lane.b32.xlu0 %v982, 26
  %v1351 = vpop.permute.xlu0 %1350
  %1352 = vrot.lane.b32.xlu0 %v983, 26
  %v1353 = vpop.permute.xlu0 %1352
  %1354 = vrot.lane.b32.xlu0 %v984, 26
  %v1355 = vpop.permute.xlu0 %1354
  %1356 = vrot.lane.b32.xlu0 %v985, 26
  %v1357 = vpop.permute.xlu0 %1356
  %v1358 = vrot.slane %v1351, 4
  %v1359 = vrot.slane %v1353, 4
  %v1360 = vrot.slane %v1355, 4
  %v1361 = vrot.slane %v1357, 4
  %v1362 = vsel %vm96, %v1358, %v1359
  %v1363 = vsel %vm566, %v1351, %v1362
  %v1364 = vsel %vm566, %v1353, %v1359
  %v1365 = vsel %vm96, %v1360, %v1361
  %v1366 = vsel %vm566, %v1355, %v1365
  %v1367 = vsel %vm566, %v1357, %v1361
  %1372 = vst [vmem:[#allocation2 + $0x33c] sm:$0xff] %v1363
  %1373 = vst [vmem:[#allocation2 + $0x344] sm:$0xf] %v1364
  %1374 = vst [vmem:[#allocation2 + $0x354] sm:$0xff] %v1366
  %1375 = vst [vmem:[#allocation2 + $0x35c] sm:$0xf] %v1367
  %1376 = vrot.lane.b32.xlu0 %v879, 7
  %v1377 = vpop.permute.xlu0 %1376
  %1378 = vrot.lane.b32.xlu0 %v897, 7
  %v1379 = vpop.permute.xlu0 %1378
  %1380 = vrot.lane.b32.xlu0 %v881, 7
  %v1381 = vpop.permute.xlu0 %1380
  %1382 = vrot.lane.b32.xlu0 %v898, 7
  %v1383 = vpop.permute.xlu0 %1382
  %v1384 = vrot.slane %v1377, 4
  %v1385 = vrot.slane %v1379, 4
  %v1386 = vrot.slane %v1381, 4
  %v1387 = vrot.slane %v1383, 4
  %v1388 = vsel %vm96, %v1384, %v1385
  %v1389 = vsel %vm593, %v1377, %v1388
  %v1390 = vsel %vm593, %v1379, %v1385
  %v1391 = vsel %vm96, %v1386, %v1387
  %v1392 = vsel %vm593, %v1381, %v1391
  %v1393 = vsel %vm593, %v1383, %v1387
  %1398 = vst [vmem:[#allocation2 + $0x36c] sm:$0xff] %v1389
  %1399 = vst [vmem:[#allocation2 + $0x374] sm:$0xf] %v1390
  %1400 = vst [vmem:[#allocation2 + $0x384] sm:$0xff] %v1392
  %1401 = vst [vmem:[#allocation2 + $0x38c] sm:$0xf] %v1393
  %1402 = vrot.lane.b32.xlu0 %v879, 5
  %v1403 = vpop.permute.xlu0 %1402
  %1404 = vrot.lane.b32.xlu0 %v897, 5
  %v1405 = vpop.permute.xlu0 %1404
  %1406 = vrot.lane.b32.xlu0 %v881, 5
  %v1407 = vpop.permute.xlu0 %1406
  %1408 = vrot.lane.b32.xlu0 %v898, 5
  %v1409 = vpop.permute.xlu0 %1408
  %v1410 = vrot.slane %v1403, 4
  %v1411 = vrot.slane %v1405, 4
  %v1412 = vrot.slane %v1407, 4
  %v1413 = vrot.slane %v1409, 4
  %v1414 = vsel %vm96, %v1410, %v1411
  %v1415 = vsel %vm620, %v1403, %v1414
  %v1416 = vsel %vm620, %v1405, %v1411
  %v1417 = vsel %vm96, %v1412, %v1413
  %v1418 = vsel %vm620, %v1407, %v1417
  %v1419 = vsel %vm620, %v1409, %v1413
  %1424 = vst [vmem:[#allocation2 + $0x39c] sm:$0xff] %v1415
  %1425 = vst [vmem:[#allocation2 + $0x3a4] sm:$0xf] %v1416
  %1426 = vst [vmem:[#allocation2 + $0x3b4] sm:$0xff] %v1418
  %1427 = vst [vmem:[#allocation2 + $0x3bc] sm:$0xf] %v1419
  %1428 = vrot.lane.b32.xlu0 %v879, 3
  %v1429 = vpop.permute.xlu0 %1428
  %1430 = vrot.lane.b32.xlu0 %v897, 3
  %v1431 = vpop.permute.xlu0 %1430
  %1432 = vrot.lane.b32.xlu0 %v881, 3
  %v1433 = vpop.permute.xlu0 %1432
  %1434 = vrot.lane.b32.xlu0 %v898, 3
  %v1435 = vpop.permute.xlu0 %1434
  %v1436 = vrot.slane %v1429, 4
  %v1437 = vrot.slane %v1431, 4
  %v1438 = vrot.slane %v1433, 4
  %v1439 = vrot.slane %v1435, 4
  %v1440 = vsel %vm96, %v1436, %v1437
  %v1441 = vsel %vm647, %v1429, %v1440
  %v1442 = vsel %vm647, %v1431, %v1437
  %v1443 = vsel %vm96, %v1438, %v1439
  %v1444 = vsel %vm647, %v1433, %v1443
  %v1445 = vsel %vm647, %v1435, %v1439
  %1450 = vst [vmem:[#allocation2 + $0x3cc] sm:$0xff] %v1441
  %1451 = vst [vmem:[#allocation2 + $0x3d4] sm:$0xf] %v1442
  %1452 = vst [vmem:[#allocation2 + $0x3e4] sm:$0xff] %v1444
  %1453 = vst [vmem:[#allocation2 + $0x3ec] sm:$0xf] %v1445
  %v1455 = vunpack.c.l.b16 %v839
  %v1456 = vpack.c.b16 %v1455, %v1455
  %1457 = vrot.lane.b32.xlu0 %v846, 112
  %v1458 = vpop.permute.xlu0 %1457
  %1459 = vrot.lane.b32.xlu0 %v847, 112
  %v1460 = vpop.permute.xlu0 %1459
  %1461 = vrot.lane.b32.xlu0 %v849, 112
  %v1462 = vpop.permute.xlu0 %1461
  %1463 = vrot.lane.b32.xlu0 %v1456, 112
  %v1464 = vpop.permute.xlu0 %1463
  %v1465 = vsel %vm672, %v1458, %v1460
  %v1466 = vsel %vm672, %v1460, %v1462
  %v1467 = vsel %vm672, %v1462, %v1464
  %1468 = vrot.lane.b32.xlu0 %v846, 111
  %v1469 = vpop.permute.xlu0 %1468
  %1470 = vrot.lane.b32.xlu0 %v847, 111
  %v1471 = vpop.permute.xlu0 %1470
  %1472 = vrot.lane.b32.xlu0 %v849, 111
  %v1473 = vpop.permute.xlu0 %1472
  %1474 = vrot.lane.b32.xlu0 %v1456, 111
  %v1475 = vpop.permute.xlu0 %1474
  %v1476 = vsel %vm684, %v1469, %v1471
  %v1477 = vsel %vm684, %v1471, %v1473
  %v1478 = vsel %vm684, %v1473, %v1475
  %v1481 = vsel %vm45, %v1465, %v1476
  %v1484 = vsel %vm45, %v1466, %v1477
  %v1487 = vsel %vm45, %v1467, %v1478
  %v1491 = vunpack.c.l.b16 %v1481
  %v1492 = vunpack.c.l.b16 %v1484
  %v1493 = vunpack.c.l.b16 %v1487
  %v1494 = vunpack.c.h.b16 %v1481
  %v1495 = vunpack.c.h.b16 %v1484
  %v1496 = vunpack.c.h.b16 %v1487
  %v1497 = vpack.c.b16 %v1492, %v1491
  %v1498 = vpack.c.b16 %v1493, %v1493
  %v1499 = vpack.c.b16 %v1495, %v1494
  %v1500 = vpack.c.b16 %v1496, %v1496
  %1505 = vst [vmem:[#allocation2 + $0x3fc] sm:$0xff] %v1497
  %1506 = vst [vmem:[#allocation2 + $0x404] sm:$0xf] %v1498
  %1507 = vst [vmem:[#allocation2 + $0x414] sm:$0xff] %v1499
  %1508 = vst [vmem:[#allocation2 + $0x41c] sm:$0xf] %v1500
  %1509 = vrot.lane.b32.xlu0 %v1456, 110
  %v1510 = vpop.permute.xlu0 %1509
  %v1511 = vsel %vm147, %v958, %v1510
  %1512 = vrot.lane.b32.xlu0 %v846, 109
  %v1513 = vpop.permute.xlu0 %1512
  %1514 = vrot.lane.b32.xlu0 %v847, 109
  %v1515 = vpop.permute.xlu0 %1514
  %1516 = vrot.lane.b32.xlu0 %v849, 109
  %v1517 = vpop.permute.xlu0 %1516
  %1518 = vrot.lane.b32.xlu0 %v1456, 109
  %v1519 = vpop.permute.xlu0 %1518
  %v1520 = vsel %vm729, %v1513, %v1515
  %v1521 = vsel %vm729, %v1515, %v1517
  %v1522 = vsel %vm729, %v1517, %v1519
  %v1524 = vsel %vm45, %v960, %v1520
  %v1526 = vsel %vm45, %v961, %v1521
  %v1529 = vsel %vm45, %v1511, %v1522
  %v1533 = vunpack.c.l.b16 %v1524
  %v1534 = vunpack.c.l.b16 %v1526
  %v1535 = vunpack.c.l.b16 %v1529
  %v1536 = vunpack.c.h.b16 %v1524
  %v1537 = vunpack.c.h.b16 %v1526
  %v1538 = vunpack.c.h.b16 %v1529
  %v1539 = vpack.c.b16 %v1534, %v1533
  %v1540 = vpack.c.b16 %v1535, %v1535
  %v1541 = vpack.c.b16 %v1537, %v1536
  %v1542 = vpack.c.b16 %v1538, %v1538
  %1547 = vst [vmem:[#allocation2 + $0x42c] sm:$0xff] %v1539
  %1548 = vst [vmem:[#allocation2 + $0x434] sm:$0xf] %v1540
  %1549 = vst [vmem:[#allocation2 + $0x444] sm:$0xff] %v1541
  %1550 = vst [vmem:[#allocation2 + $0x44c] sm:$0xf] %v1542
  %1551 = vrot.lane.b32.xlu0 %v846, 108
  %v1552 = vpop.permute.xlu0 %1551
  %1553 = vrot.lane.b32.xlu0 %v847, 108
  %v1554 = vpop.permute.xlu0 %1553
  %1555 = vrot.lane.b32.xlu0 %v849, 108
  %v1556 = vpop.permute.xlu0 %1555
  %1557 = vrot.lane.b32.xlu0 %v1456, 108
  %v1558 = vpop.permute.xlu0 %1557
  %v1559 = vsel %vm769, %v1552, %v1554
  %v1560 = vsel %vm769, %v1554, %v1556
  %v1561 = vsel %vm769, %v1556, %v1558
  %1562 = vrot.lane.b32.xlu0 %v846, 107
  %v1563 = vpop.permute.xlu0 %1562
  %1564 = vrot.lane.b32.xlu0 %v847, 107
  %v1565 = vpop.permute.xlu0 %1564
  %1566 = vrot.lane.b32.xlu0 %v849, 107
  %v1567 = vpop.permute.xlu0 %1566
  %1568 = vrot.lane.b32.xlu0 %v1456, 107
  %v1569 = vpop.permute.xlu0 %1568
  %v1570 = vsel %vm781, %v1563, %v1565
  %v1571 = vsel %vm781, %v1565, %v1567
  %v1572 = vsel %vm781, %v1567, %v1569
  %v1575 = vsel %vm45, %v1559, %v1570
  %v1578 = vsel %vm45, %v1560, %v1571
  %v1581 = vsel %vm45, %v1561, %v1572
  %v1585 = vunpack.c.l.b16 %v1575
  %v1586 = vunpack.c.l.b16 %v1578
  %v1587 = vunpack.c.l.b16 %v1581
  %v1588 = vunpack.c.h.b16 %v1575
  %v1589 = vunpack.c.h.b16 %v1578
  %v1590 = vunpack.c.h.b16 %v1581
  %v1591 = vpack.c.b16 %v1586, %v1585
  %v1592 = vpack.c.b16 %v1587, %v1587
  %v1593 = vpack.c.b16 %v1589, %v1588
  %v1594 = vpack.c.b16 %v1590, %v1590
  %1599 = vst [vmem:[#allocation2 + $0x45c] sm:$0xff] %v1591
  %1600 = vst [vmem:[#allocation2 + $0x464] sm:$0xf] %v1592
  %1601 = vst [vmem:[#allocation2 + $0x474] sm:$0xff] %v1593
  %1602 = vst [vmem:[#allocation2 + $0x47c] sm:$0xf] %v1594
  %1603 = vrot.lane.b32.xlu0 %v837, 106
  %v1604 = vpop.permute.xlu0 %1603
  %1605 = vrot.lane.b32.xlu0 %v838, 106
  %v1606 = vpop.permute.xlu0 %1605
  %1607 = vrot.lane.b32.xlu0 %v839, 106
  %v1608 = vpop.permute.xlu0 %1607
  %v1609 = vrot.slane %v1604, 4
  %v1610 = vrot.slane %v1606, 4
  %v1611 = vsel %vm96, %v1609, %v1610
  %v1612 = vsel %vm824, %v1611, %v1606
  %v1613 = vsel %vm824, %v1610, %v1608
  %1616 = vst [vmem:[#allocation2 + $0x48c] sm:$0xff] %v1612
  %1617 = vst [vmem:[#allocation2 + $0x494] sm:$0xf] %v1613
  %v1618 = vld [vmem:[%s1] sm:$0xff]
  %v1619 = vld [vmem:[%s1 + $0x8] sm:$0xff]
  %v1620 = vld [vmem:[%s1 + $0x10] sm:$0xff]
  %v1621 = vld [vmem:[%s1 + $0x18] sm:$0xff]
  %v1622 = vld [vmem:[#allocation2] sm:$0xff]
  %v1623 = vld [vmem:[#allocation2 + $0x8] sm:$0xff]
  %v1624 = vld [vmem:[#allocation2 + $0x10] sm:$0xff]
  %v1625 = vld [vmem:[#allocation2 + $0x18] sm:$0xff]
  %v1626 = vld [vmem:[#allocation2 + $0x20] sm:$0xff]
  %v1627 = vld [vmem:[#allocation2 + $0x28] sm:$0xff]
  %v1628 = vld [vmem:[#allocation2 + $0x30] sm:$0xff]
  %v1629 = vld [vmem:[#allocation2 + $0x38] sm:$0xff]
  %v1630 = vld [vmem:[#allocation2 + $0x40] sm:$0xff]
  %v1631 = vld [vmem:[#allocation2 + $0x48] sm:$0xff]
  %v1632 = vld [vmem:[#allocation2 + $0x50] sm:$0xff]
  %v1633 = vld [vmem:[#allocation2 + $0x58] sm:$0xff]
  %v1634 = vld [vmem:[#allocation2 + $0x60] sm:$0xff]
  %v1635 = vld [vmem:[#allocation2 + $0x68] sm:$0xff]
  %v1636 = vld [vmem:[#allocation2 + $0x70] sm:$0xff]
  %v1637 = vld [vmem:[#allocation2 + $0x78] sm:$0xff]
  %v1638 = vld [vmem:[#allocation2 + $0x80] sm:$0xff]
  %v1639 = vld [vmem:[#allocation2 + $0x88] sm:$0xff]
  %v1640 = vld [vmem:[#allocation2 + $0x90] sm:$0xff]
  %v1641 = vld [vmem:[#allocation2 + $0x98] sm:$0xff]
  %v1642 = vld [vmem:[#allocation2 + $0xa0] sm:$0xff]
  %v1643 = vld [vmem:[#allocation2 + $0xa8] sm:$0xff]
  %v1644 = vld [vmem:[#allocation2 + $0xb0] sm:$0xff]
  %v1645 = vld [vmem:[#allocation2 + $0xb8] sm:$0xff]
  %v1646 = vld [vmem:[#allocation2 + $0xc0] sm:$0xff]
  %v1647 = vld [vmem:[#allocation2 + $0xc8] sm:$0xff]
  %v1648 = vld [vmem:[#allocation2 + $0xd0] sm:$0xff]
  %v1649 = vld [vmem:[#allocation2 + $0xd8] sm:$0xff]
  %v1650 = vld [vmem:[#allocation2 + $0xe0] sm:$0xff]
  %v1651 = vld [vmem:[#allocation2 + $0xe8] sm:$0xff]
  %v1652 = vld [vmem:[#allocation2 + $0xf0] sm:$0xff]
  %v1653 = vld [vmem:[#allocation2 + $0xf8] sm:$0xff]
  %v1654 = vld [vmem:[#allocation2 + $0x100] sm:$0xff]
  %v1655 = vld [vmem:[#allocation2 + $0x108] sm:$0xff]
  %v1656 = vld [vmem:[#allocation2 + $0x110] sm:$0xff]
  %v1657 = vld [vmem:[#allocation2 + $0x118] sm:$0xff]
  %v1658 = vld [vmem:[#allocation2 + $0x120] sm:$0xff]
  %v1659 = vld [vmem:[#allocation2 + $0x128] sm:$0xff]
  %v1660 = vld [vmem:[#allocation2 + $0x130] sm:$0xff]
  %v1661 = vld [vmem:[#allocation2 + $0x138] sm:$0xff]
  %v1662 = vld [vmem:[#allocation2 + $0x140] sm:$0xff]
  %v1663 = vld [vmem:[#allocation2 + $0x148] sm:$0xff]
  %v1664 = vld [vmem:[#allocation2 + $0x150] sm:$0xff]
  %v1665 = vld [vmem:[#allocation2 + $0x158] sm:$0xff]
  %v1666 = vld [vmem:[#allocation2 + $0x160] sm:$0xff]
  %v1667 = vld [vmem:[#allocation2 + $0x168] sm:$0xff]
  %v1668 = vld [vmem:[#allocation2 + $0x170] sm:$0xff]
  %v1669 = vld [vmem:[#allocation2 + $0x178] sm:$0xff]
  %v1670 = vld [vmem:[#allocation2 + $0x180] sm:$0xff]
  %v1671 = vld [vmem:[#allocation2 + $0x188] sm:$0xff]
  %v1672 = vld [vmem:[#allocation2 + $0x190] sm:$0xff]
  %v1673 = vld [vmem:[#allocation2 + $0x198] sm:$0xff]
  %v1674 = vld [vmem:[#allocation2 + $0x1a0] sm:$0xff]
  %v1675 = vld [vmem:[#allocation2 + $0x1a8] sm:$0xff]
  %v1676 = vld [vmem:[#allocation2 + $0x1b0] sm:$0xff]
  %v1677 = vld [vmem:[#allocation2 + $0x1b8] sm:$0xff]
  %v1678 = vld [vmem:[#allocation2 + $0x1c0] sm:$0xff]
  %v1679 = vld [vmem:[#allocation2 + $0x1c8] sm:$0xff]
  %v1680 = vld [vmem:[#allocation2 + $0x1d0] sm:$0xff]
  %v1681 = vld [vmem:[#allocation2 + $0x1d8] sm:$0xff]
  %v1682 = vld [vmem:[#allocation2 + $0x1e0] sm:$0xff]
  %v1683 = vld [vmem:[#allocation2 + $0x1e8] sm:$0xff]
  %v1684 = vld [vmem:[#allocation2 + $0x1f0] sm:$0xff]
  %v1685 = vld [vmem:[#allocation2 + $0x1f8] sm:$0xff]
  %v1686 = vld [vmem:[#allocation2 + $0x200] sm:$0xff]
  %v1687 = vld [vmem:[#allocation2 + $0x208] sm:$0xff]
  %v1688 = vld [vmem:[#allocation2 + $0x210] sm:$0xff]
  %v1689 = vld [vmem:[#allocation2 + $0x218] sm:$0xff]
  %v1690 = vld [vmem:[#allocation2 + $0x220] sm:$0xff]
  %v1691 = vld [vmem:[#allocation2 + $0x228] sm:$0xff]
  %v1692 = vld [vmem:[#allocation2 + $0x230] sm:$0xff]
  %v1693 = vld [vmem:[#allocation2 + $0x238] sm:$0xff]
  %v1694 = vld [vmem:[#allocation2 + $0x240] sm:$0xff]
  %v1695 = vld [vmem:[#allocation2 + $0x248] sm:$0xff]
  %v1696 = vld [vmem:[#allocation2 + $0x250] sm:$0xff]
  %v1697 = vld [vmem:[#allocation2 + $0x258] sm:$0xff]
  %v1698 = vld [vmem:[#allocation2 + $0x260] sm:$0xff]
  %v1699 = vld [vmem:[#allocation2 + $0x268] sm:$0xff]
  %v1700 = vld [vmem:[#allocation2 + $0x270] sm:$0xff]
  %v1701 = vld [vmem:[#allocation2 + $0x278] sm:$0xff]
  %v1702 = vld [vmem:[#allocation2 + $0x280] sm:$0xff]
  %v1703 = vld [vmem:[#allocation2 + $0x288] sm:$0xff]
  %v1704 = vld [vmem:[#allocation2 + $0x290] sm:$0xff]
  %v1705 = vld [vmem:[#allocation2 + $0x298] sm:$0xff]
  %v1706 = vld [vmem:[#allocation2 + $0x2a0] sm:$0xff]
  %v1707 = vld [vmem:[#allocation2 + $0x2a8] sm:$0xff]
  %v1708 = vld [vmem:[#allocation2 + $0x2b0] sm:$0xff]
  %v1709 = vld [vmem:[#allocation2 + $0x2b8] sm:$0xff]
  %v1710 = vld [vmem:[#allocation2 + $0x2c0] sm:$0xff]
  %v1711 = vld [vmem:[#allocation2 + $0x2c8] sm:$0xff]
  %v1712 = vld [vmem:[#allocation2 + $0x2d0] sm:$0xff]
  %v1713 = vld [vmem:[#allocation2 + $0x2d8] sm:$0xff]
  %v1714 = vld [vmem:[#allocation2 + $0x2e0] sm:$0xff]
  %v1715 = vld [vmem:[#allocation2 + $0x2e8] sm:$0xff]
  %v1716 = vld [vmem:[#allocation2 + $0x2f0] sm:$0xff]
  %v1717 = vld [vmem:[#allocation2 + $0x2f8] sm:$0xff]
  %v1718 = vld [vmem:[#allocation2 + $0x300] sm:$0xff]
  %v1719 = vld [vmem:[#allocation2 + $0x308] sm:$0xff]
  %v1720 = vld [vmem:[#allocation2 + $0x310] sm:$0xff]
  %v1721 = vld [vmem:[#allocation2 + $0x318] sm:$0xff]
  %v1722 = vld [vmem:[#allocation2 + $0x320] sm:$0xff]
  %v1723 = vld [vmem:[#allocation2 + $0x328] sm:$0xff]
  %v1724 = vld [vmem:[#allocation2 + $0x330] sm:$0xff]
  %v1725 = vld [vmem:[#allocation2 + $0x338] sm:$0xff]
  %v1726 = vld [vmem:[#allocation2 + $0x340] sm:$0xff]
  %v1727 = vld [vmem:[#allocation2 + $0x348] sm:$0xff]
  %v1728 = vld [vmem:[#allocation2 + $0x350] sm:$0xff]
  %v1729 = vld [vmem:[#allocation2 + $0x358] sm:$0xff]
  %v1730 = vld [vmem:[#allocation2 + $0x360] sm:$0xff]
  %v1731 = vld [vmem:[#allocation2 + $0x368] sm:$0xff]
  %v1732 = vld [vmem:[#allocation2 + $0x370] sm:$0xff]
  %v1733 = vld [vmem:[#allocation2 + $0x378] sm:$0xff]
  %v1734 = vld [vmem:[#allocation2 + $0x380] sm:$0xff]
  %v1735 = vld [vmem:[#allocation2 + $0x388] sm:$0xff]
  %v1736 = vld [vmem:[#allocation2 + $0x390] sm:$0xff]
  %v1737 = vld [vmem:[#allocation2 + $0x398] sm:$0xff]
  %v1738 = vld [vmem:[#allocation2 + $0x3a0] sm:$0xff]
  %v1739 = vld [vmem:[#allocation2 + $0x3a8] sm:$0xff]
  %v1740 = vld [vmem:[#allocation2 + $0x3b0] sm:$0xff]
  %v1741 = vld [vmem:[#allocation2 + $0x3b8] sm:$0xff]
  %v1742 = vld [vmem:[#allocation2 + $0x3c0] sm:$0xff]
  %v1743 = vld [vmem:[#allocation2 + $0x3c8] sm:$0xff]
  %v1744 = vld [vmem:[#allocation2 + $0x3d0] sm:$0xff]
  %v1745 = vld [vmem:[#allocation2 + $0x3d8] sm:$0xff]
  %v1746 = vld [vmem:[#allocation2 + $0x3e0] sm:$0xff]
  %v1747 = vld [vmem:[#allocation2 + $0x3e8] sm:$0xff]
  %v1748 = vld [vmem:[#allocation2 + $0x3f0] sm:$0xff]
  %v1749 = vld [vmem:[#allocation2 + $0x3f8] sm:$0xff]
  %v1750 = vld [vmem:[#allocation2 + $0x400] sm:$0xff]
  %v1751 = vld [vmem:[#allocation2 + $0x408] sm:$0xff]
  %v1752 = vld [vmem:[#allocation2 + $0x410] sm:$0xff]
  %v1753 = vld [vmem:[#allocation2 + $0x418] sm:$0xff]
  %v1754 = vld [vmem:[#allocation2 + $0x420] sm:$0xff]
  %v1755 = vld [vmem:[#allocation2 + $0x428] sm:$0xff]
  %v1756 = vld [vmem:[#allocation2 + $0x430] sm:$0xff]
  %v1757 = vld [vmem:[#allocation2 + $0x438] sm:$0xff]
  %v1758 = vld [vmem:[#allocation2 + $0x440] sm:$0xff]
  %v1759 = vld [vmem:[#allocation2 + $0x448] sm:$0xff]
  %v1760 = vld [vmem:[#allocation2 + $0x450] sm:$0xff]
  %v1761 = vld [vmem:[#allocation2 + $0x458] sm:$0xff]
  %v1762 = vld [vmem:[#allocation2 + $0x460] sm:$0xff]
  %v1763 = vld [vmem:[#allocation2 + $0x468] sm:$0xff]
  %v1764 = vld [vmem:[#allocation2 + $0x470] sm:$0xff]
  %v1765 = vld [vmem:[#allocation2 + $0x478] sm:$0xff]
  %v1766 = vld [vmem:[#allocation2 + $0x480] sm:$0xff]
  %v1767 = vld [vmem:[#allocation2 + $0x488] sm:$0xff]
  %v1768 = vld [vmem:[#allocation2 + $0x490] sm:$0xff]
  %v1769 = vld [vmem:[%s2] sm:$0xff]
  %v1770 = vld [vmem:[%s2 + $0x8] sm:$0xff]
  %1772 = vset.pattern.permute.xlu0 0
  %1773 = vperm.xlu0 %1772, %v1769
  %v1774 = vpop.permute.xlu0 %1773
  %1777 = vset.pattern.permute.xlu0 0
  %1778 = vperm.xlu0 %1777, %v1770
  %v1779 = vpop.permute.xlu0 %1778
  %v1785 = vunpack.c.l.b16 %v1618
  %v1786 = vunpack.c.h.b16 %v1618
  %v1787 = vunpack.c.l.b16 %v1619
  %v1788 = vunpack.c.h.b16 %v1619
  %v1789 = vunpack.c.l.b16 %v1620
  %v1790 = vunpack.c.h.b16 %v1620
  %v1791 = vunpack.c.l.b16 %v1621
  %v1792 = vunpack.c.h.b16 %v1621
  %v1793 = vpack.c.b16 %v1789, %v1785
  %v1794 = vpack.c.b16 %v1790, %v1786
  %v1795 = vpack.c.b16 %v1791, %v1787
  %v1796 = vpack.c.b16 %v1792, %v1788
  %v1947 = vunpack.c.l.b16 %v1622
  %v1948 = vunpack.c.h.b16 %v1622
  %v1949 = vunpack.c.l.b16 %v1623
  %v1950 = vunpack.c.h.b16 %v1623
  %v1951 = vunpack.c.l.b16 %v1624
  %v1952 = vunpack.c.h.b16 %v1624
  %v1953 = vunpack.c.l.b16 %v1625
  %v1954 = vunpack.c.h.b16 %v1625
  %v1955 = vunpack.c.l.b16 %v1626
  %v1956 = vunpack.c.h.b16 %v1626
  %v1957 = vunpack.c.l.b16 %v1627
  %v1958 = vunpack.c.h.b16 %v1627
  %v1959 = vunpack.c.l.b16 %v1628
  %v1960 = vunpack.c.h.b16 %v1628
  %v1961 = vunpack.c.l.b16 %v1629
  %v1962 = vunpack.c.h.b16 %v1629
  %v1963 = vunpack.c.l.b16 %v1630
  %v1964 = vunpack.c.h.b16 %v1630
  %v1965 = vunpack.c.l.b16 %v1631
  %v1966 = vunpack.c.h.b16 %v1631
  %v1967 = vunpack.c.l.b16 %v1632
  %v1968 = vunpack.c.h.b16 %v1632
  %v1969 = vunpack.c.l.b16 %v1633
  %v1970 = vunpack.c.h.b16 %v1633
  %v1971 = vunpack.c.l.b16 %v1634
  %v1972 = vunpack.c.h.b16 %v1634
  %v1973 = vunpack.c.l.b16 %v1635
  %v1974 = vunpack.c.h.b16 %v1635
  %v1975 = vunpack.c.l.b16 %v1636
  %v1976 = vunpack.c.h.b16 %v1636
  %v1977 = vunpack.c.l.b16 %v1637
  %v1978 = vunpack.c.h.b16 %v1637
  %v1979 = vunpack.c.l.b16 %v1638
  %v1980 = vunpack.c.h.b16 %v1638
  %v1981 = vunpack.c.l.b16 %v1639
  %v1982 = vunpack.c.h.b16 %v1639
  %v1983 = vunpack.c.l.b16 %v1640
  %v1984 = vunpack.c.h.b16 %v1640
  %v1985 = vunpack.c.l.b16 %v1641
  %v1986 = vunpack.c.h.b16 %v1641
  %v1987 = vunpack.c.l.b16 %v1642
  %v1988 = vunpack.c.h.b16 %v1642
  %v1989 = vunpack.c.l.b16 %v1643
  %v1990 = vunpack.c.h.b16 %v1643
  %v1991 = vunpack.c.l.b16 %v1644
  %v1992 = vunpack.c.h.b16 %v1644
  %v1993 = vunpack.c.l.b16 %v1645
  %v1994 = vunpack.c.h.b16 %v1645
  %v1995 = vunpack.c.l.b16 %v1646
  %v1996 = vunpack.c.h.b16 %v1646
  %v1997 = vunpack.c.l.b16 %v1647
  %v1998 = vunpack.c.h.b16 %v1647
  %v1999 = vunpack.c.l.b16 %v1648
  %v2000 = vunpack.c.h.b16 %v1648
  %v2001 = vunpack.c.l.b16 %v1649
  %v2002 = vunpack.c.h.b16 %v1649
  %v2003 = vunpack.c.l.b16 %v1650
  %v2004 = vunpack.c.h.b16 %v1650
  %v2005 = vunpack.c.l.b16 %v1651
  %v2006 = vunpack.c.h.b16 %v1651
  %v2007 = vunpack.c.l.b16 %v1652
  %v2008 = vunpack.c.h.b16 %v1652
  %v2009 = vunpack.c.l.b16 %v1653
  %v2010 = vunpack.c.h.b16 %v1653
  %v2011 = vunpack.c.l.b16 %v1654
  %v2012 = vunpack.c.h.b16 %v1654
  %v2013 = vunpack.c.l.b16 %v1655
  %v2014 = vunpack.c.h.b16 %v1655
  %v2015 = vunpack.c.l.b16 %v1656
  %v2016 = vunpack.c.h.b16 %v1656
  %v2017 = vunpack.c.l.b16 %v1657
  %v2018 = vunpack.c.h.b16 %v1657
  %v2019 = vunpack.c.l.b16 %v1658
  %v2020 = vunpack.c.h.b16 %v1658
  %v2021 = vunpack.c.l.b16 %v1659
  %v2022 = vunpack.c.h.b16 %v1659
  %v2023 = vunpack.c.l.b16 %v1660
  %v2024 = vunpack.c.h.b16 %v1660
  %v2025 = vunpack.c.l.b16 %v1661
  %v2026 = vunpack.c.h.b16 %v1661
  %v2027 = vunpack.c.l.b16 %v1662
  %v2028 = vunpack.c.h.b16 %v1662
  %v2029 = vunpack.c.l.b16 %v1663
  %v2030 = vunpack.c.h.b16 %v1663
  %v2031 = vunpack.c.l.b16 %v1664
  %v2032 = vunpack.c.h.b16 %v1664
  %v2033 = vunpack.c.l.b16 %v1665
  %v2034 = vunpack.c.h.b16 %v1665
  %v2035 = vunpack.c.l.b16 %v1666
  %v2036 = vunpack.c.h.b16 %v1666
  %v2037 = vunpack.c.l.b16 %v1667
  %v2038 = vunpack.c.h.b16 %v1667
  %v2039 = vunpack.c.l.b16 %v1668
  %v2040 = vunpack.c.h.b16 %v1668
  %v2041 = vunpack.c.l.b16 %v1669
  %v2042 = vunpack.c.h.b16 %v1669
  %v2043 = vunpack.c.l.b16 %v1670
  %v2044 = vunpack.c.h.b16 %v1670
  %v2045 = vunpack.c.l.b16 %v1671
  %v2046 = vunpack.c.h.b16 %v1671
  %v2047 = vunpack.c.l.b16 %v1672
  %v2048 = vunpack.c.h.b16 %v1672
  %v2049 = vunpack.c.l.b16 %v1673
  %v2050 = vunpack.c.h.b16 %v1673
  %v2051 = vunpack.c.l.b16 %v1674
  %v2052 = vunpack.c.h.b16 %v1674
  %v2053 = vunpack.c.l.b16 %v1675
  %v2054 = vunpack.c.h.b16 %v1675
  %v2055 = vunpack.c.l.b16 %v1676
  %v2056 = vunpack.c.h.b16 %v1676
  %v2057 = vunpack.c.l.b16 %v1677
  %v2058 = vunpack.c.h.b16 %v1677
  %v2059 = vunpack.c.l.b16 %v1678
  %v2060 = vunpack.c.h.b16 %v1678
  %v2061 = vunpack.c.l.b16 %v1679
  %v2062 = vunpack.c.h.b16 %v1679
  %v2063 = vunpack.c.l.b16 %v1680
  %v2064 = vunpack.c.h.b16 %v1680
  %v2065 = vunpack.c.l.b16 %v1681
  %v2066 = vunpack.c.h.b16 %v1681
  %v2067 = vunpack.c.l.b16 %v1682
  %v2068 = vunpack.c.h.b16 %v1682
  %v2069 = vunpack.c.l.b16 %v1683
  %v2070 = vunpack.c.h.b16 %v1683
  %v2071 = vunpack.c.l.b16 %v1684
  %v2072 = vunpack.c.h.b16 %v1684
  %v2073 = vunpack.c.l.b16 %v1685
  %v2074 = vunpack.c.h.b16 %v1685
  %v2075 = vunpack.c.l.b16 %v1686
  %v2076 = vunpack.c.h.b16 %v1686
  %v2077 = vunpack.c.l.b16 %v1687
  %v2078 = vunpack.c.h.b16 %v1687
  %v2079 = vunpack.c.l.b16 %v1688
  %v2080 = vunpack.c.h.b16 %v1688
  %v2081 = vunpack.c.l.b16 %v1689
  %v2082 = vunpack.c.h.b16 %v1689
  %v2083 = vunpack.c.l.b16 %v1690
  %v2084 = vunpack.c.h.b16 %v1690
  %v2085 = vunpack.c.l.b16 %v1691
  %v2086 = vunpack.c.h.b16 %v1691
  %v2087 = vunpack.c.l.b16 %v1692
  %v2088 = vunpack.c.h.b16 %v1692
  %v2089 = vunpack.c.l.b16 %v1693
  %v2090 = vunpack.c.h.b16 %v1693
  %v2091 = vunpack.c.l.b16 %v1694
  %v2092 = vunpack.c.h.b16 %v1694
  %v2093 = vunpack.c.l.b16 %v1695
  %v2094 = vunpack.c.h.b16 %v1695
  %v2095 = vunpack.c.l.b16 %v1696
  %v2096 = vunpack.c.h.b16 %v1696
  %v2097 = vunpack.c.l.b16 %v1697
  %v2098 = vunpack.c.h.b16 %v1697
  %v2099 = vunpack.c.l.b16 %v1698
  %v2100 = vunpack.c.h.b16 %v1698
  %v2101 = vunpack.c.l.b16 %v1699
  %v2102 = vunpack.c.h.b16 %v1699
  %v2103 = vunpack.c.l.b16 %v1700
  %v2104 = vunpack.c.h.b16 %v1700
  %v2105 = vunpack.c.l.b16 %v1701
  %v2106 = vunpack.c.h.b16 %v1701
  %v2107 = vunpack.c.l.b16 %v1702
  %v2108 = vunpack.c.h.b16 %v1702
  %v2109 = vunpack.c.l.b16 %v1703
  %v2110 = vunpack.c.h.b16 %v1703
  %v2111 = vunpack.c.l.b16 %v1704
  %v2112 = vunpack.c.h.b16 %v1704
  %v2113 = vunpack.c.l.b16 %v1705
  %v2114 = vunpack.c.h.b16 %v1705
  %v2115 = vunpack.c.l.b16 %v1706
  %v2116 = vunpack.c.h.b16 %v1706
  %v2117 = vunpack.c.l.b16 %v1707
  %v2118 = vunpack.c.h.b16 %v1707
  %v2119 = vunpack.c.l.b16 %v1708
  %v2120 = vunpack.c.h.b16 %v1708
  %v2121 = vunpack.c.l.b16 %v1709
  %v2122 = vunpack.c.h.b16 %v1709
  %v2123 = vunpack.c.l.b16 %v1710
  %v2124 = vunpack.c.h.b16 %v1710
  %v2125 = vunpack.c.l.b16 %v1711
  %v2126 = vunpack.c.h.b16 %v1711
  %v2127 = vunpack.c.l.b16 %v1712
  %v2128 = vunpack.c.h.b16 %v1712
  %v2129 = vunpack.c.l.b16 %v1713
  %v2130 = vunpack.c.h.b16 %v1713
  %v2131 = vunpack.c.l.b16 %v1714
  %v2132 = vunpack.c.h.b16 %v1714
  %v2133 = vunpack.c.l.b16 %v1715
  %v2134 = vunpack.c.h.b16 %v1715
  %v2135 = vunpack.c.l.b16 %v1716
  %v2136 = vunpack.c.h.b16 %v1716
  %v2137 = vunpack.c.l.b16 %v1717
  %v2138 = vunpack.c.h.b16 %v1717
  %v2139 = vunpack.c.l.b16 %v1718
  %v2140 = vunpack.c.h.b16 %v1718
  %v2141 = vunpack.c.l.b16 %v1719
  %v2142 = vunpack.c.h.b16 %v1719
  %v2143 = vunpack.c.l.b16 %v1720
  %v2144 = vunpack.c.h.b16 %v1720
  %v2145 = vunpack.c.l.b16 %v1721
  %v2146 = vunpack.c.h.b16 %v1721
  %v2147 = vunpack.c.l.b16 %v1722
  %v2148 = vunpack.c.h.b16 %v1722
  %v2149 = vunpack.c.l.b16 %v1723
  %v2150 = vunpack.c.h.b16 %v1723
  %v2151 = vunpack.c.l.b16 %v1724
  %v2152 = vunpack.c.h.b16 %v1724
  %v2153 = vunpack.c.l.b16 %v1725
  %v2154 = vunpack.c.h.b16 %v1725
  %v2155 = vunpack.c.l.b16 %v1726
  %v2156 = vunpack.c.h.b16 %v1726
  %v2157 = vunpack.c.l.b16 %v1727
  %v2158 = vunpack.c.h.b16 %v1727
  %v2159 = vunpack.c.l.b16 %v1728
  %v2160 = vunpack.c.h.b16 %v1728
  %v2161 = vunpack.c.l.b16 %v1729
  %v2162 = vunpack.c.h.b16 %v1729
  %v2163 = vunpack.c.l.b16 %v1730
  %v2164 = vunpack.c.h.b16 %v1730
  %v2165 = vunpack.c.l.b16 %v1731
  %v2166 = vunpack.c.h.b16 %v1731
  %v2167 = vunpack.c.l.b16 %v1732
  %v2168 = vunpack.c.h.b16 %v1732
  %v2169 = vunpack.c.l.b16 %v1733
  %v2170 = vunpack.c.h.b16 %v1733
  %v2171 = vunpack.c.l.b16 %v1734
  %v2172 = vunpack.c.h.b16 %v1734
  %v2173 = vunpack.c.l.b16 %v1735
  %v2174 = vunpack.c.h.b16 %v1735
  %v2175 = vunpack.c.l.b16 %v1736
  %v2176 = vunpack.c.h.b16 %v1736
  %v2177 = vunpack.c.l.b16 %v1737
  %v2178 = vunpack.c.h.b16 %v1737
  %v2179 = vunpack.c.l.b16 %v1738
  %v2180 = vunpack.c.h.b16 %v1738
  %v2181 = vunpack.c.l.b16 %v1739
  %v2182 = vunpack.c.h.b16 %v1739
  %v2183 = vunpack.c.l.b16 %v1740
  %v2184 = vunpack.c.h.b16 %v1740
  %v2185 = vunpack.c.l.b16 %v1741
  %v2186 = vunpack.c.h.b16 %v1741
  %v2187 = vunpack.c.l.b16 %v1742
  %v2188 = vunpack.c.h.b16 %v1742
  %v2189 = vunpack.c.l.b16 %v1743
  %v2190 = vunpack.c.h.b16 %v1743
  %v2191 = vunpack.c.l.b16 %v1744
  %v2192 = vunpack.c.h.b16 %v1744
  %v2193 = vunpack.c.l.b16 %v1745
  %v2194 = vunpack.c.h.b16 %v1745
  %v2195 = vunpack.c.l.b16 %v1746
  %v2196 = vunpack.c.h.b16 %v1746
  %v2197 = vunpack.c.l.b16 %v1747
  %v2198 = vunpack.c.h.b16 %v1747
  %v2199 = vunpack.c.l.b16 %v1748
  %v2200 = vunpack.c.h.b16 %v1748
  %v2201 = vunpack.c.l.b16 %v1749
  %v2202 = vunpack.c.h.b16 %v1749
  %v2203 = vunpack.c.l.b16 %v1750
  %v2204 = vunpack.c.h.b16 %v1750
  %v2205 = vunpack.c.l.b16 %v1751
  %v2206 = vunpack.c.h.b16 %v1751
  %v2207 = vunpack.c.l.b16 %v1752
  %v2208 = vunpack.c.h.b16 %v1752
  %v2209 = vunpack.c.l.b16 %v1753
  %v2210 = vunpack.c.h.b16 %v1753
  %v2211 = vunpack.c.l.b16 %v1754
  %v2212 = vunpack.c.h.b16 %v1754
  %v2213 = vunpack.c.l.b16 %v1755
  %v2214 = vunpack.c.h.b16 %v1755
  %v2215 = vunpack.c.l.b16 %v1756
  %v2216 = vunpack.c.h.b16 %v1756
  %v2217 = vunpack.c.l.b16 %v1757
  %v2218 = vunpack.c.h.b16 %v1757
  %v2219 = vunpack.c.l.b16 %v1758
  %v2220 = vunpack.c.h.b16 %v1758
  %v2221 = vunpack.c.l.b16 %v1759
  %v2222 = vunpack.c.h.b16 %v1759
  %v2223 = vunpack.c.l.b16 %v1760
  %v2224 = vunpack.c.h.b16 %v1760
  %v2225 = vunpack.c.l.b16 %v1761
  %v2226 = vunpack.c.h.b16 %v1761
  %v2227 = vunpack.c.l.b16 %v1762
  %v2228 = vunpack.c.h.b16 %v1762
  %v2229 = vunpack.c.l.b16 %v1763
  %v2230 = vunpack.c.h.b16 %v1763
  %v2231 = vunpack.c.l.b16 %v1764
  %v2232 = vunpack.c.h.b16 %v1764
  %v2233 = vunpack.c.l.b16 %v1765
  %v2234 = vunpack.c.h.b16 %v1765
  %v2235 = vunpack.c.l.b16 %v1766
  %v2236 = vunpack.c.h.b16 %v1766
  %v2237 = vunpack.c.l.b16 %v1767
  %v2238 = vunpack.c.h.b16 %v1767
  %v2239 = vunpack.c.l.b16 %v1768
  %v2240 = vunpack.c.h.b16 %v1768
  %v2241 = vpack.c.b16 %v1953, %v1947
  %v2242 = vpack.c.b16 %v1954, %v1948
  %v2243 = vpack.c.b16 %v1955, %v1949
  %v2244 = vpack.c.b16 %v1956, %v1950
  %v2245 = vpack.c.b16 %v1957, %v1951
  %v2246 = vpack.c.b16 %v1958, %v1952
  %v2247 = vpack.c.b16 %v1965, %v1959
  %v2248 = vpack.c.b16 %v1966, %v1960
  %v2249 = vpack.c.b16 %v1967, %v1961
  %v2250 = vpack.c.b16 %v1968, %v1962
  %v2251 = vpack.c.b16 %v1969, %v1963
  %v2252 = vpack.c.b16 %v1970, %v1964
  %v2253 = vpack.c.b16 %v1977, %v1971
  %v2254 = vpack.c.b16 %v1978, %v1972
  %v2255 = vpack.c.b16 %v1979, %v1973
  %v2256 = vpack.c.b16 %v1980, %v1974
  %v2257 = vpack.c.b16 %v1981, %v1975
  %v2258 = vpack.c.b16 %v1982, %v1976
  %v2259 = vpack.c.b16 %v1989, %v1983
  %v2260 = vpack.c.b16 %v1990, %v1984
  %v2261 = vpack.c.b16 %v1991, %v1985
  %v2262 = vpack.c.b16 %v1992, %v1986
  %v2263 = vpack.c.b16 %v1993, %v1987
  %v2264 = vpack.c.b16 %v1994, %v1988
  %v2265 = vpack.c.b16 %v2001, %v1995
  %v2266 = vpack.c.b16 %v2002, %v1996
  %v2267 = vpack.c.b16 %v2003, %v1997
  %v2268 = vpack.c.b16 %v2004, %v1998
  %v2269 = vpack.c.b16 %v2005, %v1999
  %v2270 = vpack.c.b16 %v2006, %v2000
  %v2271 = vpack.c.b16 %v2013, %v2007
  %v2272 = vpack.c.b16 %v2014, %v2008
  %v2273 = vpack.c.b16 %v2015, %v2009
  %v2274 = vpack.c.b16 %v2016, %v2010
  %v2275 = vpack.c.b16 %v2017, %v2011
  %v2276 = vpack.c.b16 %v2018, %v2012
  %v2277 = vpack.c.b16 %v2025, %v2019
  %v2278 = vpack.c.b16 %v2026, %v2020
  %v2279 = vpack.c.b16 %v2027, %v2021
  %v2280 = vpack.c.b16 %v2028, %v2022
  %v2281 = vpack.c.b16 %v2029, %v2023
  %v2282 = vpack.c.b16 %v2030, %v2024
  %v2283 = vpack.c.b16 %v2037, %v2031
  %v2284 = vpack.c.b16 %v2038, %v2032
  %v2285 = vpack.c.b16 %v2039, %v2033
  %v2286 = vpack.c.b16 %v2040, %v2034
  %v2287 = vpack.c.b16 %v2041, %v2035
  %v2288 = vpack.c.b16 %v2042, %v2036
  %v2289 = vpack.c.b16 %v2049, %v2043
  %v2290 = vpack.c.b16 %v2050, %v2044
  %v2291 = vpack.c.b16 %v2051, %v2045
  %v2292 = vpack.c.b16 %v2052, %v2046
  %v2293 = vpack.c.b16 %v2053, %v2047
  %v2294 = vpack.c.b16 %v2054, %v2048
  %v2295 = vpack.c.b16 %v2061, %v2055
  %v2296 = vpack.c.b16 %v2062, %v2056
  %v2297 = vpack.c.b16 %v2063, %v2057
  %v2298 = vpack.c.b16 %v2064, %v2058
  %v2299 = vpack.c.b16 %v2065, %v2059
  %v2300 = vpack.c.b16 %v2066, %v2060
  %v2301 = vpack.c.b16 %v2073, %v2067
  %v2302 = vpack.c.b16 %v2074, %v2068
  %v2303 = vpack.c.b16 %v2075, %v2069
  %v2304 = vpack.c.b16 %v2076, %v2070
  %v2305 = vpack.c.b16 %v2077, %v2071
  %v2306 = vpack.c.b16 %v2078, %v2072
  %v2307 = vpack.c.b16 %v2085, %v2079
  %v2308 = vpack.c.b16 %v2086, %v2080
  %v2309 = vpack.c.b16 %v2087, %v2081
  %v2310 = vpack.c.b16 %v2088, %v2082
  %v2311 = vpack.c.b16 %v2089, %v2083
  %v2312 = vpack.c.b16 %v2090, %v2084
  %v2313 = vpack.c.b16 %v2097, %v2091
  %v2314 = vpack.c.b16 %v2098, %v2092
  %v2315 = vpack.c.b16 %v2099, %v2093
  %v2316 = vpack.c.b16 %v2100, %v2094
  %v2317 = vpack.c.b16 %v2101, %v2095
  %v2318 = vpack.c.b16 %v2102, %v2096
  %v2319 = vpack.c.b16 %v2109, %v2103
  %v2320 = vpack.c.b16 %v2110, %v2104
  %v2321 = vpack.c.b16 %v2111, %v2105
  %v2322 = vpack.c.b16 %v2112, %v2106
  %v2323 = vpack.c.b16 %v2113, %v2107
  %v2324 = vpack.c.b16 %v2114, %v2108
  %v2325 = vpack.c.b16 %v2121, %v2115
  %v2326 = vpack.c.b16 %v2122, %v2116
  %v2327 = vpack.c.b16 %v2123, %v2117
  %v2328 = vpack.c.b16 %v2124, %v2118
  %v2329 = vpack.c.b16 %v2125, %v2119
  %v2330 = vpack.c.b16 %v2126, %v2120
  %v2331 = vpack.c.b16 %v2133, %v2127
  %v2332 = vpack.c.b16 %v2134, %v2128
  %v2333 = vpack.c.b16 %v2135, %v2129
  %v2334 = vpack.c.b16 %v2136, %v2130
  %v2335 = vpack.c.b16 %v2137, %v2131
  %v2336 = vpack.c.b16 %v2138, %v2132
  %v2337 = vpack.c.b16 %v2145, %v2139
  %v2338 = vpack.c.b16 %v2146, %v2140
  %v2339 = vpack.c.b16 %v2147, %v2141
  %v2340 = vpack.c.b16 %v2148, %v2142
  %v2341 = vpack.c.b16 %v2149, %v2143
  %v2342 = vpack.c.b16 %v2150, %v2144
  %v2343 = vpack.c.b16 %v2157, %v2151
  %v2344 = vpack.c.b16 %v2158, %v2152
  %v2345 = vpack.c.b16 %v2159, %v2153
  %v2346 = vpack.c.b16 %v2160, %v2154
  %v2347 = vpack.c.b16 %v2161, %v2155
  %v2348 = vpack.c.b16 %v2162, %v2156
  %v2349 = vpack.c.b16 %v2169, %v2163
  %v2350 = vpack.c.b16 %v2170, %v2164
  %v2351 = vpack.c.b16 %v2171, %v2165
  %v2352 = vpack.c.b16 %v2172, %v2166
  %v2353 = vpack.c.b16 %v2173, %v2167
  %v2354 = vpack.c.b16 %v2174, %v2168
  %v2355 = vpack.c.b16 %v2181, %v2175
  %v2356 = vpack.c.b16 %v2182, %v2176
  %v2357 = vpack.c.b16 %v2183, %v2177
  %v2358 = vpack.c.b16 %v2184, %v2178
  %v2359 = vpack.c.b16 %v2185, %v2179
  %v2360 = vpack.c.b16 %v2186, %v2180
  %v2361 = vpack.c.b16 %v2193, %v2187
  %v2362 = vpack.c.b16 %v2194, %v2188
  %v2363 = vpack.c.b16 %v2195, %v2189
  %v2364 = vpack.c.b16 %v2196, %v2190
  %v2365 = vpack.c.b16 %v2197, %v2191
  %v2366 = vpack.c.b16 %v2198, %v2192
  %v2367 = vpack.c.b16 %v2205, %v2199
  %v2368 = vpack.c.b16 %v2206, %v2200
  %v2369 = vpack.c.b16 %v2207, %v2201
  %v2370 = vpack.c.b16 %v2208, %v2202
  %v2371 = vpack.c.b16 %v2209, %v2203
  %v2372 = vpack.c.b16 %v2210, %v2204
  %v2373 = vpack.c.b16 %v2217, %v2211
  %v2374 = vpack.c.b16 %v2218, %v2212
  %v2375 = vpack.c.b16 %v2219, %v2213
  %v2376 = vpack.c.b16 %v2220, %v2214
  %v2377 = vpack.c.b16 %v2221, %v2215
  %v2378 = vpack.c.b16 %v2222, %v2216
  %v2379 = vpack.c.b16 %v2229, %v2223
  %v2380 = vpack.c.b16 %v2230, %v2224
  %v2381 = vpack.c.b16 %v2231, %v2225
  %v2382 = vpack.c.b16 %v2232, %v2226
  %v2383 = vpack.c.b16 %v2233, %v2227
  %v2384 = vpack.c.b16 %v2234, %v2228
  %v2385 = vpack.c.b16 %v2235, %v2235
  %v2386 = vpack.c.b16 %v2236, %v2236
  %v2387 = vpack.c.b16 %v2237, %v2237
  %v2388 = vpack.c.b16 %v2238, %v2238
  %v2389 = vpack.c.b16 %v2239, %v2239
  %v2390 = vpack.c.b16 %v2240, %v2240
  %vm2535 = vcmask 64512
  %v2537 = vsel %vm2535, %v1796, 0
  %v2540 = vsel %vm45, %v2385, 0
  %v2543 = vsel %vm45, %v2386, 0
  %v2546 = vsel %vm45, %v2387, 0
  %v2549 = vsel %vm45, %v2388, 0
  %v2552 = vsel %vm45, %v2389, 0
  %v2555 = vsel %vm45, %v2390, 0
  %2557 = vmatpush.bf16.msra.mxu0 %v2283
  %2558 = vmatpush.bf16.msra.mxu0 %v2277
  %2559 = vmatpush.bf16.msra.mxu0 %v2271
  %2560 = vmatpush.bf16.msra.mxu0 %v2265
  %2561 = vmatpush.bf16.msra.mxu0 %v2259
  %2562 = vmatpush.bf16.msra.mxu0 %v2253
  %2563 = vmatpush.bf16.msra.mxu0 %v2247
  %2564 = vmatpush.bf16.msra.mxu0 %v2241
  %2565 = vmatmul.bf16.gmra.mxu0 %v1793
  %v2566 = vpop.f32.mrf.mxu0
  %v2567 = vadd.f32 %v1774, %v2566
  %v2568 = vpop.f32.mrf.mxu0
  %v2569 = vadd.f32 %v1779, %v2568
  %2570 = vdwg.mxu0
  %2571 = vmatpush.bf16.msra.mxu0 %v2331
  %2572 = vmatpush.bf16.msra.mxu0 %v2325
  %2573 = vmatpush.bf16.msra.mxu0 %v2319
  %2574 = vmatpush.bf16.msra.mxu0 %v2313
  %2575 = vmatpush.bf16.msra.mxu0 %v2307
  %2576 = vmatpush.bf16.msra.mxu0 %v2301
  %2577 = vmatpush.bf16.msra.mxu0 %v2295
  %2578 = vmatpush.bf16.msra.mxu0 %v2289
  %2579 = vmatmul.bf16.gmra.mxu0 %v1794
  %v2580 = vpop.f32.mrf.mxu0
  %v2581 = vadd.f32 %v2567, %v2580
  %v2582 = vpop.f32.mrf.mxu0
  %v2583 = vadd.f32 %v2569, %v2582
  %2584 = vdwg.mxu0
  %2585 = vmatpush.bf16.msra.mxu0 %v2379
  %2586 = vmatpush.bf16.msra.mxu0 %v2373
  %2587 = vmatpush.bf16.msra.mxu0 %v2367
  %2588 = vmatpush.bf16.msra.mxu0 %v2361
  %2589 = vmatpush.bf16.msra.mxu0 %v2355
  %2590 = vmatpush.bf16.msra.mxu0 %v2349
  %2591 = vmatpush.bf16.msra.mxu0 %v2343
  %2592 = vmatpush.bf16.msra.mxu0 %v2337
  %2593 = vmatmul.bf16.gmra.mxu0 %v1795
  %v2594 = vpop.f32.mrf.mxu0
  %v2595 = vadd.f32 %v2581, %v2594
  %v2596 = vpop.f32.mrf.mxu0
  %v2597 = vadd.f32 %v2583, %v2596
  %2598 = vdwg.mxu0
  %2599 = vmatpush.bf16.msra.mxu0 0
  %2600 = vmatpush.bf16.msra.mxu0 0
  %2601 = vmatpush.bf16.msra.mxu0 0
  %2602 = vmatpush.bf16.msra.mxu0 0
  %2603 = vmatpush.bf16.msra.mxu0 0
  %2604 = vmatpush.bf16.msra.mxu0 0
  %2605 = vmatpush.bf16.msra.mxu0 0
  %2606 = vmatpush.bf16.msra.mxu0 %v2540
  %2607 = vmatmul.bf16.gmra.mxu0 %v2537
  %v2608 = vpop.f32.mrf.mxu0
  %v2609 = vadd.f32 %v2595, %v2608
  %v2610 = vpop.f32.mrf.mxu0
  %v2611 = vadd.f32 %v2597, %v2610
  %2612 = vdwg.mxu0
  %2613 = vmatpush.bf16.msra.mxu0 %v2284
  %2614 = vmatpush.bf16.msra.mxu0 %v2278
  %2615 = vmatpush.bf16.msra.mxu0 %v2272
  %2616 = vmatpush.bf16.msra.mxu0 %v2266
  %2617 = vmatpush.bf16.msra.mxu0 %v2260
  %2618 = vmatpush.bf16.msra.mxu0 %v2254
  %2619 = vmatpush.bf16.msra.mxu0 %v2248
  %2620 = vmatpush.bf16.msra.mxu0 %v2242
  %2621 = vmatmul.bf16.gmra.mxu0 %v1793
  %v2622 = vpop.f32.mrf.mxu0
  %v2623 = vadd.f32 %v1774, %v2622
  %v2624 = vpop.f32.mrf.mxu0
  %v2625 = vadd.f32 %v1779, %v2624
  %2626 = vdwg.mxu0
  %2627 = vmatpush.bf16.msra.mxu0 %v2332
  %2628 = vmatpush.bf16.msra.mxu0 %v2326
  %2629 = vmatpush.bf16.msra.mxu0 %v2320
  %2630 = vmatpush.bf16.msra.mxu0 %v2314
  %2631 = vmatpush.bf16.msra.mxu0 %v2308
  %2632 = vmatpush.bf16.msra.mxu0 %v2302
  %2633 = vmatpush.bf16.msra.mxu0 %v2296
  %2634 = vmatpush.bf16.msra.mxu0 %v2290
  %2635 = vmatmul.bf16.gmra.mxu0 %v1794
  %v2636 = vpop.f32.mrf.mxu0
  %v2637 = vadd.f32 %v2623, %v2636
  %v2638 = vpop.f32.mrf.mxu0
  %v2639 = vadd.f32 %v2625, %v2638
  %2640 = vdwg.mxu0
  %2641 = vmatpush.bf16.msra.mxu0 %v2380
  %2642 = vmatpush.bf16.msra.mxu0 %v2374
  %2643 = vmatpush.bf16.msra.mxu0 %v2368
  %2644 = vmatpush.bf16.msra.mxu0 %v2362
  %2645 = vmatpush.bf16.msra.mxu0 %v2356
  %2646 = vmatpush.bf16.msra.mxu0 %v2350
  %2647 = vmatpush.bf16.msra.mxu0 %v2344
  %2648 = vmatpush.bf16.msra.mxu0 %v2338
  %2649 = vmatmul.bf16.gmra.mxu0 %v1795
  %v2650 = vpop.f32.mrf.mxu0
  %v2651 = vadd.f32 %v2637, %v2650
  %v2652 = vpop.f32.mrf.mxu0
  %v2653 = vadd.f32 %v2639, %v2652
  %2654 = vdwg.mxu0
  %2655 = vmatpush.bf16.msra.mxu0 0
  %2656 = vmatpush.bf16.msra.mxu0 0
  %2657 = vmatpush.bf16.msra.mxu0 0
  %2658 = vmatpush.bf16.msra.mxu0 0
  %2659 = vmatpush.bf16.msra.mxu0 0
  %2660 = vmatpush.bf16.msra.mxu0 0
  %2661 = vmatpush.bf16.msra.mxu0 0
  %2662 = vmatpush.bf16.msra.mxu0 %v2543
  %2663 = vmatmul.bf16.gmra.mxu0 %v2537
  %v2664 = vpop.f32.mrf.mxu0
  %v2665 = vadd.f32 %v2651, %v2664
  %v2666 = vpop.f32.mrf.mxu0
  %v2667 = vadd.f32 %v2653, %v2666
  %2668 = vdwg.mxu0
  %2669 = vmatpush.bf16.msra.mxu0 %v2285
  %2670 = vmatpush.bf16.msra.mxu0 %v2279
  %2671 = vmatpush.bf16.msra.mxu0 %v2273
  %2672 = vmatpush.bf16.msra.mxu0 %v2267
  %2673 = vmatpush.bf16.msra.mxu0 %v2261
  %2674 = vmatpush.bf16.msra.mxu0 %v2255
  %2675 = vmatpush.bf16.msra.mxu0 %v2249
  %2676 = vmatpush.bf16.msra.mxu0 %v2243
  %2677 = vmatmul.bf16.gmra.mxu0 %v1793
  %v2678 = vpop.f32.mrf.mxu0
  %v2679 = vadd.f32 %v1774, %v2678
  %v2680 = vpop.f32.mrf.mxu0
  %v2681 = vadd.f32 %v1779, %v2680
  %2682 = vdwg.mxu0
  %2683 = vmatpush.bf16.msra.mxu0 %v2333
  %2684 = vmatpush.bf16.msra.mxu0 %v2327
  %2685 = vmatpush.bf16.msra.mxu0 %v2321
  %2686 = vmatpush.bf16.msra.mxu0 %v2315
  %2687 = vmatpush.bf16.msra.mxu0 %v2309
  %2688 = vmatpush.bf16.msra.mxu0 %v2303
  %2689 = vmatpush.bf16.msra.mxu0 %v2297
  %2690 = vmatpush.bf16.msra.mxu0 %v2291
  %2691 = vmatmul.bf16.gmra.mxu0 %v1794
  %v2692 = vpop.f32.mrf.mxu0
  %v2693 = vadd.f32 %v2679, %v2692
  %v2694 = vpop.f32.mrf.mxu0
  %v2695 = vadd.f32 %v2681, %v2694
  %2696 = vdwg.mxu0
  %2697 = vmatpush.bf16.msra.mxu0 %v2381
  %2698 = vmatpush.bf16.msra.mxu0 %v2375
  %2699 = vmatpush.bf16.msra.mxu0 %v2369
  %2700 = vmatpush.bf16.msra.mxu0 %v2363
  %2701 = vmatpush.bf16.msra.mxu0 %v2357
  %2702 = vmatpush.bf16.msra.mxu0 %v2351
  %2703 = vmatpush.bf16.msra.mxu0 %v2345
  %2704 = vmatpush.bf16.msra.mxu0 %v2339
  %2705 = vmatmul.bf16.gmra.mxu0 %v1795
  %v2706 = vpop.f32.mrf.mxu0
  %v2707 = vadd.f32 %v2693, %v2706
  %v2708 = vpop.f32.mrf.mxu0
  %v2709 = vadd.f32 %v2695, %v2708
  %2710 = vdwg.mxu0
  %2711 = vmatpush.bf16.msra.mxu0 0
  %2712 = vmatpush.bf16.msra.mxu0 0
  %2713 = vmatpush.bf16.msra.mxu0 0
  %2714 = vmatpush.bf16.msra.mxu0 0
  %2715 = vmatpush.bf16.msra.mxu0 0
  %2716 = vmatpush.bf16.msra.mxu0 0
  %2717 = vmatpush.bf16.msra.mxu0 0
  %2718 = vmatpush.bf16.msra.mxu0 %v2546
  %2719 = vmatmul.bf16.gmra.mxu0 %v2537
  %v2720 = vpop.f32.mrf.mxu0
  %v2721 = vadd.f32 %v2707, %v2720
  %v2722 = vpop.f32.mrf.mxu0
  %v2723 = vadd.f32 %v2709, %v2722
  %2724 = vdwg.mxu0
  %2725 = vmatpush.bf16.msra.mxu0 %v2286
  %2726 = vmatpush.bf16.msra.mxu0 %v2280
  %2727 = vmatpush.bf16.msra.mxu0 %v2274
  %2728 = vmatpush.bf16.msra.mxu0 %v2268
  %2729 = vmatpush.bf16.msra.mxu0 %v2262
  %2730 = vmatpush.bf16.msra.mxu0 %v2256
  %2731 = vmatpush.bf16.msra.mxu0 %v2250
  %2732 = vmatpush.bf16.msra.mxu0 %v2244
  %2733 = vmatmul.bf16.gmra.mxu0 %v1793
  %v2734 = vpop.f32.mrf.mxu0
  %v2735 = vadd.f32 %v1774, %v2734
  %v2736 = vpop.f32.mrf.mxu0
  %v2737 = vadd.f32 %v1779, %v2736
  %2738 = vdwg.mxu0
  %2739 = vmatpush.bf16.msra.mxu0 %v2334
  %2740 = vmatpush.bf16.msra.mxu0 %v2328
  %2741 = vmatpush.bf16.msra.mxu0 %v2322
  %2742 = vmatpush.bf16.msra.mxu0 %v2316
  %2743 = vmatpush.bf16.msra.mxu0 %v2310
  %2744 = vmatpush.bf16.msra.mxu0 %v2304
  %2745 = vmatpush.bf16.msra.mxu0 %v2298
  %2746 = vmatpush.bf16.msra.mxu0 %v2292
  %2747 = vmatmul.bf16.gmra.mxu0 %v1794
  %v2748 = vpop.f32.mrf.mxu0
  %v2749 = vadd.f32 %v2735, %v2748
  %v2750 = vpop.f32.mrf.mxu0
  %v2751 = vadd.f32 %v2737, %v2750
  %2752 = vdwg.mxu0
  %2753 = vmatpush.bf16.msra.mxu0 %v2382
  %2754 = vmatpush.bf16.msra.mxu0 %v2376
  %2755 = vmatpush.bf16.msra.mxu0 %v2370
  %2756 = vmatpush.bf16.msra.mxu0 %v2364
  %2757 = vmatpush.bf16.msra.mxu0 %v2358
  %2758 = vmatpush.bf16.msra.mxu0 %v2352
  %2759 = vmatpush.bf16.msra.mxu0 %v2346
  %2760 = vmatpush.bf16.msra.mxu0 %v2340
  %2761 = vmatmul.bf16.gmra.mxu0 %v1795
  %v2762 = vpop.f32.mrf.mxu0
  %v2763 = vadd.f32 %v2749, %v2762
  %v2764 = vpop.f32.mrf.mxu0
  %v2765 = vadd.f32 %v2751, %v2764
  %2766 = vdwg.mxu0
  %2767 = vmatpush.bf16.msra.mxu0 0
  %2768 = vmatpush.bf16.msra.mxu0 0
  %2769 = vmatpush.bf16.msra.mxu0 0
  %2770 = vmatpush.bf16.msra.mxu0 0
  %2771 = vmatpush.bf16.msra.mxu0 0
  %2772 = vmatpush.bf16.msra.mxu0 0
  %2773 = vmatpush.bf16.msra.mxu0 0
  %2774 = vmatpush.bf16.msra.mxu0 %v2549
  %2775 = vmatmul.bf16.gmra.mxu0 %v2537
  %v2776 = vpop.f32.mrf.mxu0
  %v2777 = vadd.f32 %v2763, %v2776
  %v2778 = vpop.f32.mrf.mxu0
  %v2779 = vadd.f32 %v2765, %v2778
  %2780 = vdwg.mxu0
  %2781 = vmatpush.bf16.msra.mxu0 %v2287
  %2782 = vmatpush.bf16.msra.mxu0 %v2281
  %2783 = vmatpush.bf16.msra.mxu0 %v2275
  %2784 = vmatpush.bf16.msra.mxu0 %v2269
  %2785 = vmatpush.bf16.msra.mxu0 %v2263
  %2786 = vmatpush.bf16.msra.mxu0 %v2257
  %2787 = vmatpush.bf16.msra.mxu0 %v2251
  %2788 = vmatpush.bf16.msra.mxu0 %v2245
  %2789 = vmatmul.bf16.gmra.mxu0 %v1793
  %v2790 = vpop.f32.mrf.mxu0
  %v2791 = vadd.f32 %v1774, %v2790
  %v2792 = vpop.f32.mrf.mxu0
  %v2793 = vadd.f32 %v1779, %v2792
  %2794 = vdwg.mxu0
  %2795 = vmatpush.bf16.msra.mxu0 %v2335
  %2796 = vmatpush.bf16.msra.mxu0 %v2329
  %2797 = vmatpush.bf16.msra.mxu0 %v2323
  %2798 = vmatpush.bf16.msra.mxu0 %v2317
  %2799 = vmatpush.bf16.msra.mxu0 %v2311
  %2800 = vmatpush.bf16.msra.mxu0 %v2305
  %2801 = vmatpush.bf16.msra.mxu0 %v2299
  %2802 = vmatpush.bf16.msra.mxu0 %v2293
  %2803 = vmatmul.bf16.gmra.mxu0 %v1794
  %v2804 = vpop.f32.mrf.mxu0
  %v2805 = vadd.f32 %v2791, %v2804
  %v2806 = vpop.f32.mrf.mxu0
  %v2807 = vadd.f32 %v2793, %v2806
  %2808 = vdwg.mxu0
  %2809 = vmatpush.bf16.msra.mxu0 %v2383
  %2810 = vmatpush.bf16.msra.mxu0 %v2377
  %2811 = vmatpush.bf16.msra.mxu0 %v2371
  %2812 = vmatpush.bf16.msra.mxu0 %v2365
  %2813 = vmatpush.bf16.msra.mxu0 %v2359
  %2814 = vmatpush.bf16.msra.mxu0 %v2353
  %2815 = vmatpush.bf16.msra.mxu0 %v2347
  %2816 = vmatpush.bf16.msra.mxu0 %v2341
  %2817 = vmatmul.bf16.gmra.mxu0 %v1795
  %v2818 = vpop.f32.mrf.mxu0
  %v2819 = vadd.f32 %v2805, %v2818
  %v2820 = vpop.f32.mrf.mxu0
  %v2821 = vadd.f32 %v2807, %v2820
  %2822 = vdwg.mxu0
  %2823 = vmatpush.bf16.msra.mxu0 0
  %2824 = vmatpush.bf16.msra.mxu0 0
  %2825 = vmatpush.bf16.msra.mxu0 0
  %2826 = vmatpush.bf16.msra.mxu0 0
  %2827 = vmatpush.bf16.msra.mxu0 0
  %2828 = vmatpush.bf16.msra.mxu0 0
  %2829 = vmatpush.bf16.msra.mxu0 0
  %2830 = vmatpush.bf16.msra.mxu0 %v2552
  %2831 = vmatmul.bf16.gmra.mxu0 %v2537
  %v2832 = vpop.f32.mrf.mxu0
  %v2833 = vadd.f32 %v2819, %v2832
  %v2834 = vpop.f32.mrf.mxu0
  %v2835 = vadd.f32 %v2821, %v2834
  %2836 = vdwg.mxu0
  %2837 = vmatpush.bf16.msra.mxu0 %v2288
  %2838 = vmatpush.bf16.msra.mxu0 %v2282
  %2839 = vmatpush.bf16.msra.mxu0 %v2276
  %2840 = vmatpush.bf16.msra.mxu0 %v2270
  %2841 = vmatpush.bf16.msra.mxu0 %v2264
  %2842 = vmatpush.bf16.msra.mxu0 %v2258
  %2843 = vmatpush.bf16.msra.mxu0 %v2252
  %2844 = vmatpush.bf16.msra.mxu0 %v2246
  %2845 = vmatmul.bf16.gmra.mxu0 %v1793
  %v2846 = vpop.f32.mrf.mxu0
  %v2847 = vadd.f32 %v1774, %v2846
  %v2848 = vpop.f32.mrf.mxu0
  %v2849 = vadd.f32 %v1779, %v2848
  %2850 = vdwg.mxu0
  %2851 = vmatpush.bf16.msra.mxu0 %v2336
  %2852 = vmatpush.bf16.msra.mxu0 %v2330
  %2853 = vmatpush.bf16.msra.mxu0 %v2324
  %2854 = vmatpush.bf16.msra.mxu0 %v2318
  %2855 = vmatpush.bf16.msra.mxu0 %v2312
  %2856 = vmatpush.bf16.msra.mxu0 %v2306
  %2857 = vmatpush.bf16.msra.mxu0 %v2300
  %2858 = vmatpush.bf16.msra.mxu0 %v2294
  %2859 = vmatmul.bf16.gmra.mxu0 %v1794
  %v2860 = vpop.f32.mrf.mxu0
  %v2861 = vadd.f32 %v2847, %v2860
  %v2862 = vpop.f32.mrf.mxu0
  %v2863 = vadd.f32 %v2849, %v2862
  %2864 = vdwg.mxu0
  %2865 = vmatpush.bf16.msra.mxu0 %v2384
  %2866 = vmatpush.bf16.msra.mxu0 %v2378
  %2867 = vmatpush.bf16.msra.mxu0 %v2372
  %2868 = vmatpush.bf16.msra.mxu0 %v2366
  %2869 = vmatpush.bf16.msra.mxu0 %v2360
  %2870 = vmatpush.bf16.msra.mxu0 %v2354
  %2871 = vmatpush.bf16.msra.mxu0 %v2348
  %2872 = vmatpush.bf16.msra.mxu0 %v2342
  %2873 = vmatmul.bf16.gmra.mxu0 %v1795
  %v2874 = vpop.f32.mrf.mxu0
  %v2875 = vadd.f32 %v2861, %v2874
  %v2876 = vpop.f32.mrf.mxu0
  %v2877 = vadd.f32 %v2863, %v2876
  %2878 = vdwg.mxu0
  %2879 = vmatpush.bf16.msra.mxu0 0
  %2880 = vmatpush.bf16.msra.mxu0 0
  %2881 = vmatpush.bf16.msra.mxu0 0
  %2882 = vmatpush.bf16.msra.mxu0 0
  %2883 = vmatpush.bf16.msra.mxu0 0
  %2884 = vmatpush.bf16.msra.mxu0 0
  %2885 = vmatpush.bf16.msra.mxu0 0
  %2886 = vmatpush.bf16.msra.mxu0 %v2555
  %2887 = vmatmul.bf16.gmra.mxu0 %v2537
  %v2888 = vpop.f32.mrf.mxu0
  %v2889 = vadd.f32 %v2875, %v2888
  %v2890 = vpop.f32.mrf.mxu0
  %v2891 = vadd.f32 %v2877, %v2890
  %2892 = vdwg.mxu0
  %v2893 = vld [vmem:[%s0] sm:$0xff]
  %v2894 = vld [vmem:[%s0 + $0x8] sm:$0xff]
  %v2895 = vld [vmem:[%s0 + $0x10] sm:$0xff]
  %v2896 = vld [vmem:[%s0 + $0x18] sm:$0xff]
  %2901 = vrot.lane.b32.xlu0 %v2893, 53
  %v2902 = vpop.permute.xlu0 %2901
  %2903 = vrot.lane.b32.xlu0 %v2894, 53
  %v2904 = vpop.permute.xlu0 %2903
  %2905 = vrot.lane.b32.xlu0 %v2895, 53
  %v2906 = vpop.permute.xlu0 %2905
  %2907 = vrot.lane.b32.xlu0 %v2896, 53
  %v2908 = vpop.permute.xlu0 %2907
  %vm2909 = vcmask 433152
  %v2910 = vsel %vm2909, %v2902, %v2904
  %v2911 = vsel %vm2909, %v2904, %v2906
  %v2912 = vsel %vm2909, %v2906, %v2908
  %v2916 = vadd.f32 %v2609, %v2910
  %v2917 = vadd.f32 %v2665, %v2911
  %v2918 = vadd.f32 %v2721, %v2912
  %v2919 = vmax.f32 %v2916, 0.0
  %v2920 = vmax.f32 %v2917, 0.0
  %v2921 = vmax.f32 %v2918, 0.0
  %v2922 = vadd.f32 %v2611, %v2919
  %v2923 = vadd.f32 %v2667, %v2920
  %v2924 = vadd.f32 %v2723, %v2921
  %v2925 = vmax.f32 %v2922, 0.0
  %v2926 = vmax.f32 %v2923, 0.0
  %v2927 = vmax.f32 %v2924, 0.0
  %v2928 = vadd.f32 %v2925, %v2910
  %v2929 = vadd.f32 %v2926, %v2911
  %v2930 = vadd.f32 %v2927, %v2912
  %v2931 = vmax.f32 %v2928, 0.0
  %v2932 = vmax.f32 %v2929, 0.0
  %v2933 = vmax.f32 %v2930, 0.0
  %2934 = vst [vmem:[%s3] sm:$0xff] %v2931
  %2935 = vst [vmem:[%s3 + $0x8] sm:$0xff] %v2932
  %2936 = vst [vmem:[%s3 + $0x10] sm:$0xff] %v2933
  %v2937 = vld [vmem:[%s831] sm:$0xff]
  %v2938 = vld [vmem:[%s831 + $0x8] sm:$0xff]
  %v2939 = vld [vmem:[%s831 + $0x10] sm:$0xff]
  %v2940 = vld [vmem:[%s831 + $0x18] sm:$0xff]
  %2945 = vrot.lane.b32.xlu0 %v2937, 53
  %v2946 = vpop.permute.xlu0 %2945
  %2947 = vrot.lane.b32.xlu0 %v2938, 53
  %v2948 = vpop.permute.xlu0 %2947
  %2949 = vrot.lane.b32.xlu0 %v2939, 53
  %v2950 = vpop.permute.xlu0 %2949
  %2951 = vrot.lane.b32.xlu0 %v2940, 53
  %v2952 = vpop.permute.xlu0 %2951
  %v2953 = vsel %vm2909, %v2946, %v2948
  %v2954 = vsel %vm2909, %v2948, %v2950
  %v2955 = vsel %vm2909, %v2950, %v2952
  %v2959 = vadd.f32 %v2777, %v2953
  %v2960 = vadd.f32 %v2833, %v2954
  %v2961 = vadd.f32 %v2889, %v2955
  %v2962 = vmax.f32 %v2959, 0.0
  %v2963 = vmax.f32 %v2960, 0.0
  %v2964 = vmax.f32 %v2961, 0.0
  %v2965 = vadd.f32 %v2779, %v2962
  %v2966 = vadd.f32 %v2835, %v2963
  %v2967 = vadd.f32 %v2891, %v2964
  %v2968 = vmax.f32 %v2965, 0.0
  %v2969 = vmax.f32 %v2966, 0.0
  %v2970 = vmax.f32 %v2967, 0.0
  %v2971 = vadd.f32 %v2968, %v2953
  %v2972 = vadd.f32 %v2969, %v2954
  %v2973 = vadd.f32 %v2970, %v2955
  %v2974 = vmax.f32 %v2971, 0.0
  %v2975 = vmax.f32 %v2972, 0.0
  %v2976 = vmax.f32 %v2973, 0.0
  %s2977 = scalar_lea.vmem %s3, 24
  %2978 = vst [vmem:[%s2977] sm:$0xff] %v2974
  %2979 = vst [vmem:[%s2977 + $0x8] sm:$0xff] %v2975
  %2980 = vst [vmem:[%s2977 + $0x10] sm:$0xff] %v2976
  // Predicated region
  $region14: #{model_forward.1} parent=0 // pred_check
    _
  $region15: #{model_forward.1} parent=0 // pred_check_branch
    %2982 = sbr.rel (0) target = $region17
  $region16: #{model_forward.1} parent=0 // pred_region
    _
  $region17: #{model_forward.1} parent=0 // pred_fallthru
    _
  // Predicated region
  $region18: #{model_forward.1} parent=0 // pred_check
    _
  $region19: #{model_forward.1} parent=0 // pred_check_branch
    %2984 = sbr.rel (0) target = $region21
  $region20: #{model_forward.1} parent=0 // pred_region
    _
  $region21: #{model_forward.1} parent=0 // pred_fallthru
    _

</llo_original>
